<compile_context>
chip_gen: v7x
topology: tpu7x:2x2x1
jax: 0.10.0
libtpu: 0.0.40
codegen_flags: <defaults>
</compile_context>

<pallas_src>
import jax
import jax.numpy as jnp
from jax.experimental import pallas as pl
from jax.experimental.pallas import tpu as pltpu


_LANES = 128
_SUBLANES = 8
_MIN_PALLAS_ELEMENTS = 16 * 1024        # below this, plain jnp beats a kernel launch
_VMEM_LIMIT_BYTES = 32 * 1024 * 1024    # safe on v5e/v6e (128 MiB) and v7x (64 MiB physical)


def _round_down(x, m):
    return (x // m) * m


def _is_megacore():
    # v7x has 2 TensorCores per chip; only CORE_PARALLEL actually shards a
    # grid axis across them.  v5e/v6e are single-core -> plain "parallel".
    try:
        return "v7" in jax.devices()[0].device_kind.lower()
    except Exception:
        return False


_MEGACORE = _is_megacore()


# ---------------------------------------------------------------------------
# Elementwise KL terms (shared by the Pallas kernels and the jnp tail / fast
# path).  All math in f32 regardless of the input dtype.
# ---------------------------------------------------------------------------
def _gaussian_kl_elem(pmu, plog, fmu, flog):
    pmu = pmu.astype(jnp.float32)
    plog = plog.astype(jnp.float32)
    fmu = fmu.astype(jnp.float32)
    flog = flog.astype(jnp.float32)
    diff = fmu - pmu
    # Divide-free rewrite of:
    #   plog - flog - 0.5 + (exp(2*flog) + diff^2) / (2*exp(2*plog))
    # (2 EUP exps, everything else on the VPU).  Note kl(0,0,0,0) == 0, so
    # zero elements contribute nothing -- no padding mask needed.
    return (plog - flog - 0.5
            + 0.5 * jnp.exp(2.0 * (flog - plog))
            + 0.5 * diff * diff * jnp.exp(-2.0 * plog))


def _bernoulli_kl_elem(plog, flog):
    plog = plog.astype(jnp.float32)
    flog = flog.astype(jnp.float32)
    # F.kl_div(input, target, log_target=True): exp(target) * (target - input)
    return jnp.exp(flog) * (flog - plog)


# ---------------------------------------------------------------------------
# Pallas kernels: streaming partial-sum reduction over lane-dense tiles.
# ---------------------------------------------------------------------------
def _sum_tile_into(out_ref, term):
    # Per-tile partial sum: sublane-wise VPU adds only; the single cross-lane
    # reduction happens once in the (tiny) wrapper epilogue.
    out_ref[...] += term.reshape(-1, _SUBLANES, _LANES).sum(axis=0)


def _gaussian_kl_kernel(pmu_ref, plog_ref, fmu_ref, flog_ref, out_ref):
    @pl.when(pl.program_id(1) == 0)
    def _():
        out_ref[...] = jnp.zeros_like(out_ref)

    term = _gaussian_kl_elem(pmu_ref[...], plog_ref[...],
                             fmu_ref[...], flog_ref[...])
    _sum_tile_into(out_ref, term)


def _bernoulli_kl_kernel(plog_ref, flog_ref, out_ref):
    @pl.when(pl.program_id(1) == 0)
    def _():
        out_ref[...] = jnp.zeros_like(out_ref)

    _sum_tile_into(out_ref, _bernoulli_kl_elem(plog_ref[...], flog_ref[...]))


# ---------------------------------------------------------------------------
# Tiled sum wrapper: sum of elem_fn(*flats) over all elements of N equally
# shaped 1-D streams.  Bulk goes through Pallas, the (< one grid-row) tail
# and tiny inputs go through plain jnp.
# ---------------------------------------------------------------------------
def _tiled_sum(kernel_fn, elem_fn, flats):
    n = int(flats[0].shape[0])
    n_inputs = len(flats)

    # Small-input fast path (the usual stp3 loss shapes land here).
    if n < _MIN_PALLAS_ELEMENTS:
        return jnp.sum(elem_fn(*flats))

    # Tile sizing: large lane-dense tiles; rows scaled by input count so the
    # double-buffered input VMEM footprint (~8 MiB in f32, less in bf16) is
    # the same for 2-input (Bernoulli) and 4-input (Gaussian) kernels.
    rows_full = n // _LANES
    tile_rows_cap = 2048 if n_inputs >= 4 else 4096
    tile_rows = min(tile_rows_cap, _round_down(rows_full, _SUBLANES))
    steps_total = rows_full // tile_rows

    num_chunks = 2 if steps_total >= 4 else 1
    steps_per_chunk = steps_total // num_chunks
    rows_bulk = steps_per_chunk * num_chunks * tile_rows
    n_bulk = rows_bulk * _LANES

    # Exactly-tiled bulk: no jnp.pad (no extra HBM read+write pass).  The
    # prefix slice + reshape is a no-op when n is already aligned.
    slabs = [x[:n_bulk].reshape(rows_bulk, _LANES) for x in flats]

    in_spec = pl.BlockSpec((tile_rows, _LANES),
                           lambda c, s, spc=steps_per_chunk: (c * spc + s, 0))
    out_spec = pl.BlockSpec((_SUBLANES, _LANES), lambda c, s: (c, 0))

    # v7x: CORE_PARALLEL on the chunk axis so both TensorCores share the
    # stream; plain "parallel" elsewhere (near-zero codegen effect, harmless).
    semantics_options = []
    if _MEGACORE and num_chunks > 1:
        semantics_options.append((pltpu.CORE_PARALLEL, pltpu.ARBITRARY))
    semantics_options.append(("parallel", "arbitrary"))

    partials = None
    last_err = None
    for sem in semantics_options:
        try:
            partials = pl.pallas_call(
                kernel_fn,
                out_shape=jax.ShapeDtypeStruct(
                    (num_chunks * _SUBLANES, _LANES), jnp.float32),
                grid=(num_chunks, steps_per_chunk),
                in_specs=[in_spec] * n_inputs,
                out_specs=out_spec,
                compiler_params=pltpu.CompilerParams(
                    dimension_semantics=sem,
                    vmem_limit_bytes=_VMEM_LIMIT_BYTES),
            )(*slabs)
            break
        except Exception as e:  # fall back to safe semantics if needed
            last_err = e
            partials = None
    if partials is None:
        raise last_err

    total = jnp.sum(partials)

    # Tail (< one grid row of tiles): plain jnp, avoids padding the stream.
    if n_bulk != n:
        total = total + jnp.sum(elem_fn(*(x[n_bulk:] for x in flats)))
    return total


# ---------------------------------------------------------------------------
# Module port
# ---------------------------------------------------------------------------
class ProbabilisticLoss:
    """JAX/Pallas port of stp3.losses.ProbabilisticLoss (forward only)."""

    def __init__(self, method):
        self.method = method

    @staticmethod
    def _rows(shape):
        rows = 1
        for d in shape[:-1]:
            rows *= d
        return rows

    def kl_div(self, present_mu, present_log_sigma, future_mu, future_log_sigma):
        pmu = jnp.asarray(present_mu)
        rows = self._rows(pmu.shape)
        flats = [jnp.ravel(jnp.asarray(a)) for a in
                 (present_mu, present_log_sigma, future_mu, future_log_sigma)]
        total = _tiled_sum(_gaussian_kl_kernel, _gaussian_kl_elem, flats)
        # mean over leading dims of sum over last dim == total / prod(leading)
        return total / jnp.float32(rows)

    def __call__(self, output):
        if self.method == 'GAUSSIAN':
            return self.kl_div(output['present_mu'],
                               output['present_log_sigma'],
                               output['future_mu'],
                               output['future_log_sigma'])
        elif self.method == 'MIXGAUSSIAN':
            # Per-component calls: no jnp.concatenate (no extra HBM pass over
            # all mixture data); tiny components take the jnp fast path.
            kl_loss = jnp.float32(0.0)
            for pm, pls, fm, fls in zip(output['present_mu'],
                                        output['present_log_sigma'],
                                        output['future_mu'],
                                        output['future_log_sigma']):
                kl_loss = kl_loss + self.kl_div(pm, pls, fm, fls)
            return kl_loss
        elif self.method == 'BERNOULLI':
            plog = jnp.asarray(output['present_log_prob'])
            flog = jnp.asarray(output['future_log_prob'])
            batch = plog.shape[0]   # torch 'batchmean' divides by shape[0]
            total = _tiled_sum(_bernoulli_kl_kernel, _bernoulli_kl_elem,
                               [jnp.ravel(plog), jnp.ravel(flog)])
            return total / jnp.float32(batch)
        else:
            raise NotImplementedError


# ---------------------------------------------------------------------------
# Pure-JAX references (correctness check)
# ---------------------------------------------------------------------------
def _ref_gaussian(pmu, plog, fmu, flog):
    var_f = jnp.exp(2 * flog)
    var_p = jnp.exp(2 * plog)
    kl = plog - flog - 0.5 + (var_f + (fmu - pmu) ** 2) / (2 * var_p)
    return jnp.mean(jnp.sum(kl, axis=-1))


def _ref_bernoulli(plog, flog):
    return jnp.sum(jnp.exp(flog) * (flog - plog)) / plog.shape[0]


if __name__ == "__main__":
    key = jax.random.PRNGKey(0)
    keys = jax.random.split(key, 32)

    def gauss_inputs(kofs, shape):
        return {
            'present_mu': jax.random.normal(keys[kofs], shape, jnp.float32),
            'present_log_sigma': 0.1 * jax.random.normal(keys[kofs + 1], shape, jnp.float32),
            'future_mu': jax.random.normal(keys[kofs + 2], shape, jnp.float32),
            'future_log_sigma': 0.1 * jax.random.normal(keys[kofs + 3], shape, jnp.float32),
        }

    # --- GAUSSIAN, stp3-like small shape (jnp fast path) ---
    out_small = gauss_inputs(0, (2, 8, 32))
    loss = jax.block_until_ready(ProbabilisticLoss('GAUSSIAN')(out_small))
    ref = _ref_gaussian(out_small['present_mu'], out_small['present_log_sigma'],
                        out_small['future_mu'], out_small['future_log_sigma'])
    assert jnp.allclose(loss, ref, rtol=1e-5, atol=1e-5), (loss, ref)

    # --- GAUSSIAN, larger aligned shape (Pallas path, 2 chunks x 2 steps) ---
    out_big = gauss_inputs(4, (64, 128, 128))
    loss = jax.block_until_ready(ProbabilisticLoss('GAUSSIAN')(out_big))
    ref = _ref_gaussian(out_big['present_mu'], out_big['present_log_sigma'],
                        out_big['future_mu'], out_big['future_log_sigma'])
    assert jnp.allclose(loss, ref, rtol=2e-4, atol=1e-4), (loss, ref)

    # --- GAUSSIAN, misaligned shape (Pallas bulk + jnp tail) ---
    out_odd = gauss_inputs(8, (6, 50, 167))
    loss = jax.block_until_ready(ProbabilisticLoss('GAUSSIAN')(out_odd))
    ref = _ref_gaussian(out_odd['present_mu'], out_odd['present_log_sigma'],
                        out_odd['future_mu'], out_odd['future_log_sigma'])
    assert jnp.allclose(loss, ref, rtol=2e-4, atol=1e-4), (loss, ref)

    # --- MIXGAUSSIAN, 3 small components (per-component calls) ---
    M = 3
    out_mix = {
        'present_mu': [jax.random.normal(keys[12 + i], (2, 32), jnp.float32) for i in range(M)],
        'present_log_sigma': [0.1 * jax.random.normal(keys[15 + i], (2, 32), jnp.float32) for i in range(M)],
        'future_mu': [jax.random.normal(keys[18 + i], (2, 32), jnp.float32) for i in range(M)],
        'future_log_sigma': [0.1 * jax.random.normal(keys[21 + i], (2, 32), jnp.float32) for i in range(M)],
    }
    loss = jax.block_until_ready(ProbabilisticLoss('MIXGAUSSIAN')(out_mix))
    ref = sum(_ref_gaussian(out_mix['present_mu'][i], out_mix['present_log_sigma'][i],
                            out_mix['future_mu'][i], out_mix['future_log_sigma'][i])
              for i in range(M))
    assert jnp.allclose(loss, ref, rtol=1e-5, atol=1e-5), (loss, ref)

    # --- BERNOULLI (Pallas path, 2-input kernel) ---
    plog = jax.nn.log_softmax(jax.random.normal(keys[24], (256, 128), jnp.float32), axis=-1)
    flog = jax.nn.log_softmax(jax.random.normal(keys[25], (256, 128), jnp.float32), axis=-1)
    out_b = {'present_log_prob': plog, 'future_log_prob': flog}
    loss = jax.block_until_ready(ProbabilisticLoss('BERNOULLI')(out_b))
    ref = _ref_bernoulli(plog, flog)
    assert jnp.allclose(loss, ref, rtol=1e-5, atol=1e-5), (loss, ref)

    print("KERNEL_OK")
</pallas_src>

<mosaic_0001>
module attributes {stable_mosaic.version = 11 : i64} {
  func.func @_gaussian_kl_kernel(%arg0: i32, %arg1: i32, %arg2: memref<2048x128xf32, #tpu.memory_space<vmem>>, %arg3: memref<2048x128xf32, #tpu.memory_space<vmem>>, %arg4: memref<2048x128xf32, #tpu.memory_space<vmem>>, %arg5: memref<2048x128xf32, #tpu.memory_space<vmem>>, %arg6: memref<8x128xf32, #tpu.memory_space<vmem>>) attributes {dimension_semantics = [#tpu.dimension_semantics<parallel>, #tpu.dimension_semantics<arbitrary>], iteration_bounds = array<i64: 2, 2>, scalar_prefetch = 0 : i64, scratch_operands = 0 : i64, tpu.core_type = #tpu.core_type<tc>, window_params = [{transform_indices = @transform_0, window_bounds = array<i64: 2048, 128>}, {transform_indices = @transform_1, window_bounds = array<i64: 2048, 128>}, {transform_indices = @transform_2, window_bounds = array<i64: 2048, 128>}, {transform_indices = @transform_3, window_bounds = array<i64: 2048, 128>}, {transform_indices = @transform_4, window_bounds = array<i64: 8, 128>}]} {
    %c0_i32 = arith.constant 0 : i32
    %0 = arith.cmpi eq, %arg1, %c0_i32 : i32
    %1 = arith.extui %0 : i1 to i32
    %c0_i32_0 = arith.constant 0 : i32
    %2 = arith.cmpi ne, %1, %c0_i32_0 : i32
    scf.if %2 {
      %cst_17 = arith.constant 0.000000e+00 : f32
      %31 = vector.broadcast %cst_17 : f32 to vector<8x128xf32>
      %c0_18 = arith.constant 0 : index
      %c0_19 = arith.constant 0 : index
      %32 = vector.load %arg6[%c0_18, %c0_19] : memref<8x128xf32, #tpu.memory_space<vmem>>, vector<8x128xf32>
      tpu.vector_store %arg6[%c0_18, %c0_19], %31 {strides = array<i32>} : memref<8x128xf32, #tpu.memory_space<vmem>>, vector<8x128xf32>,
    } else {
    }
    %c0 = arith.constant 0 : index
    %c0_1 = arith.constant 0 : index
    %3 = vector.load %arg2[%c0, %c0_1] : memref<2048x128xf32, #tpu.memory_space<vmem>>, vector<2048x128xf32>
    %c0_2 = arith.constant 0 : index
    %c0_3 = arith.constant 0 : index
    %4 = vector.load %arg3[%c0_2, %c0_3] : memref<2048x128xf32, #tpu.memory_space<vmem>>, vector<2048x128xf32>
    %c0_4 = arith.constant 0 : index
    %c0_5 = arith.constant 0 : index
    %5 = vector.load %arg4[%c0_4, %c0_5] : memref<2048x128xf32, #tpu.memory_space<vmem>>, vector<2048x128xf32>
    %c0_6 = arith.constant 0 : index
    %c0_7 = arith.constant 0 : index
    %6 = vector.load %arg5[%c0_6, %c0_7] : memref<2048x128xf32, #tpu.memory_space<vmem>>, vector<2048x128xf32>
    %7 = arith.subf %5, %3 : vector<2048x128xf32>
    %8 = arith.subf %4, %6 : vector<2048x128xf32>
    %cst = arith.constant 5.000000e-01 : f32
    %9 = vector.broadcast %cst : f32 to vector<2048x128xf32>
    %10 = arith.subf %8, %9 : vector<2048x128xf32>
    %11 = arith.subf %6, %4 : vector<2048x128xf32>
    %cst_8 = arith.constant 2.000000e+00 : f32
    %12 = vector.broadcast %cst_8 : f32 to vector<2048x128xf32>
    %13 = arith.mulf %12, %11 : vector<2048x128xf32>
    %14 = math.exp %13 : vector<2048x128xf32>
    %cst_9 = arith.constant 5.000000e-01 : f32
    %15 = vector.broadcast %cst_9 : f32 to vector<2048x128xf32>
    %16 = arith.mulf %15, %14 : vector<2048x128xf32>
    %17 = arith.addf %10, %16 : vector<2048x128xf32>
    %cst_10 = arith.constant 5.000000e-01 : f32
    %18 = vector.broadcast %cst_10 : f32 to vector<2048x128xf32>
    %19 = arith.mulf %18, %7 : vector<2048x128xf32>
    %20 = arith.mulf %19, %7 : vector<2048x128xf32>
    %cst_11 = arith.constant -2.000000e+00 : f32
    %21 = vector.broadcast %cst_11 : f32 to vector<2048x128xf32>
    %22 = arith.mulf %21, %4 : vector<2048x128xf32>
    %23 = math.exp %22 : vector<2048x128xf32>
    %24 = arith.mulf %20, %23 : vector<2048x128xf32>
    %25 = arith.addf %17, %24 : vector<2048x128xf32>
    %c0_12 = arith.constant 0 : index
    %c0_13 = arith.constant 0 : index
    %26 = vector.load %arg6[%c0_12, %c0_13] : memref<8x128xf32, #tpu.memory_space<vmem>>, vector<8x128xf32>
    %27 = vector.shape_cast %25 : vector<2048x128xf32> to vector<256x8x128xf32>
    %cst_14 = arith.constant dense<0.000000e+00> : vector<8x128xf32>
    %28 = vector.multi_reduction <add>, %27, %cst_14 [0] : vector<256x8x128xf32> to vector<8x128xf32>
    %29 = arith.addf %26, %28 : vector<8x128xf32>
    %c0_15 = arith.constant 0 : index
    %c0_16 = arith.constant 0 : index
    %30 = vector.load %arg6[%c0_15, %c0_16] : memref<8x128xf32, #tpu.memory_space<vmem>>, vector<8x128xf32>
    tpu.vector_store %arg6[%c0_15, %c0_16], %29 {strides = array<i32>} : memref<8x128xf32, #tpu.memory_space<vmem>>, vector<8x128xf32>,
    return
  }
  func.func @transform_0(%arg0: i32, %arg1: i32) -> (i32, i32) {
    %c2_i32 = arith.constant 2 : i32
    %0 = arith.muli %arg0, %c2_i32 : i32
    %1 = arith.addi %0, %arg1 : i32
    %c0_i32 = arith.constant 0 : i32
    %c0_i32_0 = arith.constant 0 : i32
    return %1, %c0_i32 : i32, i32
  }
  func.func @transform_1(%arg0: i32, %arg1: i32) -> (i32, i32) {
    %c2_i32 = arith.constant 2 : i32
    %0 = arith.muli %arg0, %c2_i32 : i32
    %1 = arith.addi %0, %arg1 : i32
    %c0_i32 = arith.constant 0 : i32
    %c0_i32_0 = arith.constant 0 : i32
    return %1, %c0_i32 : i32, i32
  }
  func.func @transform_2(%arg0: i32, %arg1: i32) -> (i32, i32) {
    %c2_i32 = arith.constant 2 : i32
    %0 = arith.muli %arg0, %c2_i32 : i32
    %1 = arith.addi %0, %arg1 : i32
    %c0_i32 = arith.constant 0 : i32
    %c0_i32_0 = arith.constant 0 : i32
    return %1, %c0_i32 : i32, i32
  }
  func.func @transform_3(%arg0: i32, %arg1: i32) -> (i32, i32) {
    %c2_i32 = arith.constant 2 : i32
    %0 = arith.muli %arg0, %c2_i32 : i32
    %1 = arith.addi %0, %arg1 : i32
    %c0_i32 = arith.constant 0 : i32
    %c0_i32_0 = arith.constant 0 : i32
    return %1, %c0_i32 : i32, i32
  }
  func.func @transform_4(%arg0: i32, %arg1: i32) -> (i32, i32) {
    %c0_i32 = arith.constant 0 : i32
    %c0_i32_0 = arith.constant 0 : i32
    return %arg0, %c0_i32 : i32, i32
  }
}

</mosaic_0001>

<llo_original>
// kernel: tpu_custom_call.1
$region0: #{tpu_custom_call.1}
  #allocation0 [shape = 'u32[]', space=smem, size = 0x4, offset = 0x4, fixed_abs, tag = 'smem constant byte address 0x4 - core index']
  #allocation1 [shape = 'u32[144,128]{1,0:T(1,128)}', space=vmem, size = 0x12000, scoped, tag = 'internal scratch']
  %s0 = inlined_call_operand.hbm [shape: f32[8192,128], index: 0, kind: input, shape index: {}]
  %s1 = inlined_call_operand.hbm [shape: f32[8192,128], index: 1, kind: input, shape index: {}]
  %s2 = inlined_call_operand.hbm [shape: f32[8192,128], index: 2, kind: input, shape index: {}]
  %s3 = inlined_call_operand.hbm [shape: f32[8192,128], index: 3, kind: input, shape index: {}]
  %s4 = inlined_call_operand.hbm [shape: f32[16,128], index: 4, kind: output, shape index: {}]
  %s5 = sld [smem:[#allocation0]]
  $region69: #{tpu_custom_call.1} parent=0
    _
  %s7 = ssub.s32 1, %s5
  %s8 = scalar_select 0, %s7, %s5
  $region1: #{tpu_custom_call.1} parent=0
    #allocation2 [shape = 'u8[2097152]{0}', space=vmem, size = 0x200000, scoped, tag = 'input window, operand 0']
    #allocation3 [shape = 's32[2]{0}', space=sflag, size = 0x8, scoped, tag = 'scoped memory for tpu_custom_call.1']
    #allocation4 [shape = 's32[2]{0}', space=sflag, size = 0x8, scoped, tag = 'scoped memory for tpu_custom_call.1']
    #allocation5 [shape = 'u8[2097152]{0}', space=vmem, size = 0x200000, scoped, tag = 'input window, operand 1']
    #allocation6 [shape = 's32[2]{0}', space=sflag, size = 0x8, scoped, tag = 'scoped memory for tpu_custom_call.1']
    #allocation7 [shape = 'u8[2097152]{0}', space=vmem, size = 0x200000, scoped, tag = 'input window, operand 2']
    #allocation8 [shape = 'u8[2097152]{0}', space=vmem, size = 0x200000, scoped, tag = 'input window, operand 3']
    #allocation9 [shape = 's32[2]{0}', space=sflag, size = 0x8, scoped, tag = 'scoped memory for tpu_custom_call.1']
    #allocation10 [shape = 'u8[8192]{0}', space=vmem, size = 0x2000, scoped, tag = 'output window, operand 0']
    %9 = vsyncpa [#allocation3], 0
    %s10 = scalar_lea.sflag [#allocation3], 1
    %11 = vsyncpa %s10, 0
    %12 = vsyncpa [#allocation6], 0
    %s13 = scalar_lea.sflag [#allocation6], 1
    %14 = vsyncpa %s13, 0
    %15 = vsyncpa [#allocation9], 0
    %s16 = scalar_lea.sflag [#allocation9], 1
    %17 = vsyncpa %s16, 0
    %18 = vsyncpa [#allocation4], 0
    %s19 = scalar_lea.sflag [#allocation4], 1
    %20 = vsyncpa %s19, 0
    loop: start=0, step=1, limit=6
    $region2: #{tpu_custom_call.1} parent=1 // loop_pre_header
      _
    $region3: #{tpu_custom_call.1} parent=1 // loop_header
      %s22 = sphi 0, %s26
      %p23 = scmp.ge.s32.totalorder %s22, 6
      %s29 = sphi 0, %s41
      %s30 = sphi 0, %s37
      %s31 = sphi 0, %s29
      %s32 = sphi 0, %s30
      %s33 = sphi 0, %s31
      %s34 = sphi 0, %s32
      %s48 = sphi 0, %s50
      %s51 = sphi 0, %s48
      %s52 = sphi 0, %s51
      %s68 = sphi 0, %s52
      %s78 = sphi 0, %s80
      %s81 = sphi 0, %s78
      %s82 = sphi 0, %s81
      %s98 = sphi 0, %s82
      %s108 = sphi 0, %s110
      %s111 = sphi 0, %s108
      %s112 = sphi 0, %s111
      %s128 = sphi 0, %s112
      %s138 = sphi 0, %s140
      %s141 = sphi 0, %s138
      %s142 = sphi 0, %s141
      %s158 = sphi 0, %s142
      %s164 = sphi 0, %s166
      %s167 = sphi 0, %s164
      %s168 = sphi 0, %s167
      %s184 = sphi 0, %s168
    $region4: #{tpu_custom_call.1} parent=1 // loop_header_branch
      %25 = sbr.rel (%p23) target = $region8
    $region5: #{tpu_custom_call.1} parent=1 // loop_body
      %s27 = ssub.s32 %s22, 1
      %s28 = ssub.s32 %s22, 2
      %s35 = sadd.s32 1, %s30
      %p36 = scmp.ge.s32.totalorder %s35, 2
      %s37 = scalar_select %p36, 0, %s35
      %s38 = sadd.s32 1, %s29
      %s39 = scalar_select %p36, %s38, %s29
      %p40 = scmp.ge.s32.totalorder %s39, 2
      %s41 = scalar_select %p40, 0, %s39
      %s42 = smul.u32 %s29, 2
      %s43 = sadd.s32 %s42, %s30
      %s44 = smul.u32 %s41, 2
      %s45 = sadd.s32 %s44, %s37
      %s46 = ssub.s32 %s43, %s45
      %p47 = scmp.eq.s32.totalorder %s46, 0
      %s49 = sadd.s32 %s48, 1
      %s50 = scalar_select %p47, %s48, %s49
      %p53 = pneg %p47
      %p54 = scmp.eq.s32.totalorder %s22, 3
      %p55 = por %p53, %p54
      %p56 = scmp.ne.s32.totalorder %s48, %s51
      %p57 = scmp.eq.s32.totalorder %s22, 0
      %p58 = por %p56, %p57
      %p59 = scmp.ne.s32.totalorder %s48, %s51
      %p60 = scmp.eq.s32.totalorder %s27, 3
      %p61 = por %p59, %p60
      %p62 = scmp.ne.s32.totalorder %s51, %s52
      %p63 = scmp.eq.s32.totalorder %s27, 0
      %p64 = por %p62, %p63
      %p65 = scmp.ne.s32.totalorder %s51, %s52
      %p66 = scmp.eq.s32.totalorder %s28, 3
      %p67 = por %p65, %p66
      %p69 = scmp.ne.s32.totalorder %s52, %s68
      %p70 = scmp.eq.s32.totalorder %s28, 0
      %p71 = por %p69, %p70
      %s72 = smul.u32 %s29, 2
      %s73 = sadd.s32 %s72, %s30
      %s74 = smul.u32 %s41, 2
      %s75 = sadd.s32 %s74, %s37
      %s76 = ssub.s32 %s73, %s75
      %p77 = scmp.eq.s32.totalorder %s76, 0
      %s79 = sadd.s32 %s78, 1
      %s80 = scalar_select %p77, %s78, %s79
      %p83 = pneg %p77
      %p84 = scmp.eq.s32.totalorder %s22, 3
      %p85 = por %p83, %p84
      %p86 = scmp.ne.s32.totalorder %s78, %s81
      %p87 = scmp.eq.s32.totalorder %s22, 0
      %p88 = por %p86, %p87
      %p89 = scmp.ne.s32.totalorder %s78, %s81
      %p90 = scmp.eq.s32.totalorder %s27, 3
      %p91 = por %p89, %p90
      %p92 = scmp.ne.s32.totalorder %s81, %s82
      %p93 = scmp.eq.s32.totalorder %s27, 0
      %p94 = por %p92, %p93
      %p95 = scmp.ne.s32.totalorder %s81, %s82
      %p96 = scmp.eq.s32.totalorder %s28, 3
      %p97 = por %p95, %p96
      %p99 = scmp.ne.s32.totalorder %s82, %s98
      %p100 = scmp.eq.s32.totalorder %s28, 0
      %p101 = por %p99, %p100
      %s102 = smul.u32 %s29, 2
      %s103 = sadd.s32 %s102, %s30
      %s104 = smul.u32 %s41, 2
      %s105 = sadd.s32 %s104, %s37
      %s106 = ssub.s32 %s103, %s105
      %p107 = scmp.eq.s32.totalorder %s106, 0
      %s109 = sadd.s32 %s108, 1
      %s110 = scalar_select %p107, %s108, %s109
      %p113 = pneg %p107
      %p114 = scmp.eq.s32.totalorder %s22, 3
      %p115 = por %p113, %p114
      %p116 = scmp.ne.s32.totalorder %s108, %s111
      %p117 = scmp.eq.s32.totalorder %s22, 0
      %p118 = por %p116, %p117
      %p119 = scmp.ne.s32.totalorder %s108, %s111
      %p120 = scmp.eq.s32.totalorder %s27, 3
      %p121 = por %p119, %p120
      %p122 = scmp.ne.s32.totalorder %s111, %s112
      %p123 = scmp.eq.s32.totalorder %s27, 0
      %p124 = por %p122, %p123
      %p125 = scmp.ne.s32.totalorder %s111, %s112
      %p126 = scmp.eq.s32.totalorder %s28, 3
      %p127 = por %p125, %p126
      %p129 = scmp.ne.s32.totalorder %s112, %s128
      %p130 = scmp.eq.s32.totalorder %s28, 0
      %p131 = por %p129, %p130
      %s132 = smul.u32 %s29, 2
      %s133 = sadd.s32 %s132, %s30
      %s134 = smul.u32 %s41, 2
      %s135 = sadd.s32 %s134, %s37
      %s136 = ssub.s32 %s133, %s135
      %p137 = scmp.eq.s32.totalorder %s136, 0
      %s139 = sadd.s32 %s138, 1
      %s140 = scalar_select %p137, %s138, %s139
      %p143 = pneg %p137
      %p144 = scmp.eq.s32.totalorder %s22, 3
      %p145 = por %p143, %p144
      %p146 = scmp.ne.s32.totalorder %s138, %s141
      %p147 = scmp.eq.s32.totalorder %s22, 0
      %p148 = por %p146, %p147
      %p149 = scmp.ne.s32.totalorder %s138, %s141
      %p150 = scmp.eq.s32.totalorder %s27, 3
      %p151 = por %p149, %p150
      %p152 = scmp.ne.s32.totalorder %s141, %s142
      %p153 = scmp.eq.s32.totalorder %s27, 0
      %p154 = por %p152, %p153
      %p155 = scmp.ne.s32.totalorder %s141, %s142
      %p156 = scmp.eq.s32.totalorder %s28, 3
      %p157 = por %p155, %p156
      %p159 = scmp.ne.s32.totalorder %s142, %s158
      %p160 = scmp.eq.s32.totalorder %s28, 0
      %p161 = por %p159, %p160
      %s162 = ssub.s32 %s29, %s41
      %p163 = scmp.eq.s32.totalorder %s162, 0
      %s165 = sadd.s32 %s164, 1
      %s166 = scalar_select %p163, %s164, %s165
      %p169 = pneg %p163
      %p170 = scmp.eq.s32.totalorder %s22, 3
      %p171 = por %p169, %p170
      %p172 = scmp.ne.s32.totalorder %s164, %s167
      %p173 = scmp.eq.s32.totalorder %s22, 0
      %p174 = por %p172, %p173
      %p175 = scmp.ne.s32.totalorder %s164, %s167
      %p176 = scmp.eq.s32.totalorder %s27, 3
      %p177 = por %p175, %p176
      %p178 = scmp.ne.s32.totalorder %s167, %s168
      %p179 = scmp.eq.s32.totalorder %s27, 0
      %p180 = por %p178, %p179
      %p181 = scmp.ne.s32.totalorder %s167, %s168
      %p182 = scmp.eq.s32.totalorder %s28, 3
      %p183 = por %p181, %p182
      %p185 = scmp.ne.s32.totalorder %s168, %s184
      %p186 = scmp.eq.s32.totalorder %s28, 0
      %p187 = por %p185, %p186
      %p188 = scmp.le.s32.totalorder 1, %s22
      %p189 = scmp.lt.s32.totalorder %s22, 5
      %p190 = pnand %p188, %p189
      %p191 = pneg %p190
      // Predicated region
      $region9: #{tpu_custom_call.1} parent=5 // pred_check
        _
      $region10: #{tpu_custom_call.1} parent=5 // pred_check_branch
        %193 = sbr.rel (%p190) target = $region12
      $region11: #{tpu_custom_call.1} parent=5 // pred_region
        %s194 = ssub.s32 %s22, 1
      $region12: #{tpu_custom_call.1} parent=5 // pred_fallthru
        _
      %p195 = scmp.lt.s32.totalorder %s22, 4
      // Predicated region
      $region13: #{tpu_custom_call.1} parent=5 // pred_check
        %p196 = pneg %p195
      $region14: #{tpu_custom_call.1} parent=5 // pred_check_branch
        %198 = sbr.rel (%p196) target = $region16
      $region15: #{tpu_custom_call.1} parent=5 // pred_region
        // Predicated region
        $region17: #{tpu_custom_call.1} parent=15 // pred_check
          %p199 = pneg %p58
        $region18: #{tpu_custom_call.1} parent=15 // pred_check_branch
          %201 = sbr.rel (%p199) target = $region20
        $region19: #{tpu_custom_call.1} parent=15 // pred_region
          %s202 = sand.u32 %s48, 1
          %s203 = scalar_lea.sflag [#allocation3], %s202
          %s204 = sand.u32 %s48, 1
          %s205 = smul.addr %s204, 2048
          %s206 = scalar_lea.vmem [#allocation2], %s205
          %s207 = smul.u32 %s29, 2
          %s208 = sadd.s32 %s207, %s30
          %s209 = smul.u32 256, %s208
          %s211 = ssub.s32 32768, 32768
          %212 = vsyncadd %s203, %s211
          %s213 = smul.addr %s209, 128
          %s214 = scalar_lea.hbm %s0, %s213
          %s215 = sshll.u32 %s206, 4
          %s216 = int_to_ptr.vmem [resolvable:$true] %s215
          %221 = dma.hbm_to_vmem [thread:$0]  %s214, 32768, %s216, %s203, 128, 128, 8
        $region20: #{tpu_custom_call.1} parent=15 // pred_fallthru
          _
        // Predicated region
        $region21: #{tpu_custom_call.1} parent=15 // pred_check
          %p222 = pneg %p88
        $region22: #{tpu_custom_call.1} parent=15 // pred_check_branch
          %224 = sbr.rel (%p222) target = $region24
        $region23: #{tpu_custom_call.1} parent=15 // pred_region
          %s225 = sand.u32 %s22, 1
          %s226 = scalar_lea.sflag [#allocation6], %s225
          %s227 = sand.u32 %s78, 1
          %s228 = smul.addr %s227, 2048
          %s229 = scalar_lea.vmem [#allocation5], %s228
          %s230 = smul.u32 %s29, 2
          %s231 = sadd.s32 %s230, %s30
          %s232 = smul.u32 256, %s231
          %s234 = ssub.s32 32768, 32768
          %235 = vsyncadd %s226, %s234
          %s236 = smul.addr %s232, 128
          %s237 = scalar_lea.hbm %s1, %s236
          %s238 = sshll.u32 %s229, 4
          %s239 = int_to_ptr.vmem [resolvable:$true] %s238
          %244 = dma.hbm_to_vmem [thread:$0]  %s237, 32768, %s239, %s226, 128, 128, 8
        $region24: #{tpu_custom_call.1} parent=15 // pred_fallthru
          _
        // Predicated region
        $region25: #{tpu_custom_call.1} parent=15 // pred_check
          %p245 = pneg %p118
        $region26: #{tpu_custom_call.1} parent=15 // pred_check_branch
          %247 = sbr.rel (%p245) target = $region28
        $region27: #{tpu_custom_call.1} parent=15 // pred_region
          %s248 = sand.u32 %s22, 1
          %s249 = scalar_lea.sflag [#allocation6], %s248
          %s250 = sand.u32 %s108, 1
          %s251 = smul.addr %s250, 2048
          %s252 = scalar_lea.vmem [#allocation7], %s251
          %s253 = smul.u32 %s29, 2
          %s254 = sadd.s32 %s253, %s30
          %s255 = smul.u32 256, %s254
          %s257 = ssub.s32 32768, 32768
          %258 = vsyncadd %s249, %s257
          %s259 = smul.addr %s255, 128
          %s260 = scalar_lea.hbm %s2, %s259
          %s261 = sshll.u32 %s252, 4
          %s262 = int_to_ptr.vmem [resolvable:$true] %s261
          %267 = dma.hbm_to_vmem [thread:$0]  %s260, 32768, %s262, %s249, 128, 128, 8
        $region28: #{tpu_custom_call.1} parent=15 // pred_fallthru
          _
        // Predicated region
        $region29: #{tpu_custom_call.1} parent=15 // pred_check
          %p268 = pneg %p148
        $region30: #{tpu_custom_call.1} parent=15 // pred_check_branch
          %270 = sbr.rel (%p268) target = $region32
        $region31: #{tpu_custom_call.1} parent=15 // pred_region
          %s271 = sand.u32 %s138, 1
          %s272 = scalar_lea.sflag [#allocation9], %s271
          %s273 = sand.u32 %s138, 1
          %s274 = smul.addr %s273, 2048
          %s275 = scalar_lea.vmem [#allocation8], %s274
          %s276 = smul.u32 %s29, 2
          %s277 = sadd.s32 %s276, %s30
          %s278 = smul.u32 256, %s277
          %s280 = ssub.s32 32768, 32768
          %281 = vsyncadd %s272, %s280
          %s282 = smul.addr %s278, 128
          %s283 = scalar_lea.hbm %s3, %s282
          %s284 = sshll.u32 %s275, 4
          %s285 = int_to_ptr.vmem [resolvable:$true] %s284
          %290 = dma.hbm_to_vmem [thread:$0]  %s283, 32768, %s285, %s272, 128, 128, 8
        $region32: #{tpu_custom_call.1} parent=15 // pred_fallthru
          _
      $region16: #{tpu_custom_call.1} parent=5 // pred_fallthru
        _
      %p291 = scmp.le.s32.totalorder 1, %s22
      %p292 = scmp.lt.s32.totalorder %s22, 5
      %p293 = pnand %p291, %p292
      %p294 = pneg %p293
      // Predicated region
      $region33: #{tpu_custom_call.1} parent=5 // pred_check
        _
      $region34: #{tpu_custom_call.1} parent=5 // pred_check_branch
        %296 = sbr.rel (%p293) target = $region36
      $region35: #{tpu_custom_call.1} parent=5 // pred_region
        %s297 = ssub.s32 %s22, 1
        %s298 = sand.u32 %s51, 1
        %s299 = scalar_lea.sflag [#allocation3], %s298
        %s300 = sand.u32 %s51, 1
        %s301 = smul.addr %s300, 2048
        %s302 = scalar_lea.vmem [#allocation2], %s301
        // Predicated region
        $region37: #{tpu_custom_call.1} parent=35 // pred_check
          %p303 = pneg %p64
        $region38: #{tpu_custom_call.1} parent=35 // pred_check_branch
          %305 = sbr.rel (%p303) target = $region40
        $region39: #{tpu_custom_call.1} parent=35 // pred_region
          %306 = dma.done %s299, 32768
        $region40: #{tpu_custom_call.1} parent=35 // pred_fallthru
          _
        %s307 = sand.u32 %s27, 1
        %s308 = scalar_lea.sflag [#allocation6], %s307
        %s309 = sand.u32 %s81, 1
        %s310 = smul.addr %s309, 2048
        %s311 = scalar_lea.vmem [#allocation5], %s310
        // Predicated region
        $region41: #{tpu_custom_call.1} parent=35 // pred_check
          %p312 = pneg %p94
        $region42: #{tpu_custom_call.1} parent=35 // pred_check_branch
          %314 = sbr.rel (%p312) target = $region44
        $region43: #{tpu_custom_call.1} parent=35 // pred_region
          %315 = dma.done %s308, 32768
        $region44: #{tpu_custom_call.1} parent=35 // pred_fallthru
          _
        %s316 = sand.u32 %s27, 1
        %s317 = scalar_lea.sflag [#allocation6], %s316
        %s318 = sand.u32 %s111, 1
        %s319 = smul.addr %s318, 2048
        %s320 = scalar_lea.vmem [#allocation7], %s319
        // Predicated region
        $region45: #{tpu_custom_call.1} parent=35 // pred_check
          %p321 = pneg %p124
        $region46: #{tpu_custom_call.1} parent=35 // pred_check_branch
          %323 = sbr.rel (%p321) target = $region48
        $region47: #{tpu_custom_call.1} parent=35 // pred_region
          %324 = dma.done %s317, 32768
        $region48: #{tpu_custom_call.1} parent=35 // pred_fallthru
          _
        %s325 = sand.u32 %s141, 1
        %s326 = scalar_lea.sflag [#allocation9], %s325
        %s327 = sand.u32 %s141, 1
        %s328 = smul.addr %s327, 2048
        %s329 = scalar_lea.vmem [#allocation8], %s328
        // Predicated region
        $region49: #{tpu_custom_call.1} parent=35 // pred_check
          %p330 = pneg %p154
        $region50: #{tpu_custom_call.1} parent=35 // pred_check_branch
          %332 = sbr.rel (%p330) target = $region52
        $region51: #{tpu_custom_call.1} parent=35 // pred_region
          %333 = dma.done %s326, 32768
        $region52: #{tpu_custom_call.1} parent=35 // pred_fallthru
          _
        %s334 = sand.u32 %s51, 1
        %s335 = scalar_lea.sflag [#allocation3], %s334
        %s336 = sand.u32 %s51, 1
        %s337 = smul.addr %s336, 2048
        %s338 = scalar_lea.vmem [#allocation2], %s337
        %p339 = pneg %p64
        %p340 = pneg %p61
        %s341 = sand.u32 %s27, 1
        %s342 = scalar_lea.sflag [#allocation6], %s341
        %s343 = sand.u32 %s81, 1
        %s344 = smul.addr %s343, 2048
        %s345 = scalar_lea.vmem [#allocation5], %s344
        %p346 = pneg %p94
        %p347 = pneg %p91
        %s348 = sand.u32 %s27, 1
        %s349 = scalar_lea.sflag [#allocation6], %s348
        %s350 = sand.u32 %s111, 1
        %s351 = smul.addr %s350, 2048
        %s352 = scalar_lea.vmem [#allocation7], %s351
        %p353 = pneg %p124
        %p354 = pneg %p121
        %s355 = sand.u32 %s141, 1
        %s356 = scalar_lea.sflag [#allocation9], %s355
        %s357 = sand.u32 %s141, 1
        %s358 = smul.addr %s357, 2048
        %s359 = scalar_lea.vmem [#allocation8], %s358
        %p360 = pneg %p154
        %p361 = pneg %p151
        %p362 = pneg %p180
        %p363 = pneg %p177
        %s364 = sand.u32 %s167, 1
        %s365 = scalar_lea.sflag [#allocation4], %s364
        %s366 = sand.u32 %s167, 1
        %s367 = smul.addr %s366, 8
        %s368 = scalar_lea.vmem [#allocation10], %s367
        %s369 = smul.u32 %s31, 2
        %s370 = sadd.s32 %s369, %s32
        %s371 = smul.u32 256, %s370
        %s372 = smul.u32 %s31, 2
        %s373 = sadd.s32 %s372, %s32
        %s374 = smul.u32 256, %s373
        %s375 = smul.u32 %s31, 2
        %s376 = sadd.s32 %s375, %s32
        %s377 = smul.u32 256, %s376
        %s378 = smul.u32 %s31, 2
        %s379 = sadd.s32 %s378, %s32
        %s380 = smul.u32 256, %s379
        %p381 = scmp.eq.s32.totalorder %s32, 0
        // Predicated region
        $region53: #{tpu_custom_call.1} parent=35 // pred_check
          %p382 = pneg %p381
        $region54: #{tpu_custom_call.1} parent=35 // pred_check_branch
          %384 = sbr.rel (%p382) target = $region56
        $region55: #{tpu_custom_call.1} parent=35 // pred_region
          %385 = vst [vmem:[%s368] sm:$0xff] 0.0
        $region56: #{tpu_custom_call.1} parent=35 // pred_fallthru
          _
        %v386 = vld [vmem:[%s302] sm:$0xff]
        %v387 = vld [vmem:[%s302 + $0x8] sm:$0xff]
        %v388 = vld [vmem:[%s302 + $0x10] sm:$0xff]
        %v389 = vld [vmem:[%s302 + $0x18] sm:$0xff]
        %v390 = vld [vmem:[%s302 + $0x20] sm:$0xff]
        %v391 = vld [vmem:[%s302 + $0x28] sm:$0xff]
        %v392 = vld [vmem:[%s302 + $0x30] sm:$0xff]
        %v393 = vld [vmem:[%s302 + $0x38] sm:$0xff]
        %v394 = vld [vmem:[%s302 + $0x40] sm:$0xff]
        %v395 = vld [vmem:[%s302 + $0x48] sm:$0xff]
        %v396 = vld [vmem:[%s302 + $0x50] sm:$0xff]
        %v397 = vld [vmem:[%s302 + $0x58] sm:$0xff]
        %v398 = vld [vmem:[%s302 + $0x60] sm:$0xff]
        %v399 = vld [vmem:[%s302 + $0x68] sm:$0xff]
        %v400 = vld [vmem:[%s302 + $0x70] sm:$0xff]
        %v401 = vld [vmem:[%s302 + $0x78] sm:$0xff]
        %v402 = vld [vmem:[%s302 + $0x80] sm:$0xff]
        %v403 = vld [vmem:[%s302 + $0x88] sm:$0xff]
        %v404 = vld [vmem:[%s302 + $0x90] sm:$0xff]
        %v405 = vld [vmem:[%s302 + $0x98] sm:$0xff]
        %v406 = vld [vmem:[%s302 + $0xa0] sm:$0xff]
        %v407 = vld [vmem:[%s302 + $0xa8] sm:$0xff]
        %v408 = vld [vmem:[%s302 + $0xb0] sm:$0xff]
        %v409 = vld [vmem:[%s302 + $0xb8] sm:$0xff]
        %v410 = vld [vmem:[%s302 + $0xc0] sm:$0xff]
        %v411 = vld [vmem:[%s302 + $0xc8] sm:$0xff]
        %v412 = vld [vmem:[%s302 + $0xd0] sm:$0xff]
        %v413 = vld [vmem:[%s302 + $0xd8] sm:$0xff]
        %v414 = vld [vmem:[%s302 + $0xe0] sm:$0xff]
        %v415 = vld [vmem:[%s302 + $0xe8] sm:$0xff]
        %v416 = vld [vmem:[%s302 + $0xf0] sm:$0xff]
        %v417 = vld [vmem:[%s302 + $0xf8] sm:$0xff]
        %v418 = vld [vmem:[%s302 + $0x100] sm:$0xff]
        %v419 = vld [vmem:[%s302 + $0x108] sm:$0xff]
        %v420 = vld [vmem:[%s302 + $0x110] sm:$0xff]
        %v421 = vld [vmem:[%s302 + $0x118] sm:$0xff]
        %v422 = vld [vmem:[%s302 + $0x120] sm:$0xff]
        %v423 = vld [vmem:[%s302 + $0x128] sm:$0xff]
        %v424 = vld [vmem:[%s302 + $0x130] sm:$0xff]
        %v425 = vld [vmem:[%s302 + $0x138] sm:$0xff]
        %v426 = vld [vmem:[%s302 + $0x140] sm:$0xff]
        %v427 = vld [vmem:[%s302 + $0x148] sm:$0xff]
        %v428 = vld [vmem:[%s302 + $0x150] sm:$0xff]
        %v429 = vld [vmem:[%s302 + $0x158] sm:$0xff]
        %v430 = vld [vmem:[%s302 + $0x160] sm:$0xff]
        %v431 = vld [vmem:[%s302 + $0x168] sm:$0xff]
        %v432 = vld [vmem:[%s302 + $0x170] sm:$0xff]
        %v433 = vld [vmem:[%s302 + $0x178] sm:$0xff]
        %v434 = vld [vmem:[%s302 + $0x180] sm:$0xff]
        %v435 = vld [vmem:[%s302 + $0x188] sm:$0xff]
        %v436 = vld [vmem:[%s302 + $0x190] sm:$0xff]
        %v437 = vld [vmem:[%s302 + $0x198] sm:$0xff]
        %v438 = vld [vmem:[%s302 + $0x1a0] sm:$0xff]
        %v439 = vld [vmem:[%s302 + $0x1a8] sm:$0xff]
        %v440 = vld [vmem:[%s302 + $0x1b0] sm:$0xff]
        %v441 = vld [vmem:[%s302 + $0x1b8] sm:$0xff]
        %v442 = vld [vmem:[%s302 + $0x1c0] sm:$0xff]
        %v443 = vld [vmem:[%s302 + $0x1c8] sm:$0xff]
        %v444 = vld [vmem:[%s302 + $0x1d0] sm:$0xff]
        %v445 = vld [vmem:[%s302 + $0x1d8] sm:$0xff]
        %v446 = vld [vmem:[%s302 + $0x1e0] sm:$0xff]
        %v447 = vld [vmem:[%s302 + $0x1e8] sm:$0xff]
        %v448 = vld [vmem:[%s302 + $0x1f0] sm:$0xff]
        %v449 = vld [vmem:[%s302 + $0x1f8] sm:$0xff]
        %v450 = vld [vmem:[%s302 + $0x200] sm:$0xff]
        %v451 = vld [vmem:[%s302 + $0x208] sm:$0xff]
        %v452 = vld [vmem:[%s302 + $0x210] sm:$0xff]
        %v453 = vld [vmem:[%s302 + $0x218] sm:$0xff]
        %v454 = vld [vmem:[%s302 + $0x220] sm:$0xff]
        %v455 = vld [vmem:[%s302 + $0x228] sm:$0xff]
        %v456 = vld [vmem:[%s302 + $0x230] sm:$0xff]
        %v457 = vld [vmem:[%s302 + $0x238] sm:$0xff]
        %v458 = vld [vmem:[%s302 + $0x240] sm:$0xff]
        %v459 = vld [vmem:[%s302 + $0x248] sm:$0xff]
        %v460 = vld [vmem:[%s302 + $0x250] sm:$0xff]
        %v461 = vld [vmem:[%s302 + $0x258] sm:$0xff]
        %v462 = vld [vmem:[%s302 + $0x260] sm:$0xff]
        %v463 = vld [vmem:[%s302 + $0x268] sm:$0xff]
        %v464 = vld [vmem:[%s302 + $0x270] sm:$0xff]
        %v465 = vld [vmem:[%s302 + $0x278] sm:$0xff]
        %v466 = vld [vmem:[%s302 + $0x280] sm:$0xff]
        %v467 = vld [vmem:[%s302 + $0x288] sm:$0xff]
        %v468 = vld [vmem:[%s302 + $0x290] sm:$0xff]
        %v469 = vld [vmem:[%s302 + $0x298] sm:$0xff]
        %v470 = vld [vmem:[%s302 + $0x2a0] sm:$0xff]
        %v471 = vld [vmem:[%s302 + $0x2a8] sm:$0xff]
        %v472 = vld [vmem:[%s302 + $0x2b0] sm:$0xff]
        %v473 = vld [vmem:[%s302 + $0x2b8] sm:$0xff]
        %v474 = vld [vmem:[%s302 + $0x2c0] sm:$0xff]
        %v475 = vld [vmem:[%s302 + $0x2c8] sm:$0xff]
        %v476 = vld [vmem:[%s302 + $0x2d0] sm:$0xff]
        %v477 = vld [vmem:[%s302 + $0x2d8] sm:$0xff]
        %v478 = vld [vmem:[%s302 + $0x2e0] sm:$0xff]
        %v479 = vld [vmem:[%s302 + $0x2e8] sm:$0xff]
        %v480 = vld [vmem:[%s302 + $0x2f0] sm:$0xff]
        %v481 = vld [vmem:[%s302 + $0x2f8] sm:$0xff]
        %v482 = vld [vmem:[%s302 + $0x300] sm:$0xff]
        %v483 = vld [vmem:[%s302 + $0x308] sm:$0xff]
        %v484 = vld [vmem:[%s302 + $0x310] sm:$0xff]
        %v485 = vld [vmem:[%s302 + $0x318] sm:$0xff]
        %v486 = vld [vmem:[%s302 + $0x320] sm:$0xff]
        %v487 = vld [vmem:[%s302 + $0x328] sm:$0xff]
        %v488 = vld [vmem:[%s302 + $0x330] sm:$0xff]
        %v489 = vld [vmem:[%s302 + $0x338] sm:$0xff]
        %v490 = vld [vmem:[%s302 + $0x340] sm:$0xff]
        %v491 = vld [vmem:[%s302 + $0x348] sm:$0xff]
        %v492 = vld [vmem:[%s302 + $0x350] sm:$0xff]
        %v493 = vld [vmem:[%s302 + $0x358] sm:$0xff]
        %v494 = vld [vmem:[%s302 + $0x360] sm:$0xff]
        %v495 = vld [vmem:[%s302 + $0x368] sm:$0xff]
        %v496 = vld [vmem:[%s302 + $0x370] sm:$0xff]
        %v497 = vld [vmem:[%s302 + $0x378] sm:$0xff]
        %v498 = vld [vmem:[%s302 + $0x380] sm:$0xff]
        %v499 = vld [vmem:[%s302 + $0x388] sm:$0xff]
        %v500 = vld [vmem:[%s302 + $0x390] sm:$0xff]
        %v501 = vld [vmem:[%s302 + $0x398] sm:$0xff]
        %v502 = vld [vmem:[%s302 + $0x3a0] sm:$0xff]
        %v503 = vld [vmem:[%s302 + $0x3a8] sm:$0xff]
        %v504 = vld [vmem:[%s302 + $0x3b0] sm:$0xff]
        %v505 = vld [vmem:[%s302 + $0x3b8] sm:$0xff]
        %v506 = vld [vmem:[%s302 + $0x3c0] sm:$0xff]
        %v507 = vld [vmem:[%s302 + $0x3c8] sm:$0xff]
        %v508 = vld [vmem:[%s302 + $0x3d0] sm:$0xff]
        %v509 = vld [vmem:[%s302 + $0x3d8] sm:$0xff]
        %v510 = vld [vmem:[%s302 + $0x3e0] sm:$0xff]
        %v511 = vld [vmem:[%s302 + $0x3e8] sm:$0xff]
        %v512 = vld [vmem:[%s302 + $0x3f0] sm:$0xff]
        %v513 = vld [vmem:[%s302 + $0x3f8] sm:$0xff]
        %v514 = vld [vmem:[%s302 + $0x400] sm:$0xff]
        %v515 = vld [vmem:[%s302 + $0x408] sm:$0xff]
        %v516 = vld [vmem:[%s302 + $0x410] sm:$0xff]
        %v517 = vld [vmem:[%s302 + $0x418] sm:$0xff]
        %v518 = vld [vmem:[%s302 + $0x420] sm:$0xff]
        %v519 = vld [vmem:[%s302 + $0x428] sm:$0xff]
        %v520 = vld [vmem:[%s302 + $0x430] sm:$0xff]
        %v521 = vld [vmem:[%s302 + $0x438] sm:$0xff]
        %v522 = vld [vmem:[%s302 + $0x440] sm:$0xff]
        %v523 = vld [vmem:[%s302 + $0x448] sm:$0xff]
        %v524 = vld [vmem:[%s302 + $0x450] sm:$0xff]
        %v525 = vld [vmem:[%s302 + $0x458] sm:$0xff]
        %v526 = vld [vmem:[%s302 + $0x460] sm:$0xff]
        %v527 = vld [vmem:[%s302 + $0x468] sm:$0xff]
        %v528 = vld [vmem:[%s302 + $0x470] sm:$0xff]
        %v529 = vld [vmem:[%s302 + $0x478] sm:$0xff]
        %v530 = vld [vmem:[%s302 + $0x480] sm:$0xff]
        %v531 = vld [vmem:[%s302 + $0x488] sm:$0xff]
        %v532 = vld [vmem:[%s302 + $0x490] sm:$0xff]
        %v533 = vld [vmem:[%s302 + $0x498] sm:$0xff]
        %v534 = vld [vmem:[%s302 + $0x4a0] sm:$0xff]
        %v535 = vld [vmem:[%s302 + $0x4a8] sm:$0xff]
        %v536 = vld [vmem:[%s302 + $0x4b0] sm:$0xff]
        %v537 = vld [vmem:[%s302 + $0x4b8] sm:$0xff]
        %v538 = vld [vmem:[%s302 + $0x4c0] sm:$0xff]
        %v539 = vld [vmem:[%s302 + $0x4c8] sm:$0xff]
        %v540 = vld [vmem:[%s302 + $0x4d0] sm:$0xff]
        %v541 = vld [vmem:[%s302 + $0x4d8] sm:$0xff]
        %v542 = vld [vmem:[%s302 + $0x4e0] sm:$0xff]
        %v543 = vld [vmem:[%s302 + $0x4e8] sm:$0xff]
        %v544 = vld [vmem:[%s302 + $0x4f0] sm:$0xff]
        %v545 = vld [vmem:[%s302 + $0x4f8] sm:$0xff]
        %v546 = vld [vmem:[%s302 + $0x500] sm:$0xff]
        %v547 = vld [vmem:[%s302 + $0x508] sm:$0xff]
        %v548 = vld [vmem:[%s302 + $0x510] sm:$0xff]
        %v549 = vld [vmem:[%s302 + $0x518] sm:$0xff]
        %v550 = vld [vmem:[%s302 + $0x520] sm:$0xff]
        %v551 = vld [vmem:[%s302 + $0x528] sm:$0xff]
        %v552 = vld [vmem:[%s302 + $0x530] sm:$0xff]
        %v553 = vld [vmem:[%s302 + $0x538] sm:$0xff]
        %v554 = vld [vmem:[%s302 + $0x540] sm:$0xff]
        %v555 = vld [vmem:[%s302 + $0x548] sm:$0xff]
        %v556 = vld [vmem:[%s302 + $0x550] sm:$0xff]
        %v557 = vld [vmem:[%s302 + $0x558] sm:$0xff]
        %v558 = vld [vmem:[%s302 + $0x560] sm:$0xff]
        %v559 = vld [vmem:[%s302 + $0x568] sm:$0xff]
        %v560 = vld [vmem:[%s302 + $0x570] sm:$0xff]
        %v561 = vld [vmem:[%s302 + $0x578] sm:$0xff]
        %v562 = vld [vmem:[%s302 + $0x580] sm:$0xff]
        %v563 = vld [vmem:[%s302 + $0x588] sm:$0xff]
        %v564 = vld [vmem:[%s302 + $0x590] sm:$0xff]
        %v565 = vld [vmem:[%s302 + $0x598] sm:$0xff]
        %v566 = vld [vmem:[%s302 + $0x5a0] sm:$0xff]
        %v567 = vld [vmem:[%s302 + $0x5a8] sm:$0xff]
        %v568 = vld [vmem:[%s302 + $0x5b0] sm:$0xff]
        %v569 = vld [vmem:[%s302 + $0x5b8] sm:$0xff]
        %v570 = vld [vmem:[%s302 + $0x5c0] sm:$0xff]
        %v571 = vld [vmem:[%s302 + $0x5c8] sm:$0xff]
        %v572 = vld [vmem:[%s302 + $0x5d0] sm:$0xff]
        %v573 = vld [vmem:[%s302 + $0x5d8] sm:$0xff]
        %v574 = vld [vmem:[%s302 + $0x5e0] sm:$0xff]
        %v575 = vld [vmem:[%s302 + $0x5e8] sm:$0xff]
        %v576 = vld [vmem:[%s302 + $0x5f0] sm:$0xff]
        %v577 = vld [vmem:[%s302 + $0x5f8] sm:$0xff]
        %v578 = vld [vmem:[%s302 + $0x600] sm:$0xff]
        %v579 = vld [vmem:[%s302 + $0x608] sm:$0xff]
        %v580 = vld [vmem:[%s302 + $0x610] sm:$0xff]
        %v581 = vld [vmem:[%s302 + $0x618] sm:$0xff]
        %v582 = vld [vmem:[%s302 + $0x620] sm:$0xff]
        %v583 = vld [vmem:[%s302 + $0x628] sm:$0xff]
        %v584 = vld [vmem:[%s302 + $0x630] sm:$0xff]
        %v585 = vld [vmem:[%s302 + $0x638] sm:$0xff]
        %v586 = vld [vmem:[%s302 + $0x640] sm:$0xff]
        %v587 = vld [vmem:[%s302 + $0x648] sm:$0xff]
        %v588 = vld [vmem:[%s302 + $0x650] sm:$0xff]
        %v589 = vld [vmem:[%s302 + $0x658] sm:$0xff]
        %v590 = vld [vmem:[%s302 + $0x660] sm:$0xff]
        %v591 = vld [vmem:[%s302 + $0x668] sm:$0xff]
        %v592 = vld [vmem:[%s302 + $0x670] sm:$0xff]
        %v593 = vld [vmem:[%s302 + $0x678] sm:$0xff]
        %v594 = vld [vmem:[%s302 + $0x680] sm:$0xff]
        %v595 = vld [vmem:[%s302 + $0x688] sm:$0xff]
        %v596 = vld [vmem:[%s302 + $0x690] sm:$0xff]
        %v597 = vld [vmem:[%s302 + $0x698] sm:$0xff]
        %v598 = vld [vmem:[%s302 + $0x6a0] sm:$0xff]
        %v599 = vld [vmem:[%s302 + $0x6a8] sm:$0xff]
        %v600 = vld [vmem:[%s302 + $0x6b0] sm:$0xff]
        %v601 = vld [vmem:[%s302 + $0x6b8] sm:$0xff]
        %v602 = vld [vmem:[%s302 + $0x6c0] sm:$0xff]
        %v603 = vld [vmem:[%s302 + $0x6c8] sm:$0xff]
        %v604 = vld [vmem:[%s302 + $0x6d0] sm:$0xff]
        %v605 = vld [vmem:[%s302 + $0x6d8] sm:$0xff]
        %v606 = vld [vmem:[%s302 + $0x6e0] sm:$0xff]
        %v607 = vld [vmem:[%s302 + $0x6e8] sm:$0xff]
        %v608 = vld [vmem:[%s302 + $0x6f0] sm:$0xff]
        %v609 = vld [vmem:[%s302 + $0x6f8] sm:$0xff]
        %v610 = vld [vmem:[%s302 + $0x700] sm:$0xff]
        %v611 = vld [vmem:[%s302 + $0x708] sm:$0xff]
        %v612 = vld [vmem:[%s302 + $0x710] sm:$0xff]
        %v613 = vld [vmem:[%s302 + $0x718] sm:$0xff]
        %v614 = vld [vmem:[%s302 + $0x720] sm:$0xff]
        %v615 = vld [vmem:[%s302 + $0x728] sm:$0xff]
        %v616 = vld [vmem:[%s302 + $0x730] sm:$0xff]
        %v617 = vld [vmem:[%s302 + $0x738] sm:$0xff]
        %v618 = vld [vmem:[%s302 + $0x740] sm:$0xff]
        %v619 = vld [vmem:[%s302 + $0x748] sm:$0xff]
        %v620 = vld [vmem:[%s302 + $0x750] sm:$0xff]
        %v621 = vld [vmem:[%s302 + $0x758] sm:$0xff]
        %v622 = vld [vmem:[%s302 + $0x760] sm:$0xff]
        %v623 = vld [vmem:[%s302 + $0x768] sm:$0xff]
        %v624 = vld [vmem:[%s302 + $0x770] sm:$0xff]
        %v625 = vld [vmem:[%s302 + $0x778] sm:$0xff]
        %v626 = vld [vmem:[%s302 + $0x780] sm:$0xff]
        %v627 = vld [vmem:[%s302 + $0x788] sm:$0xff]
        %v628 = vld [vmem:[%s302 + $0x790] sm:$0xff]
        %v629 = vld [vmem:[%s302 + $0x798] sm:$0xff]
        %v630 = vld [vmem:[%s302 + $0x7a0] sm:$0xff]
        %v631 = vld [vmem:[%s302 + $0x7a8] sm:$0xff]
        %v632 = vld [vmem:[%s302 + $0x7b0] sm:$0xff]
        %v633 = vld [vmem:[%s302 + $0x7b8] sm:$0xff]
        %v634 = vld [vmem:[%s302 + $0x7c0] sm:$0xff]
        %v635 = vld [vmem:[%s302 + $0x7c8] sm:$0xff]
        %v636 = vld [vmem:[%s302 + $0x7d0] sm:$0xff]
        %v637 = vld [vmem:[%s302 + $0x7d8] sm:$0xff]
        %v638 = vld [vmem:[%s302 + $0x7e0] sm:$0xff]
        %v639 = vld [vmem:[%s302 + $0x7e8] sm:$0xff]
        %v640 = vld [vmem:[%s302 + $0x7f0] sm:$0xff]
        %v641 = vld [vmem:[%s302 + $0x7f8] sm:$0xff]
        %v642 = vld [vmem:[%s311] sm:$0xff]
        %v643 = vld [vmem:[%s311 + $0x8] sm:$0xff]
        %v644 = vld [vmem:[%s311 + $0x10] sm:$0xff]
        %v645 = vld [vmem:[%s311 + $0x18] sm:$0xff]
        %v646 = vld [vmem:[%s311 + $0x20] sm:$0xff]
        %v647 = vld [vmem:[%s311 + $0x28] sm:$0xff]
        %v648 = vld [vmem:[%s311 + $0x30] sm:$0xff]
        %v649 = vld [vmem:[%s311 + $0x38] sm:$0xff]
        %v650 = vld [vmem:[%s311 + $0x40] sm:$0xff]
        %v651 = vld [vmem:[%s311 + $0x48] sm:$0xff]
        %v652 = vld [vmem:[%s311 + $0x50] sm:$0xff]
        %v653 = vld [vmem:[%s311 + $0x58] sm:$0xff]
        %v654 = vld [vmem:[%s311 + $0x60] sm:$0xff]
        %v655 = vld [vmem:[%s311 + $0x68] sm:$0xff]
        %v656 = vld [vmem:[%s311 + $0x70] sm:$0xff]
        %v657 = vld [vmem:[%s311 + $0x78] sm:$0xff]
        %v658 = vld [vmem:[%s311 + $0x80] sm:$0xff]
        %v659 = vld [vmem:[%s311 + $0x88] sm:$0xff]
        %v660 = vld [vmem:[%s311 + $0x90] sm:$0xff]
        %v661 = vld [vmem:[%s311 + $0x98] sm:$0xff]
        %v662 = vld [vmem:[%s311 + $0xa0] sm:$0xff]
        %v663 = vld [vmem:[%s311 + $0xa8] sm:$0xff]
        %v664 = vld [vmem:[%s311 + $0xb0] sm:$0xff]
        %v665 = vld [vmem:[%s311 + $0xb8] sm:$0xff]
        %v666 = vld [vmem:[%s311 + $0xc0] sm:$0xff]
        %v667 = vld [vmem:[%s311 + $0xc8] sm:$0xff]
        %v668 = vld [vmem:[%s311 + $0xd0] sm:$0xff]
        %v669 = vld [vmem:[%s311 + $0xd8] sm:$0xff]
        %v670 = vld [vmem:[%s311 + $0xe0] sm:$0xff]
        %v671 = vld [vmem:[%s311 + $0xe8] sm:$0xff]
        %v672 = vld [vmem:[%s311 + $0xf0] sm:$0xff]
        %v673 = vld [vmem:[%s311 + $0xf8] sm:$0xff]
        %v674 = vld [vmem:[%s311 + $0x100] sm:$0xff]
        %v675 = vld [vmem:[%s311 + $0x108] sm:$0xff]
        %v676 = vld [vmem:[%s311 + $0x110] sm:$0xff]
        %v677 = vld [vmem:[%s311 + $0x118] sm:$0xff]
        %v678 = vld [vmem:[%s311 + $0x120] sm:$0xff]
        %v679 = vld [vmem:[%s311 + $0x128] sm:$0xff]
        %v680 = vld [vmem:[%s311 + $0x130] sm:$0xff]
        %v681 = vld [vmem:[%s311 + $0x138] sm:$0xff]
        %v682 = vld [vmem:[%s311 + $0x140] sm:$0xff]
        %v683 = vld [vmem:[%s311 + $0x148] sm:$0xff]
        %v684 = vld [vmem:[%s311 + $0x150] sm:$0xff]
        %v685 = vld [vmem:[%s311 + $0x158] sm:$0xff]
        %v686 = vld [vmem:[%s311 + $0x160] sm:$0xff]
        %v687 = vld [vmem:[%s311 + $0x168] sm:$0xff]
        %v688 = vld [vmem:[%s311 + $0x170] sm:$0xff]
        %v689 = vld [vmem:[%s311 + $0x178] sm:$0xff]
        %v690 = vld [vmem:[%s311 + $0x180] sm:$0xff]
        %v691 = vld [vmem:[%s311 + $0x188] sm:$0xff]
        %v692 = vld [vmem:[%s311 + $0x190] sm:$0xff]
        %v693 = vld [vmem:[%s311 + $0x198] sm:$0xff]
        %v694 = vld [vmem:[%s311 + $0x1a0] sm:$0xff]
        %v695 = vld [vmem:[%s311 + $0x1a8] sm:$0xff]
        %v696 = vld [vmem:[%s311 + $0x1b0] sm:$0xff]
        %v697 = vld [vmem:[%s311 + $0x1b8] sm:$0xff]
        %v698 = vld [vmem:[%s311 + $0x1c0] sm:$0xff]
        %v699 = vld [vmem:[%s311 + $0x1c8] sm:$0xff]
        %v700 = vld [vmem:[%s311 + $0x1d0] sm:$0xff]
        %v701 = vld [vmem:[%s311 + $0x1d8] sm:$0xff]
        %v702 = vld [vmem:[%s311 + $0x1e0] sm:$0xff]
        %v703 = vld [vmem:[%s311 + $0x1e8] sm:$0xff]
        %v704 = vld [vmem:[%s311 + $0x1f0] sm:$0xff]
        %v705 = vld [vmem:[%s311 + $0x1f8] sm:$0xff]
        %v706 = vld [vmem:[%s311 + $0x200] sm:$0xff]
        %v707 = vld [vmem:[%s311 + $0x208] sm:$0xff]
        %v708 = vld [vmem:[%s311 + $0x210] sm:$0xff]
        %v709 = vld [vmem:[%s311 + $0x218] sm:$0xff]
        %v710 = vld [vmem:[%s311 + $0x220] sm:$0xff]
        %v711 = vld [vmem:[%s311 + $0x228] sm:$0xff]
        %v712 = vld [vmem:[%s311 + $0x230] sm:$0xff]
        %v713 = vld [vmem:[%s311 + $0x238] sm:$0xff]
        %v714 = vld [vmem:[%s311 + $0x240] sm:$0xff]
        %v715 = vld [vmem:[%s311 + $0x248] sm:$0xff]
        %v716 = vld [vmem:[%s311 + $0x250] sm:$0xff]
        %v717 = vld [vmem:[%s311 + $0x258] sm:$0xff]
        %v718 = vld [vmem:[%s311 + $0x260] sm:$0xff]
        %v719 = vld [vmem:[%s311 + $0x268] sm:$0xff]
        %v720 = vld [vmem:[%s311 + $0x270] sm:$0xff]
        %v721 = vld [vmem:[%s311 + $0x278] sm:$0xff]
        %v722 = vld [vmem:[%s311 + $0x280] sm:$0xff]
        %v723 = vld [vmem:[%s311 + $0x288] sm:$0xff]
        %v724 = vld [vmem:[%s311 + $0x290] sm:$0xff]
        %v725 = vld [vmem:[%s311 + $0x298] sm:$0xff]
        %v726 = vld [vmem:[%s311 + $0x2a0] sm:$0xff]
        %v727 = vld [vmem:[%s311 + $0x2a8] sm:$0xff]
        %v728 = vld [vmem:[%s311 + $0x2b0] sm:$0xff]
        %v729 = vld [vmem:[%s311 + $0x2b8] sm:$0xff]
        %v730 = vld [vmem:[%s311 + $0x2c0] sm:$0xff]
        %v731 = vld [vmem:[%s311 + $0x2c8] sm:$0xff]
        %v732 = vld [vmem:[%s311 + $0x2d0] sm:$0xff]
        %v733 = vld [vmem:[%s311 + $0x2d8] sm:$0xff]
        %v734 = vld [vmem:[%s311 + $0x2e0] sm:$0xff]
        %v735 = vld [vmem:[%s311 + $0x2e8] sm:$0xff]
        %v736 = vld [vmem:[%s311 + $0x2f0] sm:$0xff]
        %v737 = vld [vmem:[%s311 + $0x2f8] sm:$0xff]
        %v738 = vld [vmem:[%s311 + $0x300] sm:$0xff]
        %v739 = vld [vmem:[%s311 + $0x308] sm:$0xff]
        %v740 = vld [vmem:[%s311 + $0x310] sm:$0xff]
        %v741 = vld [vmem:[%s311 + $0x318] sm:$0xff]
        %v742 = vld [vmem:[%s311 + $0x320] sm:$0xff]
        %v743 = vld [vmem:[%s311 + $0x328] sm:$0xff]
        %v744 = vld [vmem:[%s311 + $0x330] sm:$0xff]
        %v745 = vld [vmem:[%s311 + $0x338] sm:$0xff]
        %v746 = vld [vmem:[%s311 + $0x340] sm:$0xff]
        %v747 = vld [vmem:[%s311 + $0x348] sm:$0xff]
        %v748 = vld [vmem:[%s311 + $0x350] sm:$0xff]
        %v749 = vld [vmem:[%s311 + $0x358] sm:$0xff]
        %v750 = vld [vmem:[%s311 + $0x360] sm:$0xff]
        %v751 = vld [vmem:[%s311 + $0x368] sm:$0xff]
        %v752 = vld [vmem:[%s311 + $0x370] sm:$0xff]
        %v753 = vld [vmem:[%s311 + $0x378] sm:$0xff]
        %v754 = vld [vmem:[%s311 + $0x380] sm:$0xff]
        %v755 = vld [vmem:[%s311 + $0x388] sm:$0xff]
        %v756 = vld [vmem:[%s311 + $0x390] sm:$0xff]
        %v757 = vld [vmem:[%s311 + $0x398] sm:$0xff]
        %v758 = vld [vmem:[%s311 + $0x3a0] sm:$0xff]
        %v759 = vld [vmem:[%s311 + $0x3a8] sm:$0xff]
        %v760 = vld [vmem:[%s311 + $0x3b0] sm:$0xff]
        %v761 = vld [vmem:[%s311 + $0x3b8] sm:$0xff]
        %v762 = vld [vmem:[%s311 + $0x3c0] sm:$0xff]
        %v763 = vld [vmem:[%s311 + $0x3c8] sm:$0xff]
        %v764 = vld [vmem:[%s311 + $0x3d0] sm:$0xff]
        %v765 = vld [vmem:[%s311 + $0x3d8] sm:$0xff]
        %v766 = vld [vmem:[%s311 + $0x3e0] sm:$0xff]
        %v767 = vld [vmem:[%s311 + $0x3e8] sm:$0xff]
        %v768 = vld [vmem:[%s311 + $0x3f0] sm:$0xff]
        %v769 = vld [vmem:[%s311 + $0x3f8] sm:$0xff]
        %v770 = vld [vmem:[%s311 + $0x400] sm:$0xff]
        %v771 = vld [vmem:[%s311 + $0x408] sm:$0xff]
        %v772 = vld [vmem:[%s311 + $0x410] sm:$0xff]
        %v773 = vld [vmem:[%s311 + $0x418] sm:$0xff]
        %v774 = vld [vmem:[%s311 + $0x420] sm:$0xff]
        %v775 = vld [vmem:[%s311 + $0x428] sm:$0xff]
        %v776 = vld [vmem:[%s311 + $0x430] sm:$0xff]
        %v777 = vld [vmem:[%s311 + $0x438] sm:$0xff]
        %v778 = vld [vmem:[%s311 + $0x440] sm:$0xff]
        %v779 = vld [vmem:[%s311 + $0x448] sm:$0xff]
        %v780 = vld [vmem:[%s311 + $0x450] sm:$0xff]
        %v781 = vld [vmem:[%s311 + $0x458] sm:$0xff]
        %v782 = vld [vmem:[%s311 + $0x460] sm:$0xff]
        %v783 = vld [vmem:[%s311 + $0x468] sm:$0xff]
        %v784 = vld [vmem:[%s311 + $0x470] sm:$0xff]
        %v785 = vld [vmem:[%s311 + $0x478] sm:$0xff]
        %v786 = vld [vmem:[%s311 + $0x480] sm:$0xff]
        %v787 = vld [vmem:[%s311 + $0x488] sm:$0xff]
        %v788 = vld [vmem:[%s311 + $0x490] sm:$0xff]
        %v789 = vld [vmem:[%s311 + $0x498] sm:$0xff]
        %v790 = vld [vmem:[%s311 + $0x4a0] sm:$0xff]
        %v791 = vld [vmem:[%s311 + $0x4a8] sm:$0xff]
        %v792 = vld [vmem:[%s311 + $0x4b0] sm:$0xff]
        %v793 = vld [vmem:[%s311 + $0x4b8] sm:$0xff]
        %v794 = vld [vmem:[%s311 + $0x4c0] sm:$0xff]
        %v795 = vld [vmem:[%s311 + $0x4c8] sm:$0xff]
        %v796 = vld [vmem:[%s311 + $0x4d0] sm:$0xff]
        %v797 = vld [vmem:[%s311 + $0x4d8] sm:$0xff]
        %v798 = vld [vmem:[%s311 + $0x4e0] sm:$0xff]
        %v799 = vld [vmem:[%s311 + $0x4e8] sm:$0xff]
        %v800 = vld [vmem:[%s311 + $0x4f0] sm:$0xff]
        %v801 = vld [vmem:[%s311 + $0x4f8] sm:$0xff]
        %v802 = vld [vmem:[%s311 + $0x500] sm:$0xff]
        %v803 = vld [vmem:[%s311 + $0x508] sm:$0xff]
        %v804 = vld [vmem:[%s311 + $0x510] sm:$0xff]
        %v805 = vld [vmem:[%s311 + $0x518] sm:$0xff]
        %v806 = vld [vmem:[%s311 + $0x520] sm:$0xff]
        %v807 = vld [vmem:[%s311 + $0x528] sm:$0xff]
        %v808 = vld [vmem:[%s311 + $0x530] sm:$0xff]
        %v809 = vld [vmem:[%s311 + $0x538] sm:$0xff]
        %v810 = vld [vmem:[%s311 + $0x540] sm:$0xff]
        %v811 = vld [vmem:[%s311 + $0x548] sm:$0xff]
        %v812 = vld [vmem:[%s311 + $0x550] sm:$0xff]
        %v813 = vld [vmem:[%s311 + $0x558] sm:$0xff]
        %v814 = vld [vmem:[%s311 + $0x560] sm:$0xff]
        %v815 = vld [vmem:[%s311 + $0x568] sm:$0xff]
        %v816 = vld [vmem:[%s311 + $0x570] sm:$0xff]
        %v817 = vld [vmem:[%s311 + $0x578] sm:$0xff]
        %v818 = vld [vmem:[%s311 + $0x580] sm:$0xff]
        %v819 = vld [vmem:[%s311 + $0x588] sm:$0xff]
        %v820 = vld [vmem:[%s311 + $0x590] sm:$0xff]
        %v821 = vld [vmem:[%s311 + $0x598] sm:$0xff]
        %v822 = vld [vmem:[%s311 + $0x5a0] sm:$0xff]
        %v823 = vld [vmem:[%s311 + $0x5a8] sm:$0xff]
        %v824 = vld [vmem:[%s311 + $0x5b0] sm:$0xff]
        %v825 = vld [vmem:[%s311 + $0x5b8] sm:$0xff]
        %v826 = vld [vmem:[%s311 + $0x5c0] sm:$0xff]
        %v827 = vld [vmem:[%s311 + $0x5c8] sm:$0xff]
        %v828 = vld [vmem:[%s311 + $0x5d0] sm:$0xff]
        %v829 = vld [vmem:[%s311 + $0x5d8] sm:$0xff]
        %v830 = vld [vmem:[%s311 + $0x5e0] sm:$0xff]
        %v831 = vld [vmem:[%s311 + $0x5e8] sm:$0xff]
        %v832 = vld [vmem:[%s311 + $0x5f0] sm:$0xff]
        %v833 = vld [vmem:[%s311 + $0x5f8] sm:$0xff]
        %v834 = vld [vmem:[%s311 + $0x600] sm:$0xff]
        %v835 = vld [vmem:[%s311 + $0x608] sm:$0xff]
        %v836 = vld [vmem:[%s311 + $0x610] sm:$0xff]
        %v837 = vld [vmem:[%s311 + $0x618] sm:$0xff]
        %v838 = vld [vmem:[%s311 + $0x620] sm:$0xff]
        %v839 = vld [vmem:[%s311 + $0x628] sm:$0xff]
        %v840 = vld [vmem:[%s311 + $0x630] sm:$0xff]
        %v841 = vld [vmem:[%s311 + $0x638] sm:$0xff]
        %v842 = vld [vmem:[%s311 + $0x640] sm:$0xff]
        %v843 = vld [vmem:[%s311 + $0x648] sm:$0xff]
        %v844 = vld [vmem:[%s311 + $0x650] sm:$0xff]
        %v845 = vld [vmem:[%s311 + $0x658] sm:$0xff]
        %v846 = vld [vmem:[%s311 + $0x660] sm:$0xff]
        %v847 = vld [vmem:[%s311 + $0x668] sm:$0xff]
        %v848 = vld [vmem:[%s311 + $0x670] sm:$0xff]
        %v849 = vld [vmem:[%s311 + $0x678] sm:$0xff]
        %v850 = vld [vmem:[%s311 + $0x680] sm:$0xff]
        %v851 = vld [vmem:[%s311 + $0x688] sm:$0xff]
        %v852 = vld [vmem:[%s311 + $0x690] sm:$0xff]
        %v853 = vld [vmem:[%s311 + $0x698] sm:$0xff]
        %v854 = vld [vmem:[%s311 + $0x6a0] sm:$0xff]
        %v855 = vld [vmem:[%s311 + $0x6a8] sm:$0xff]
        %v856 = vld [vmem:[%s311 + $0x6b0] sm:$0xff]
        %v857 = vld [vmem:[%s311 + $0x6b8] sm:$0xff]
        %v858 = vld [vmem:[%s311 + $0x6c0] sm:$0xff]
        %v859 = vld [vmem:[%s311 + $0x6c8] sm:$0xff]
        %v860 = vld [vmem:[%s311 + $0x6d0] sm:$0xff]
        %v861 = vld [vmem:[%s311 + $0x6d8] sm:$0xff]
        %v862 = vld [vmem:[%s311 + $0x6e0] sm:$0xff]
        %v863 = vld [vmem:[%s311 + $0x6e8] sm:$0xff]
        %v864 = vld [vmem:[%s311 + $0x6f0] sm:$0xff]
        %v865 = vld [vmem:[%s311 + $0x6f8] sm:$0xff]
        %v866 = vld [vmem:[%s311 + $0x700] sm:$0xff]
        %v867 = vld [vmem:[%s311 + $0x708] sm:$0xff]
        %v868 = vld [vmem:[%s311 + $0x710] sm:$0xff]
        %v869 = vld [vmem:[%s311 + $0x718] sm:$0xff]
        %v870 = vld [vmem:[%s311 + $0x720] sm:$0xff]
        %v871 = vld [vmem:[%s311 + $0x728] sm:$0xff]
        %v872 = vld [vmem:[%s311 + $0x730] sm:$0xff]
        %v873 = vld [vmem:[%s311 + $0x738] sm:$0xff]
        %v874 = vld [vmem:[%s311 + $0x740] sm:$0xff]
        %v875 = vld [vmem:[%s311 + $0x748] sm:$0xff]
        %v876 = vld [vmem:[%s311 + $0x750] sm:$0xff]
        %v877 = vld [vmem:[%s311 + $0x758] sm:$0xff]
        %v878 = vld [vmem:[%s311 + $0x760] sm:$0xff]
        %v879 = vld [vmem:[%s311 + $0x768] sm:$0xff]
        %v880 = vld [vmem:[%s311 + $0x770] sm:$0xff]
        %v881 = vld [vmem:[%s311 + $0x778] sm:$0xff]
        %v882 = vld [vmem:[%s311 + $0x780] sm:$0xff]
        %v883 = vld [vmem:[%s311 + $0x788] sm:$0xff]
        %v884 = vld [vmem:[%s311 + $0x790] sm:$0xff]
        %v885 = vld [vmem:[%s311 + $0x798] sm:$0xff]
        %v886 = vld [vmem:[%s311 + $0x7a0] sm:$0xff]
        %v887 = vld [vmem:[%s311 + $0x7a8] sm:$0xff]
        %v888 = vld [vmem:[%s311 + $0x7b0] sm:$0xff]
        %v889 = vld [vmem:[%s311 + $0x7b8] sm:$0xff]
        %v890 = vld [vmem:[%s311 + $0x7c0] sm:$0xff]
        %v891 = vld [vmem:[%s311 + $0x7c8] sm:$0xff]
        %v892 = vld [vmem:[%s311 + $0x7d0] sm:$0xff]
        %v893 = vld [vmem:[%s311 + $0x7d8] sm:$0xff]
        %v894 = vld [vmem:[%s311 + $0x7e0] sm:$0xff]
        %v895 = vld [vmem:[%s311 + $0x7e8] sm:$0xff]
        %v896 = vld [vmem:[%s311 + $0x7f0] sm:$0xff]
        %v897 = vld [vmem:[%s311 + $0x7f8] sm:$0xff]
        %v898 = vld [vmem:[%s320] sm:$0xff]
        %v899 = vld [vmem:[%s320 + $0x8] sm:$0xff]
        %v900 = vld [vmem:[%s320 + $0x10] sm:$0xff]
        %v901 = vld [vmem:[%s320 + $0x18] sm:$0xff]
        %v902 = vld [vmem:[%s320 + $0x20] sm:$0xff]
        %v903 = vld [vmem:[%s320 + $0x28] sm:$0xff]
        %v904 = vld [vmem:[%s320 + $0x30] sm:$0xff]
        %v905 = vld [vmem:[%s320 + $0x38] sm:$0xff]
        %v906 = vld [vmem:[%s320 + $0x40] sm:$0xff]
        %v907 = vld [vmem:[%s320 + $0x48] sm:$0xff]
        %v908 = vld [vmem:[%s320 + $0x50] sm:$0xff]
        %v909 = vld [vmem:[%s320 + $0x58] sm:$0xff]
        %v910 = vld [vmem:[%s320 + $0x60] sm:$0xff]
        %v911 = vld [vmem:[%s320 + $0x68] sm:$0xff]
        %v912 = vld [vmem:[%s320 + $0x70] sm:$0xff]
        %v913 = vld [vmem:[%s320 + $0x78] sm:$0xff]
        %v914 = vld [vmem:[%s320 + $0x80] sm:$0xff]
        %v915 = vld [vmem:[%s320 + $0x88] sm:$0xff]
        %v916 = vld [vmem:[%s320 + $0x90] sm:$0xff]
        %v917 = vld [vmem:[%s320 + $0x98] sm:$0xff]
        %v918 = vld [vmem:[%s320 + $0xa0] sm:$0xff]
        %v919 = vld [vmem:[%s320 + $0xa8] sm:$0xff]
        %v920 = vld [vmem:[%s320 + $0xb0] sm:$0xff]
        %v921 = vld [vmem:[%s320 + $0xb8] sm:$0xff]
        %v922 = vld [vmem:[%s320 + $0xc0] sm:$0xff]
        %v923 = vld [vmem:[%s320 + $0xc8] sm:$0xff]
        %v924 = vld [vmem:[%s320 + $0xd0] sm:$0xff]
        %v925 = vld [vmem:[%s320 + $0xd8] sm:$0xff]
        %v926 = vld [vmem:[%s320 + $0xe0] sm:$0xff]
        %v927 = vld [vmem:[%s320 + $0xe8] sm:$0xff]
        %v928 = vld [vmem:[%s320 + $0xf0] sm:$0xff]
        %v929 = vld [vmem:[%s320 + $0xf8] sm:$0xff]
        %v930 = vld [vmem:[%s320 + $0x100] sm:$0xff]
        %v931 = vld [vmem:[%s320 + $0x108] sm:$0xff]
        %v932 = vld [vmem:[%s320 + $0x110] sm:$0xff]
        %v933 = vld [vmem:[%s320 + $0x118] sm:$0xff]
        %v934 = vld [vmem:[%s320 + $0x120] sm:$0xff]
        %v935 = vld [vmem:[%s320 + $0x128] sm:$0xff]
        %v936 = vld [vmem:[%s320 + $0x130] sm:$0xff]
        %v937 = vld [vmem:[%s320 + $0x138] sm:$0xff]
        %v938 = vld [vmem:[%s320 + $0x140] sm:$0xff]
        %v939 = vld [vmem:[%s320 + $0x148] sm:$0xff]
        %v940 = vld [vmem:[%s320 + $0x150] sm:$0xff]
        %v941 = vld [vmem:[%s320 + $0x158] sm:$0xff]
        %v942 = vld [vmem:[%s320 + $0x160] sm:$0xff]
        %v943 = vld [vmem:[%s320 + $0x168] sm:$0xff]
        %v944 = vld [vmem:[%s320 + $0x170] sm:$0xff]
        %v945 = vld [vmem:[%s320 + $0x178] sm:$0xff]
        %v946 = vld [vmem:[%s320 + $0x180] sm:$0xff]
        %v947 = vld [vmem:[%s320 + $0x188] sm:$0xff]
        %v948 = vld [vmem:[%s320 + $0x190] sm:$0xff]
        %v949 = vld [vmem:[%s320 + $0x198] sm:$0xff]
        %v950 = vld [vmem:[%s320 + $0x1a0] sm:$0xff]
        %v951 = vld [vmem:[%s320 + $0x1a8] sm:$0xff]
        %v952 = vld [vmem:[%s320 + $0x1b0] sm:$0xff]
        %v953 = vld [vmem:[%s320 + $0x1b8] sm:$0xff]
        %v954 = vld [vmem:[%s320 + $0x1c0] sm:$0xff]
        %v955 = vld [vmem:[%s320 + $0x1c8] sm:$0xff]
        %v956 = vld [vmem:[%s320 + $0x1d0] sm:$0xff]
        %v957 = vld [vmem:[%s320 + $0x1d8] sm:$0xff]
        %v958 = vld [vmem:[%s320 + $0x1e0] sm:$0xff]
        %v959 = vld [vmem:[%s320 + $0x1e8] sm:$0xff]
        %v960 = vld [vmem:[%s320 + $0x1f0] sm:$0xff]
        %v961 = vld [vmem:[%s320 + $0x1f8] sm:$0xff]
        %v962 = vld [vmem:[%s320 + $0x200] sm:$0xff]
        %v963 = vld [vmem:[%s320 + $0x208] sm:$0xff]
        %v964 = vld [vmem:[%s320 + $0x210] sm:$0xff]
        %v965 = vld [vmem:[%s320 + $0x218] sm:$0xff]
        %v966 = vld [vmem:[%s320 + $0x220] sm:$0xff]
        %v967 = vld [vmem:[%s320 + $0x228] sm:$0xff]
        %v968 = vld [vmem:[%s320 + $0x230] sm:$0xff]
        %v969 = vld [vmem:[%s320 + $0x238] sm:$0xff]
        %v970 = vld [vmem:[%s320 + $0x240] sm:$0xff]
        %v971 = vld [vmem:[%s320 + $0x248] sm:$0xff]
        %v972 = vld [vmem:[%s320 + $0x250] sm:$0xff]
        %v973 = vld [vmem:[%s320 + $0x258] sm:$0xff]
        %v974 = vld [vmem:[%s320 + $0x260] sm:$0xff]
        %v975 = vld [vmem:[%s320 + $0x268] sm:$0xff]
        %v976 = vld [vmem:[%s320 + $0x270] sm:$0xff]
        %v977 = vld [vmem:[%s320 + $0x278] sm:$0xff]
        %v978 = vld [vmem:[%s320 + $0x280] sm:$0xff]
        %v979 = vld [vmem:[%s320 + $0x288] sm:$0xff]
        %v980 = vld [vmem:[%s320 + $0x290] sm:$0xff]
        %v981 = vld [vmem:[%s320 + $0x298] sm:$0xff]
        %v982 = vld [vmem:[%s320 + $0x2a0] sm:$0xff]
        %v983 = vld [vmem:[%s320 + $0x2a8] sm:$0xff]
        %v984 = vld [vmem:[%s320 + $0x2b0] sm:$0xff]
        %v985 = vld [vmem:[%s320 + $0x2b8] sm:$0xff]
        %v986 = vld [vmem:[%s320 + $0x2c0] sm:$0xff]
        %v987 = vld [vmem:[%s320 + $0x2c8] sm:$0xff]
        %v988 = vld [vmem:[%s320 + $0x2d0] sm:$0xff]
        %v989 = vld [vmem:[%s320 + $0x2d8] sm:$0xff]
        %v990 = vld [vmem:[%s320 + $0x2e0] sm:$0xff]
        %v991 = vld [vmem:[%s320 + $0x2e8] sm:$0xff]
        %v992 = vld [vmem:[%s320 + $0x2f0] sm:$0xff]
        %v993 = vld [vmem:[%s320 + $0x2f8] sm:$0xff]
        %v994 = vld [vmem:[%s320 + $0x300] sm:$0xff]
        %v995 = vld [vmem:[%s320 + $0x308] sm:$0xff]
        %v996 = vld [vmem:[%s320 + $0x310] sm:$0xff]
        %v997 = vld [vmem:[%s320 + $0x318] sm:$0xff]
        %v998 = vld [vmem:[%s320 + $0x320] sm:$0xff]
        %v999 = vld [vmem:[%s320 + $0x328] sm:$0xff]
        %v1000 = vld [vmem:[%s320 + $0x330] sm:$0xff]
        %v1001 = vld [vmem:[%s320 + $0x338] sm:$0xff]
        %v1002 = vld [vmem:[%s320 + $0x340] sm:$0xff]
        %v1003 = vld [vmem:[%s320 + $0x348] sm:$0xff]
        %v1004 = vld [vmem:[%s320 + $0x350] sm:$0xff]
        %v1005 = vld [vmem:[%s320 + $0x358] sm:$0xff]
        %v1006 = vld [vmem:[%s320 + $0x360] sm:$0xff]
        %v1007 = vld [vmem:[%s320 + $0x368] sm:$0xff]
        %v1008 = vld [vmem:[%s320 + $0x370] sm:$0xff]
        %v1009 = vld [vmem:[%s320 + $0x378] sm:$0xff]
        %v1010 = vld [vmem:[%s320 + $0x380] sm:$0xff]
        %v1011 = vld [vmem:[%s320 + $0x388] sm:$0xff]
        %v1012 = vld [vmem:[%s320 + $0x390] sm:$0xff]
        %v1013 = vld [vmem:[%s320 + $0x398] sm:$0xff]
        %v1014 = vld [vmem:[%s320 + $0x3a0] sm:$0xff]
        %v1015 = vld [vmem:[%s320 + $0x3a8] sm:$0xff]
        %v1016 = vld [vmem:[%s320 + $0x3b0] sm:$0xff]
        %v1017 = vld [vmem:[%s320 + $0x3b8] sm:$0xff]
        %v1018 = vld [vmem:[%s320 + $0x3c0] sm:$0xff]
        %v1019 = vld [vmem:[%s320 + $0x3c8] sm:$0xff]
        %v1020 = vld [vmem:[%s320 + $0x3d0] sm:$0xff]
        %v1021 = vld [vmem:[%s320 + $0x3d8] sm:$0xff]
        %v1022 = vld [vmem:[%s320 + $0x3e0] sm:$0xff]
        %v1023 = vld [vmem:[%s320 + $0x3e8] sm:$0xff]
        %v1024 = vld [vmem:[%s320 + $0x3f0] sm:$0xff]
        %v1025 = vld [vmem:[%s320 + $0x3f8] sm:$0xff]
        %v1026 = vld [vmem:[%s320 + $0x400] sm:$0xff]
        %v1027 = vld [vmem:[%s320 + $0x408] sm:$0xff]
        %v1028 = vld [vmem:[%s320 + $0x410] sm:$0xff]
        %v1029 = vld [vmem:[%s320 + $0x418] sm:$0xff]
        %v1030 = vld [vmem:[%s320 + $0x420] sm:$0xff]
        %v1031 = vld [vmem:[%s320 + $0x428] sm:$0xff]
        %v1032 = vld [vmem:[%s320 + $0x430] sm:$0xff]
        %v1033 = vld [vmem:[%s320 + $0x438] sm:$0xff]
        %v1034 = vld [vmem:[%s320 + $0x440] sm:$0xff]
        %v1035 = vld [vmem:[%s320 + $0x448] sm:$0xff]
        %v1036 = vld [vmem:[%s320 + $0x450] sm:$0xff]
        %v1037 = vld [vmem:[%s320 + $0x458] sm:$0xff]
        %v1038 = vld [vmem:[%s320 + $0x460] sm:$0xff]
        %v1039 = vld [vmem:[%s320 + $0x468] sm:$0xff]
        %v1040 = vld [vmem:[%s320 + $0x470] sm:$0xff]
        %v1041 = vld [vmem:[%s320 + $0x478] sm:$0xff]
        %v1042 = vld [vmem:[%s320 + $0x480] sm:$0xff]
        %v1043 = vld [vmem:[%s320 + $0x488] sm:$0xff]
        %v1044 = vld [vmem:[%s320 + $0x490] sm:$0xff]
        %v1045 = vld [vmem:[%s320 + $0x498] sm:$0xff]
        %v1046 = vld [vmem:[%s320 + $0x4a0] sm:$0xff]
        %v1047 = vld [vmem:[%s320 + $0x4a8] sm:$0xff]
        %v1048 = vld [vmem:[%s320 + $0x4b0] sm:$0xff]
        %v1049 = vld [vmem:[%s320 + $0x4b8] sm:$0xff]
        %v1050 = vld [vmem:[%s320 + $0x4c0] sm:$0xff]
        %v1051 = vld [vmem:[%s320 + $0x4c8] sm:$0xff]
        %v1052 = vld [vmem:[%s320 + $0x4d0] sm:$0xff]
        %v1053 = vld [vmem:[%s320 + $0x4d8] sm:$0xff]
        %v1054 = vld [vmem:[%s320 + $0x4e0] sm:$0xff]
        %v1055 = vld [vmem:[%s320 + $0x4e8] sm:$0xff]
        %v1056 = vld [vmem:[%s320 + $0x4f0] sm:$0xff]
        %v1057 = vld [vmem:[%s320 + $0x4f8] sm:$0xff]
        %v1058 = vld [vmem:[%s320 + $0x500] sm:$0xff]
        %v1059 = vld [vmem:[%s320 + $0x508] sm:$0xff]
        %v1060 = vld [vmem:[%s320 + $0x510] sm:$0xff]
        %v1061 = vld [vmem:[%s320 + $0x518] sm:$0xff]
        %v1062 = vld [vmem:[%s320 + $0x520] sm:$0xff]
        %v1063 = vld [vmem:[%s320 + $0x528] sm:$0xff]
        %v1064 = vld [vmem:[%s320 + $0x530] sm:$0xff]
        %v1065 = vld [vmem:[%s320 + $0x538] sm:$0xff]
        %v1066 = vld [vmem:[%s320 + $0x540] sm:$0xff]
        %v1067 = vld [vmem:[%s320 + $0x548] sm:$0xff]
        %v1068 = vld [vmem:[%s320 + $0x550] sm:$0xff]
        %v1069 = vld [vmem:[%s320 + $0x558] sm:$0xff]
        %v1070 = vld [vmem:[%s320 + $0x560] sm:$0xff]
        %v1071 = vld [vmem:[%s320 + $0x568] sm:$0xff]
        %v1072 = vld [vmem:[%s320 + $0x570] sm:$0xff]
        %v1073 = vld [vmem:[%s320 + $0x578] sm:$0xff]
        %v1074 = vld [vmem:[%s320 + $0x580] sm:$0xff]
        %v1075 = vld [vmem:[%s320 + $0x588] sm:$0xff]
        %v1076 = vld [vmem:[%s320 + $0x590] sm:$0xff]
        %v1077 = vld [vmem:[%s320 + $0x598] sm:$0xff]
        %v1078 = vld [vmem:[%s320 + $0x5a0] sm:$0xff]
        %v1079 = vld [vmem:[%s320 + $0x5a8] sm:$0xff]
        %v1080 = vld [vmem:[%s320 + $0x5b0] sm:$0xff]
        %v1081 = vld [vmem:[%s320 + $0x5b8] sm:$0xff]
        %v1082 = vld [vmem:[%s320 + $0x5c0] sm:$0xff]
        %v1083 = vld [vmem:[%s320 + $0x5c8] sm:$0xff]
        %v1084 = vld [vmem:[%s320 + $0x5d0] sm:$0xff]
        %v1085 = vld [vmem:[%s320 + $0x5d8] sm:$0xff]
        %v1086 = vld [vmem:[%s320 + $0x5e0] sm:$0xff]
        %v1087 = vld [vmem:[%s320 + $0x5e8] sm:$0xff]
        %v1088 = vld [vmem:[%s320 + $0x5f0] sm:$0xff]
        %v1089 = vld [vmem:[%s320 + $0x5f8] sm:$0xff]
        %v1090 = vld [vmem:[%s320 + $0x600] sm:$0xff]
        %v1091 = vld [vmem:[%s320 + $0x608] sm:$0xff]
        %v1092 = vld [vmem:[%s320 + $0x610] sm:$0xff]
        %v1093 = vld [vmem:[%s320 + $0x618] sm:$0xff]
        %v1094 = vld [vmem:[%s320 + $0x620] sm:$0xff]
        %v1095 = vld [vmem:[%s320 + $0x628] sm:$0xff]
        %v1096 = vld [vmem:[%s320 + $0x630] sm:$0xff]
        %v1097 = vld [vmem:[%s320 + $0x638] sm:$0xff]
        %v1098 = vld [vmem:[%s320 + $0x640] sm:$0xff]
        %v1099 = vld [vmem:[%s320 + $0x648] sm:$0xff]
        %v1100 = vld [vmem:[%s320 + $0x650] sm:$0xff]
        %v1101 = vld [vmem:[%s320 + $0x658] sm:$0xff]
        %v1102 = vld [vmem:[%s320 + $0x660] sm:$0xff]
        %v1103 = vld [vmem:[%s320 + $0x668] sm:$0xff]
        %v1104 = vld [vmem:[%s320 + $0x670] sm:$0xff]
        %v1105 = vld [vmem:[%s320 + $0x678] sm:$0xff]
        %v1106 = vld [vmem:[%s320 + $0x680] sm:$0xff]
        %v1107 = vld [vmem:[%s320 + $0x688] sm:$0xff]
        %v1108 = vld [vmem:[%s320 + $0x690] sm:$0xff]
        %v1109 = vld [vmem:[%s320 + $0x698] sm:$0xff]
        %v1110 = vld [vmem:[%s320 + $0x6a0] sm:$0xff]
        %v1111 = vld [vmem:[%s320 + $0x6a8] sm:$0xff]
        %v1112 = vld [vmem:[%s320 + $0x6b0] sm:$0xff]
        %v1113 = vld [vmem:[%s320 + $0x6b8] sm:$0xff]
        %v1114 = vld [vmem:[%s320 + $0x6c0] sm:$0xff]
        %v1115 = vld [vmem:[%s320 + $0x6c8] sm:$0xff]
        %v1116 = vld [vmem:[%s320 + $0x6d0] sm:$0xff]
        %v1117 = vld [vmem:[%s320 + $0x6d8] sm:$0xff]
        %v1118 = vld [vmem:[%s320 + $0x6e0] sm:$0xff]
        %v1119 = vld [vmem:[%s320 + $0x6e8] sm:$0xff]
        %v1120 = vld [vmem:[%s320 + $0x6f0] sm:$0xff]
        %v1121 = vld [vmem:[%s320 + $0x6f8] sm:$0xff]
        %v1122 = vld [vmem:[%s320 + $0x700] sm:$0xff]
        %v1123 = vld [vmem:[%s320 + $0x708] sm:$0xff]
        %v1124 = vld [vmem:[%s320 + $0x710] sm:$0xff]
        %v1125 = vld [vmem:[%s320 + $0x718] sm:$0xff]
        %v1126 = vld [vmem:[%s320 + $0x720] sm:$0xff]
        %v1127 = vld [vmem:[%s320 + $0x728] sm:$0xff]
        %v1128 = vld [vmem:[%s320 + $0x730] sm:$0xff]
        %v1129 = vld [vmem:[%s320 + $0x738] sm:$0xff]
        %v1130 = vld [vmem:[%s320 + $0x740] sm:$0xff]
        %v1131 = vld [vmem:[%s320 + $0x748] sm:$0xff]
        %v1132 = vld [vmem:[%s320 + $0x750] sm:$0xff]
        %v1133 = vld [vmem:[%s320 + $0x758] sm:$0xff]
        %v1134 = vld [vmem:[%s320 + $0x760] sm:$0xff]
        %v1135 = vld [vmem:[%s320 + $0x768] sm:$0xff]
        %v1136 = vld [vmem:[%s320 + $0x770] sm:$0xff]
        %v1137 = vld [vmem:[%s320 + $0x778] sm:$0xff]
        %v1138 = vld [vmem:[%s320 + $0x780] sm:$0xff]
        %v1139 = vld [vmem:[%s320 + $0x788] sm:$0xff]
        %v1140 = vld [vmem:[%s320 + $0x790] sm:$0xff]
        %v1141 = vld [vmem:[%s320 + $0x798] sm:$0xff]
        %v1142 = vld [vmem:[%s320 + $0x7a0] sm:$0xff]
        %v1143 = vld [vmem:[%s320 + $0x7a8] sm:$0xff]
        %v1144 = vld [vmem:[%s320 + $0x7b0] sm:$0xff]
        %v1145 = vld [vmem:[%s320 + $0x7b8] sm:$0xff]
        %v1146 = vld [vmem:[%s320 + $0x7c0] sm:$0xff]
        %v1147 = vld [vmem:[%s320 + $0x7c8] sm:$0xff]
        %v1148 = vld [vmem:[%s320 + $0x7d0] sm:$0xff]
        %v1149 = vld [vmem:[%s320 + $0x7d8] sm:$0xff]
        %v1150 = vld [vmem:[%s320 + $0x7e0] sm:$0xff]
        %v1151 = vld [vmem:[%s320 + $0x7e8] sm:$0xff]
        %v1152 = vld [vmem:[%s320 + $0x7f0] sm:$0xff]
        %v1153 = vld [vmem:[%s320 + $0x7f8] sm:$0xff]
        %v1154 = vld [vmem:[%s329] sm:$0xff]
        %v1155 = vld [vmem:[%s329 + $0x8] sm:$0xff]
        %v1156 = vld [vmem:[%s329 + $0x10] sm:$0xff]
        %v1157 = vld [vmem:[%s329 + $0x18] sm:$0xff]
        %v1158 = vld [vmem:[%s329 + $0x20] sm:$0xff]
        %v1159 = vld [vmem:[%s329 + $0x28] sm:$0xff]
        %v1160 = vld [vmem:[%s329 + $0x30] sm:$0xff]
        %v1161 = vld [vmem:[%s329 + $0x38] sm:$0xff]
        %v1162 = vld [vmem:[%s329 + $0x40] sm:$0xff]
        %v1163 = vld [vmem:[%s329 + $0x48] sm:$0xff]
        %v1164 = vld [vmem:[%s329 + $0x50] sm:$0xff]
        %v1165 = vld [vmem:[%s329 + $0x58] sm:$0xff]
        %v1166 = vld [vmem:[%s329 + $0x60] sm:$0xff]
        %v1167 = vld [vmem:[%s329 + $0x68] sm:$0xff]
        %v1168 = vld [vmem:[%s329 + $0x70] sm:$0xff]
        %v1169 = vld [vmem:[%s329 + $0x78] sm:$0xff]
        %v1170 = vld [vmem:[%s329 + $0x80] sm:$0xff]
        %v1171 = vld [vmem:[%s329 + $0x88] sm:$0xff]
        %v1172 = vld [vmem:[%s329 + $0x90] sm:$0xff]
        %v1173 = vld [vmem:[%s329 + $0x98] sm:$0xff]
        %v1174 = vld [vmem:[%s329 + $0xa0] sm:$0xff]
        %v1175 = vld [vmem:[%s329 + $0xa8] sm:$0xff]
        %v1176 = vld [vmem:[%s329 + $0xb0] sm:$0xff]
        %v1177 = vld [vmem:[%s329 + $0xb8] sm:$0xff]
        %v1178 = vld [vmem:[%s329 + $0xc0] sm:$0xff]
        %v1179 = vld [vmem:[%s329 + $0xc8] sm:$0xff]
        %v1180 = vld [vmem:[%s329 + $0xd0] sm:$0xff]
        %v1181 = vld [vmem:[%s329 + $0xd8] sm:$0xff]
        %v1182 = vld [vmem:[%s329 + $0xe0] sm:$0xff]
        %v1183 = vld [vmem:[%s329 + $0xe8] sm:$0xff]
        %v1184 = vld [vmem:[%s329 + $0xf0] sm:$0xff]
        %v1185 = vld [vmem:[%s329 + $0xf8] sm:$0xff]
        %v1186 = vld [vmem:[%s329 + $0x100] sm:$0xff]
        %v1187 = vld [vmem:[%s329 + $0x108] sm:$0xff]
        %v1188 = vld [vmem:[%s329 + $0x110] sm:$0xff]
        %v1189 = vld [vmem:[%s329 + $0x118] sm:$0xff]
        %v1190 = vld [vmem:[%s329 + $0x120] sm:$0xff]
        %v1191 = vld [vmem:[%s329 + $0x128] sm:$0xff]
        %v1192 = vld [vmem:[%s329 + $0x130] sm:$0xff]
        %v1193 = vld [vmem:[%s329 + $0x138] sm:$0xff]
        %v1194 = vld [vmem:[%s329 + $0x140] sm:$0xff]
        %v1195 = vld [vmem:[%s329 + $0x148] sm:$0xff]
        %v1196 = vld [vmem:[%s329 + $0x150] sm:$0xff]
        %v1197 = vld [vmem:[%s329 + $0x158] sm:$0xff]
        %v1198 = vld [vmem:[%s329 + $0x160] sm:$0xff]
        %v1199 = vld [vmem:[%s329 + $0x168] sm:$0xff]
        %v1200 = vld [vmem:[%s329 + $0x170] sm:$0xff]
        %v1201 = vld [vmem:[%s329 + $0x178] sm:$0xff]
        %v1202 = vld [vmem:[%s329 + $0x180] sm:$0xff]
        %v1203 = vld [vmem:[%s329 + $0x188] sm:$0xff]
        %v1204 = vld [vmem:[%s329 + $0x190] sm:$0xff]
        %v1205 = vld [vmem:[%s329 + $0x198] sm:$0xff]
        %v1206 = vld [vmem:[%s329 + $0x1a0] sm:$0xff]
        %v1207 = vld [vmem:[%s329 + $0x1a8] sm:$0xff]
        %v1208 = vld [vmem:[%s329 + $0x1b0] sm:$0xff]
        %v1209 = vld [vmem:[%s329 + $0x1b8] sm:$0xff]
        %v1210 = vld [vmem:[%s329 + $0x1c0] sm:$0xff]
        %v1211 = vld [vmem:[%s329 + $0x1c8] sm:$0xff]
        %v1212 = vld [vmem:[%s329 + $0x1d0] sm:$0xff]
        %v1213 = vld [vmem:[%s329 + $0x1d8] sm:$0xff]
        %v1214 = vld [vmem:[%s329 + $0x1e0] sm:$0xff]
        %v1215 = vld [vmem:[%s329 + $0x1e8] sm:$0xff]
        %v1216 = vld [vmem:[%s329 + $0x1f0] sm:$0xff]
        %v1217 = vld [vmem:[%s329 + $0x1f8] sm:$0xff]
        %v1218 = vld [vmem:[%s329 + $0x200] sm:$0xff]
        %v1219 = vld [vmem:[%s329 + $0x208] sm:$0xff]
        %v1220 = vld [vmem:[%s329 + $0x210] sm:$0xff]
        %v1221 = vld [vmem:[%s329 + $0x218] sm:$0xff]
        %v1222 = vld [vmem:[%s329 + $0x220] sm:$0xff]
        %v1223 = vld [vmem:[%s329 + $0x228] sm:$0xff]
        %v1224 = vld [vmem:[%s329 + $0x230] sm:$0xff]
        %v1225 = vld [vmem:[%s329 + $0x238] sm:$0xff]
        %v1226 = vld [vmem:[%s329 + $0x240] sm:$0xff]
        %v1227 = vld [vmem:[%s329 + $0x248] sm:$0xff]
        %v1228 = vld [vmem:[%s329 + $0x250] sm:$0xff]
        %v1229 = vld [vmem:[%s329 + $0x258] sm:$0xff]
        %v1230 = vld [vmem:[%s329 + $0x260] sm:$0xff]
        %v1231 = vld [vmem:[%s329 + $0x268] sm:$0xff]
        %v1232 = vld [vmem:[%s329 + $0x270] sm:$0xff]
        %v1233 = vld [vmem:[%s329 + $0x278] sm:$0xff]
        %v1234 = vld [vmem:[%s329 + $0x280] sm:$0xff]
        %v1235 = vld [vmem:[%s329 + $0x288] sm:$0xff]
        %v1236 = vld [vmem:[%s329 + $0x290] sm:$0xff]
        %v1237 = vld [vmem:[%s329 + $0x298] sm:$0xff]
        %v1238 = vld [vmem:[%s329 + $0x2a0] sm:$0xff]
        %v1239 = vld [vmem:[%s329 + $0x2a8] sm:$0xff]
        %v1240 = vld [vmem:[%s329 + $0x2b0] sm:$0xff]
        %v1241 = vld [vmem:[%s329 + $0x2b8] sm:$0xff]
        %v1242 = vld [vmem:[%s329 + $0x2c0] sm:$0xff]
        %v1243 = vld [vmem:[%s329 + $0x2c8] sm:$0xff]
        %v1244 = vld [vmem:[%s329 + $0x2d0] sm:$0xff]
        %v1245 = vld [vmem:[%s329 + $0x2d8] sm:$0xff]
        %v1246 = vld [vmem:[%s329 + $0x2e0] sm:$0xff]
        %v1247 = vld [vmem:[%s329 + $0x2e8] sm:$0xff]
        %v1248 = vld [vmem:[%s329 + $0x2f0] sm:$0xff]
        %v1249 = vld [vmem:[%s329 + $0x2f8] sm:$0xff]
        %v1250 = vld [vmem:[%s329 + $0x300] sm:$0xff]
        %v1251 = vld [vmem:[%s329 + $0x308] sm:$0xff]
        %v1252 = vld [vmem:[%s329 + $0x310] sm:$0xff]
        %v1253 = vld [vmem:[%s329 + $0x318] sm:$0xff]
        %v1254 = vld [vmem:[%s329 + $0x320] sm:$0xff]
        %v1255 = vld [vmem:[%s329 + $0x328] sm:$0xff]
        %v1256 = vld [vmem:[%s329 + $0x330] sm:$0xff]
        %v1257 = vld [vmem:[%s329 + $0x338] sm:$0xff]
        %v1258 = vld [vmem:[%s329 + $0x340] sm:$0xff]
        %v1259 = vld [vmem:[%s329 + $0x348] sm:$0xff]
        %v1260 = vld [vmem:[%s329 + $0x350] sm:$0xff]
        %v1261 = vld [vmem:[%s329 + $0x358] sm:$0xff]
        %v1262 = vld [vmem:[%s329 + $0x360] sm:$0xff]
        %v1263 = vld [vmem:[%s329 + $0x368] sm:$0xff]
        %v1264 = vld [vmem:[%s329 + $0x370] sm:$0xff]
        %v1265 = vld [vmem:[%s329 + $0x378] sm:$0xff]
        %v1266 = vld [vmem:[%s329 + $0x380] sm:$0xff]
        %v1267 = vld [vmem:[%s329 + $0x388] sm:$0xff]
        %v1268 = vld [vmem:[%s329 + $0x390] sm:$0xff]
        %v1269 = vld [vmem:[%s329 + $0x398] sm:$0xff]
        %v1270 = vld [vmem:[%s329 + $0x3a0] sm:$0xff]
        %v1271 = vld [vmem:[%s329 + $0x3a8] sm:$0xff]
        %v1272 = vld [vmem:[%s329 + $0x3b0] sm:$0xff]
        %v1273 = vld [vmem:[%s329 + $0x3b8] sm:$0xff]
        %v1274 = vld [vmem:[%s329 + $0x3c0] sm:$0xff]
        %v1275 = vld [vmem:[%s329 + $0x3c8] sm:$0xff]
        %v1276 = vld [vmem:[%s329 + $0x3d0] sm:$0xff]
        %v1277 = vld [vmem:[%s329 + $0x3d8] sm:$0xff]
        %v1278 = vld [vmem:[%s329 + $0x3e0] sm:$0xff]
        %v1279 = vld [vmem:[%s329 + $0x3e8] sm:$0xff]
        %v1280 = vld [vmem:[%s329 + $0x3f0] sm:$0xff]
        %v1281 = vld [vmem:[%s329 + $0x3f8] sm:$0xff]
        %v1282 = vld [vmem:[%s329 + $0x400] sm:$0xff]
        %v1283 = vld [vmem:[%s329 + $0x408] sm:$0xff]
        %v1284 = vld [vmem:[%s329 + $0x410] sm:$0xff]
        %v1285 = vld [vmem:[%s329 + $0x418] sm:$0xff]
        %v1286 = vld [vmem:[%s329 + $0x420] sm:$0xff]
        %v1287 = vld [vmem:[%s329 + $0x428] sm:$0xff]
        %v1288 = vld [vmem:[%s329 + $0x430] sm:$0xff]
        %v1289 = vld [vmem:[%s329 + $0x438] sm:$0xff]
        %v1290 = vld [vmem:[%s329 + $0x440] sm:$0xff]
        %v1291 = vld [vmem:[%s329 + $0x448] sm:$0xff]
        %v1292 = vld [vmem:[%s329 + $0x450] sm:$0xff]
        %v1293 = vld [vmem:[%s329 + $0x458] sm:$0xff]
        %v1294 = vld [vmem:[%s329 + $0x460] sm:$0xff]
        %v1295 = vld [vmem:[%s329 + $0x468] sm:$0xff]
        %v1296 = vld [vmem:[%s329 + $0x470] sm:$0xff]
        %v1297 = vld [vmem:[%s329 + $0x478] sm:$0xff]
        %v1298 = vld [vmem:[%s329 + $0x480] sm:$0xff]
        %v1299 = vld [vmem:[%s329 + $0x488] sm:$0xff]
        %v1300 = vld [vmem:[%s329 + $0x490] sm:$0xff]
        %v1301 = vld [vmem:[%s329 + $0x498] sm:$0xff]
        %v1302 = vld [vmem:[%s329 + $0x4a0] sm:$0xff]
        %v1303 = vld [vmem:[%s329 + $0x4a8] sm:$0xff]
        %v1304 = vld [vmem:[%s329 + $0x4b0] sm:$0xff]
        %v1305 = vld [vmem:[%s329 + $0x4b8] sm:$0xff]
        %v1306 = vld [vmem:[%s329 + $0x4c0] sm:$0xff]
        %v1307 = vld [vmem:[%s329 + $0x4c8] sm:$0xff]
        %v1308 = vld [vmem:[%s329 + $0x4d0] sm:$0xff]
        %v1309 = vld [vmem:[%s329 + $0x4d8] sm:$0xff]
        %v1310 = vld [vmem:[%s329 + $0x4e0] sm:$0xff]
        %v1311 = vld [vmem:[%s329 + $0x4e8] sm:$0xff]
        %v1312 = vld [vmem:[%s329 + $0x4f0] sm:$0xff]
        %v1313 = vld [vmem:[%s329 + $0x4f8] sm:$0xff]
        %v1314 = vld [vmem:[%s329 + $0x500] sm:$0xff]
        %v1315 = vld [vmem:[%s329 + $0x508] sm:$0xff]
        %v1316 = vld [vmem:[%s329 + $0x510] sm:$0xff]
        %v1317 = vld [vmem:[%s329 + $0x518] sm:$0xff]
        %v1318 = vld [vmem:[%s329 + $0x520] sm:$0xff]
        %v1319 = vld [vmem:[%s329 + $0x528] sm:$0xff]
        %v1320 = vld [vmem:[%s329 + $0x530] sm:$0xff]
        %v1321 = vld [vmem:[%s329 + $0x538] sm:$0xff]
        %v1322 = vld [vmem:[%s329 + $0x540] sm:$0xff]
        %v1323 = vld [vmem:[%s329 + $0x548] sm:$0xff]
        %v1324 = vld [vmem:[%s329 + $0x550] sm:$0xff]
        %v1325 = vld [vmem:[%s329 + $0x558] sm:$0xff]
        %v1326 = vld [vmem:[%s329 + $0x560] sm:$0xff]
        %v1327 = vld [vmem:[%s329 + $0x568] sm:$0xff]
        %v1328 = vld [vmem:[%s329 + $0x570] sm:$0xff]
        %v1329 = vld [vmem:[%s329 + $0x578] sm:$0xff]
        %v1330 = vld [vmem:[%s329 + $0x580] sm:$0xff]
        %v1331 = vld [vmem:[%s329 + $0x588] sm:$0xff]
        %v1332 = vld [vmem:[%s329 + $0x590] sm:$0xff]
        %v1333 = vld [vmem:[%s329 + $0x598] sm:$0xff]
        %v1334 = vld [vmem:[%s329 + $0x5a0] sm:$0xff]
        %v1335 = vld [vmem:[%s329 + $0x5a8] sm:$0xff]
        %v1336 = vld [vmem:[%s329 + $0x5b0] sm:$0xff]
        %v1337 = vld [vmem:[%s329 + $0x5b8] sm:$0xff]
        %v1338 = vld [vmem:[%s329 + $0x5c0] sm:$0xff]
        %v1339 = vld [vmem:[%s329 + $0x5c8] sm:$0xff]
        %v1340 = vld [vmem:[%s329 + $0x5d0] sm:$0xff]
        %v1341 = vld [vmem:[%s329 + $0x5d8] sm:$0xff]
        %v1342 = vld [vmem:[%s329 + $0x5e0] sm:$0xff]
        %v1343 = vld [vmem:[%s329 + $0x5e8] sm:$0xff]
        %v1344 = vld [vmem:[%s329 + $0x5f0] sm:$0xff]
        %v1345 = vld [vmem:[%s329 + $0x5f8] sm:$0xff]
        %v1346 = vld [vmem:[%s329 + $0x600] sm:$0xff]
        %v1347 = vld [vmem:[%s329 + $0x608] sm:$0xff]
        %v1348 = vld [vmem:[%s329 + $0x610] sm:$0xff]
        %v1349 = vld [vmem:[%s329 + $0x618] sm:$0xff]
        %v1350 = vld [vmem:[%s329 + $0x620] sm:$0xff]
        %v1351 = vld [vmem:[%s329 + $0x628] sm:$0xff]
        %v1352 = vld [vmem:[%s329 + $0x630] sm:$0xff]
        %v1353 = vld [vmem:[%s329 + $0x638] sm:$0xff]
        %v1354 = vld [vmem:[%s329 + $0x640] sm:$0xff]
        %v1355 = vld [vmem:[%s329 + $0x648] sm:$0xff]
        %v1356 = vld [vmem:[%s329 + $0x650] sm:$0xff]
        %v1357 = vld [vmem:[%s329 + $0x658] sm:$0xff]
        %v1358 = vld [vmem:[%s329 + $0x660] sm:$0xff]
        %v1359 = vld [vmem:[%s329 + $0x668] sm:$0xff]
        %v1360 = vld [vmem:[%s329 + $0x670] sm:$0xff]
        %v1361 = vld [vmem:[%s329 + $0x678] sm:$0xff]
        %v1362 = vld [vmem:[%s329 + $0x680] sm:$0xff]
        %v1363 = vld [vmem:[%s329 + $0x688] sm:$0xff]
        %v1364 = vld [vmem:[%s329 + $0x690] sm:$0xff]
        %v1365 = vld [vmem:[%s329 + $0x698] sm:$0xff]
        %v1366 = vld [vmem:[%s329 + $0x6a0] sm:$0xff]
        %v1367 = vld [vmem:[%s329 + $0x6a8] sm:$0xff]
        %v1368 = vld [vmem:[%s329 + $0x6b0] sm:$0xff]
        %v1369 = vld [vmem:[%s329 + $0x6b8] sm:$0xff]
        %v1370 = vld [vmem:[%s329 + $0x6c0] sm:$0xff]
        %v1371 = vld [vmem:[%s329 + $0x6c8] sm:$0xff]
        %v1372 = vld [vmem:[%s329 + $0x6d0] sm:$0xff]
        %v1373 = vld [vmem:[%s329 + $0x6d8] sm:$0xff]
        %v1374 = vld [vmem:[%s329 + $0x6e0] sm:$0xff]
        %v1375 = vld [vmem:[%s329 + $0x6e8] sm:$0xff]
        %v1376 = vld [vmem:[%s329 + $0x6f0] sm:$0xff]
        %v1377 = vld [vmem:[%s329 + $0x6f8] sm:$0xff]
        %v1378 = vld [vmem:[%s329 + $0x700] sm:$0xff]
        %v1379 = vld [vmem:[%s329 + $0x708] sm:$0xff]
        %v1380 = vld [vmem:[%s329 + $0x710] sm:$0xff]
        %v1381 = vld [vmem:[%s329 + $0x718] sm:$0xff]
        %v1382 = vld [vmem:[%s329 + $0x720] sm:$0xff]
        %v1383 = vld [vmem:[%s329 + $0x728] sm:$0xff]
        %v1384 = vld [vmem:[%s329 + $0x730] sm:$0xff]
        %v1385 = vld [vmem:[%s329 + $0x738] sm:$0xff]
        %v1386 = vld [vmem:[%s329 + $0x740] sm:$0xff]
        %v1387 = vld [vmem:[%s329 + $0x748] sm:$0xff]
        %v1388 = vld [vmem:[%s329 + $0x750] sm:$0xff]
        %v1389 = vld [vmem:[%s329 + $0x758] sm:$0xff]
        %v1390 = vld [vmem:[%s329 + $0x760] sm:$0xff]
        %v1391 = vld [vmem:[%s329 + $0x768] sm:$0xff]
        %v1392 = vld [vmem:[%s329 + $0x770] sm:$0xff]
        %v1393 = vld [vmem:[%s329 + $0x778] sm:$0xff]
        %v1394 = vld [vmem:[%s329 + $0x780] sm:$0xff]
        %v1395 = vld [vmem:[%s329 + $0x788] sm:$0xff]
        %v1396 = vld [vmem:[%s329 + $0x790] sm:$0xff]
        %v1397 = vld [vmem:[%s329 + $0x798] sm:$0xff]
        %v1398 = vld [vmem:[%s329 + $0x7a0] sm:$0xff]
        %v1399 = vld [vmem:[%s329 + $0x7a8] sm:$0xff]
        %v1400 = vld [vmem:[%s329 + $0x7b0] sm:$0xff]
        %v1401 = vld [vmem:[%s329 + $0x7b8] sm:$0xff]
        %v1402 = vld [vmem:[%s329 + $0x7c0] sm:$0xff]
        %v1403 = vld [vmem:[%s329 + $0x7c8] sm:$0xff]
        %v1404 = vld [vmem:[%s329 + $0x7d0] sm:$0xff]
        %v1405 = vld [vmem:[%s329 + $0x7d8] sm:$0xff]
        %v1406 = vld [vmem:[%s329 + $0x7e0] sm:$0xff]
        %v1407 = vld [vmem:[%s329 + $0x7e8] sm:$0xff]
        %v1408 = vld [vmem:[%s329 + $0x7f0] sm:$0xff]
        %v1409 = vld [vmem:[%s329 + $0x7f8] sm:$0xff]
        %v1410 = vsub.f32 %v898, %v386
        %v1411 = vsub.f32 %v899, %v387
        %v1412 = vsub.f32 %v900, %v388
        %v1413 = vsub.f32 %v901, %v389
        %v1414 = vsub.f32 %v902, %v390
        %v1415 = vsub.f32 %v903, %v391
        %v1416 = vsub.f32 %v904, %v392
        %v1417 = vsub.f32 %v905, %v393
        %v1418 = vsub.f32 %v906, %v394
        %v1419 = vsub.f32 %v907, %v395
        %v1420 = vsub.f32 %v908, %v396
        %v1421 = vsub.f32 %v909, %v397
        %v1422 = vsub.f32 %v910, %v398
        %v1423 = vsub.f32 %v911, %v399
        %v1424 = vsub.f32 %v912, %v400
        %v1425 = vsub.f32 %v913, %v401
        %v1426 = vsub.f32 %v914, %v402
        %v1427 = vsub.f32 %v915, %v403
        %v1428 = vsub.f32 %v916, %v404
        %v1429 = vsub.f32 %v917, %v405
        %v1430 = vsub.f32 %v918, %v406
        %v1431 = vsub.f32 %v919, %v407
        %v1432 = vsub.f32 %v920, %v408
        %v1433 = vsub.f32 %v921, %v409
        %v1434 = vsub.f32 %v922, %v410
        %v1435 = vsub.f32 %v923, %v411
        %v1436 = vsub.f32 %v924, %v412
        %v1437 = vsub.f32 %v925, %v413
        %v1438 = vsub.f32 %v926, %v414
        %v1439 = vsub.f32 %v927, %v415
        %v1440 = vsub.f32 %v928, %v416
        %v1441 = vsub.f32 %v929, %v417
        %v1442 = vsub.f32 %v930, %v418
        %v1443 = vsub.f32 %v931, %v419
        %v1444 = vsub.f32 %v932, %v420
        %v1445 = vsub.f32 %v933, %v421
        %v1446 = vsub.f32 %v934, %v422
        %v1447 = vsub.f32 %v935, %v423
        %v1448 = vsub.f32 %v936, %v424
        %v1449 = vsub.f32 %v937, %v425
        %v1450 = vsub.f32 %v938, %v426
        %v1451 = vsub.f32 %v939, %v427
        %v1452 = vsub.f32 %v940, %v428
        %v1453 = vsub.f32 %v941, %v429
        %v1454 = vsub.f32 %v942, %v430
        %v1455 = vsub.f32 %v943, %v431
        %v1456 = vsub.f32 %v944, %v432
        %v1457 = vsub.f32 %v945, %v433
        %v1458 = vsub.f32 %v946, %v434
        %v1459 = vsub.f32 %v947, %v435
        %v1460 = vsub.f32 %v948, %v436
        %v1461 = vsub.f32 %v949, %v437
        %v1462 = vsub.f32 %v950, %v438
        %v1463 = vsub.f32 %v951, %v439
        %v1464 = vsub.f32 %v952, %v440
        %v1465 = vsub.f32 %v953, %v441
        %v1466 = vsub.f32 %v954, %v442
        %v1467 = vsub.f32 %v955, %v443
        %v1468 = vsub.f32 %v956, %v444
        %v1469 = vsub.f32 %v957, %v445
        %v1470 = vsub.f32 %v958, %v446
        %v1471 = vsub.f32 %v959, %v447
        %v1472 = vsub.f32 %v960, %v448
        %v1473 = vsub.f32 %v961, %v449
        %v1474 = vsub.f32 %v962, %v450
        %v1475 = vsub.f32 %v963, %v451
        %v1476 = vsub.f32 %v964, %v452
        %v1477 = vsub.f32 %v965, %v453
        %v1478 = vsub.f32 %v966, %v454
        %v1479 = vsub.f32 %v967, %v455
        %v1480 = vsub.f32 %v968, %v456
        %v1481 = vsub.f32 %v969, %v457
        %v1482 = vsub.f32 %v970, %v458
        %v1483 = vsub.f32 %v971, %v459
        %v1484 = vsub.f32 %v972, %v460
        %v1485 = vsub.f32 %v973, %v461
        %v1486 = vsub.f32 %v974, %v462
        %v1487 = vsub.f32 %v975, %v463
        %v1488 = vsub.f32 %v976, %v464
        %v1489 = vsub.f32 %v977, %v465
        %v1490 = vsub.f32 %v978, %v466
        %v1491 = vsub.f32 %v979, %v467
        %v1492 = vsub.f32 %v980, %v468
        %v1493 = vsub.f32 %v981, %v469
        %v1494 = vsub.f32 %v982, %v470
        %v1495 = vsub.f32 %v983, %v471
        %v1496 = vsub.f32 %v984, %v472
        %v1497 = vsub.f32 %v985, %v473
        %v1498 = vsub.f32 %v986, %v474
        %v1499 = vsub.f32 %v987, %v475
        %v1500 = vsub.f32 %v988, %v476
        %v1501 = vsub.f32 %v989, %v477
        %v1502 = vsub.f32 %v990, %v478
        %v1503 = vsub.f32 %v991, %v479
        %v1504 = vsub.f32 %v992, %v480
        %v1505 = vsub.f32 %v993, %v481
        %v1506 = vsub.f32 %v994, %v482
        %v1507 = vsub.f32 %v995, %v483
        %v1508 = vsub.f32 %v996, %v484
        %v1509 = vsub.f32 %v997, %v485
        %v1510 = vsub.f32 %v998, %v486
        %v1511 = vsub.f32 %v999, %v487
        %v1512 = vsub.f32 %v1000, %v488
        %v1513 = vsub.f32 %v1001, %v489
        %v1514 = vsub.f32 %v1002, %v490
        %v1515 = vsub.f32 %v1003, %v491
        %v1516 = vsub.f32 %v1004, %v492
        %v1517 = vsub.f32 %v1005, %v493
        %v1518 = vsub.f32 %v1006, %v494
        %v1519 = vsub.f32 %v1007, %v495
        %v1520 = vsub.f32 %v1008, %v496
        %v1521 = vsub.f32 %v1009, %v497
        %v1522 = vsub.f32 %v1010, %v498
        %v1523 = vsub.f32 %v1011, %v499
        %v1524 = vsub.f32 %v1012, %v500
        %v1525 = vsub.f32 %v1013, %v501
        %v1526 = vsub.f32 %v1014, %v502
        %v1527 = vsub.f32 %v1015, %v503
        %v1528 = vsub.f32 %v1016, %v504
        %v1529 = vsub.f32 %v1017, %v505
        %v1530 = vsub.f32 %v1018, %v506
        %v1531 = vsub.f32 %v1019, %v507
        %v1532 = vsub.f32 %v1020, %v508
        %v1533 = vsub.f32 %v1021, %v509
        %v1534 = vsub.f32 %v1022, %v510
        %v1535 = vsub.f32 %v1023, %v511
        %v1536 = vsub.f32 %v1024, %v512
        %v1537 = vsub.f32 %v1025, %v513
        %v1538 = vsub.f32 %v1026, %v514
        %v1539 = vsub.f32 %v1027, %v515
        %v1540 = vsub.f32 %v1028, %v516
        %v1541 = vsub.f32 %v1029, %v517
        %v1542 = vsub.f32 %v1030, %v518
        %v1543 = vsub.f32 %v1031, %v519
        %v1544 = vsub.f32 %v1032, %v520
        %v1545 = vsub.f32 %v1033, %v521
        %v1546 = vsub.f32 %v1034, %v522
        %v1547 = vsub.f32 %v1035, %v523
        %v1548 = vsub.f32 %v1036, %v524
        %v1549 = vsub.f32 %v1037, %v525
        %v1550 = vsub.f32 %v1038, %v526
        %v1551 = vsub.f32 %v1039, %v527
        %v1552 = vsub.f32 %v1040, %v528
        %v1553 = vsub.f32 %v1041, %v529
        %v1554 = vsub.f32 %v1042, %v530
        %v1555 = vsub.f32 %v1043, %v531
        %v1556 = vsub.f32 %v1044, %v532
        %v1557 = vsub.f32 %v1045, %v533
        %v1558 = vsub.f32 %v1046, %v534
        %v1559 = vsub.f32 %v1047, %v535
        %v1560 = vsub.f32 %v1048, %v536
        %v1561 = vsub.f32 %v1049, %v537
        %v1562 = vsub.f32 %v1050, %v538
        %v1563 = vsub.f32 %v1051, %v539
        %v1564 = vsub.f32 %v1052, %v540
        %v1565 = vsub.f32 %v1053, %v541
        %v1566 = vsub.f32 %v1054, %v542
        %v1567 = vsub.f32 %v1055, %v543
        %v1568 = vsub.f32 %v1056, %v544
        %v1569 = vsub.f32 %v1057, %v545
        %v1570 = vsub.f32 %v1058, %v546
        %v1571 = vsub.f32 %v1059, %v547
        %v1572 = vsub.f32 %v1060, %v548
        %v1573 = vsub.f32 %v1061, %v549
        %v1574 = vsub.f32 %v1062, %v550
        %v1575 = vsub.f32 %v1063, %v551
        %v1576 = vsub.f32 %v1064, %v552
        %v1577 = vsub.f32 %v1065, %v553
        %v1578 = vsub.f32 %v1066, %v554
        %v1579 = vsub.f32 %v1067, %v555
        %v1580 = vsub.f32 %v1068, %v556
        %v1581 = vsub.f32 %v1069, %v557
        %v1582 = vsub.f32 %v1070, %v558
        %v1583 = vsub.f32 %v1071, %v559
        %v1584 = vsub.f32 %v1072, %v560
        %v1585 = vsub.f32 %v1073, %v561
        %v1586 = vsub.f32 %v1074, %v562
        %v1587 = vsub.f32 %v1075, %v563
        %v1588 = vsub.f32 %v1076, %v564
        %v1589 = vsub.f32 %v1077, %v565
        %v1590 = vsub.f32 %v1078, %v566
        %v1591 = vsub.f32 %v1079, %v567
        %v1592 = vsub.f32 %v1080, %v568
        %v1593 = vsub.f32 %v1081, %v569
        %v1594 = vsub.f32 %v1082, %v570
        %v1595 = vsub.f32 %v1083, %v571
        %v1596 = vsub.f32 %v1084, %v572
        %v1597 = vsub.f32 %v1085, %v573
        %v1598 = vsub.f32 %v1086, %v574
        %v1599 = vsub.f32 %v1087, %v575
        %v1600 = vsub.f32 %v1088, %v576
        %v1601 = vsub.f32 %v1089, %v577
        %v1602 = vsub.f32 %v1090, %v578
        %v1603 = vsub.f32 %v1091, %v579
        %v1604 = vsub.f32 %v1092, %v580
        %v1605 = vsub.f32 %v1093, %v581
        %v1606 = vsub.f32 %v1094, %v582
        %v1607 = vsub.f32 %v1095, %v583
        %v1608 = vsub.f32 %v1096, %v584
        %v1609 = vsub.f32 %v1097, %v585
        %v1610 = vsub.f32 %v1098, %v586
        %v1611 = vsub.f32 %v1099, %v587
        %v1612 = vsub.f32 %v1100, %v588
        %v1613 = vsub.f32 %v1101, %v589
        %v1614 = vsub.f32 %v1102, %v590
        %v1615 = vsub.f32 %v1103, %v591
        %v1616 = vsub.f32 %v1104, %v592
        %v1617 = vsub.f32 %v1105, %v593
        %v1618 = vsub.f32 %v1106, %v594
        %v1619 = vsub.f32 %v1107, %v595
        %v1620 = vsub.f32 %v1108, %v596
        %v1621 = vsub.f32 %v1109, %v597
        %v1622 = vsub.f32 %v1110, %v598
        %v1623 = vsub.f32 %v1111, %v599
        %v1624 = vsub.f32 %v1112, %v600
        %v1625 = vsub.f32 %v1113, %v601
        %v1626 = vsub.f32 %v1114, %v602
        %v1627 = vsub.f32 %v1115, %v603
        %v1628 = vsub.f32 %v1116, %v604
        %v1629 = vsub.f32 %v1117, %v605
        %v1630 = vsub.f32 %v1118, %v606
        %v1631 = vsub.f32 %v1119, %v607
        %v1632 = vsub.f32 %v1120, %v608
        %v1633 = vsub.f32 %v1121, %v609
        %v1634 = vsub.f32 %v1122, %v610
        %v1635 = vsub.f32 %v1123, %v611
        %v1636 = vsub.f32 %v1124, %v612
        %v1637 = vsub.f32 %v1125, %v613
        %v1638 = vsub.f32 %v1126, %v614
        %v1639 = vsub.f32 %v1127, %v615
        %v1640 = vsub.f32 %v1128, %v616
        %v1641 = vsub.f32 %v1129, %v617
        %v1642 = vsub.f32 %v1130, %v618
        %v1643 = vsub.f32 %v1131, %v619
        %v1644 = vsub.f32 %v1132, %v620
        %v1645 = vsub.f32 %v1133, %v621
        %v1646 = vsub.f32 %v1134, %v622
        %v1647 = vsub.f32 %v1135, %v623
        %v1648 = vsub.f32 %v1136, %v624
        %v1649 = vsub.f32 %v1137, %v625
        %v1650 = vsub.f32 %v1138, %v626
        %v1651 = vsub.f32 %v1139, %v627
        %v1652 = vsub.f32 %v1140, %v628
        %v1653 = vsub.f32 %v1141, %v629
        %v1654 = vsub.f32 %v1142, %v630
        %v1655 = vsub.f32 %v1143, %v631
        %v1656 = vsub.f32 %v1144, %v632
        %v1657 = vsub.f32 %v1145, %v633
        %v1658 = vsub.f32 %v1146, %v634
        %v1659 = vsub.f32 %v1147, %v635
        %v1660 = vsub.f32 %v1148, %v636
        %v1661 = vsub.f32 %v1149, %v637
        %v1662 = vsub.f32 %v1150, %v638
        %v1663 = vsub.f32 %v1151, %v639
        %v1664 = vsub.f32 %v1152, %v640
        %v1665 = vsub.f32 %v1153, %v641
        %v1666 = vsub.f32 %v642, %v1154
        %v1667 = vsub.f32 %v643, %v1155
        %v1668 = vsub.f32 %v644, %v1156
        %v1669 = vsub.f32 %v645, %v1157
        %v1670 = vsub.f32 %v646, %v1158
        %v1671 = vsub.f32 %v647, %v1159
        %v1672 = vsub.f32 %v648, %v1160
        %v1673 = vsub.f32 %v649, %v1161
        %v1674 = vsub.f32 %v650, %v1162
        %v1675 = vsub.f32 %v651, %v1163
        %v1676 = vsub.f32 %v652, %v1164
        %v1677 = vsub.f32 %v653, %v1165
        %v1678 = vsub.f32 %v654, %v1166
        %v1679 = vsub.f32 %v655, %v1167
        %v1680 = vsub.f32 %v656, %v1168
        %v1681 = vsub.f32 %v657, %v1169
        %v1682 = vsub.f32 %v658, %v1170
        %v1683 = vsub.f32 %v659, %v1171
        %v1684 = vsub.f32 %v660, %v1172
        %v1685 = vsub.f32 %v661, %v1173
        %v1686 = vsub.f32 %v662, %v1174
        %v1687 = vsub.f32 %v663, %v1175
        %v1688 = vsub.f32 %v664, %v1176
        %v1689 = vsub.f32 %v665, %v1177
        %v1690 = vsub.f32 %v666, %v1178
        %v1691 = vsub.f32 %v667, %v1179
        %v1692 = vsub.f32 %v668, %v1180
        %v1693 = vsub.f32 %v669, %v1181
        %v1694 = vsub.f32 %v670, %v1182
        %v1695 = vsub.f32 %v671, %v1183
        %v1696 = vsub.f32 %v672, %v1184
        %v1697 = vsub.f32 %v673, %v1185
        %v1698 = vsub.f32 %v674, %v1186
        %v1699 = vsub.f32 %v675, %v1187
        %v1700 = vsub.f32 %v676, %v1188
        %v1701 = vsub.f32 %v677, %v1189
        %v1702 = vsub.f32 %v678, %v1190
        %v1703 = vsub.f32 %v679, %v1191
        %v1704 = vsub.f32 %v680, %v1192
        %v1705 = vsub.f32 %v681, %v1193
        %v1706 = vsub.f32 %v682, %v1194
        %v1707 = vsub.f32 %v683, %v1195
        %v1708 = vsub.f32 %v684, %v1196
        %v1709 = vsub.f32 %v685, %v1197
        %v1710 = vsub.f32 %v686, %v1198
        %v1711 = vsub.f32 %v687, %v1199
        %v1712 = vsub.f32 %v688, %v1200
        %v1713 = vsub.f32 %v689, %v1201
        %v1714 = vsub.f32 %v690, %v1202
        %v1715 = vsub.f32 %v691, %v1203
        %v1716 = vsub.f32 %v692, %v1204
        %v1717 = vsub.f32 %v693, %v1205
        %v1718 = vsub.f32 %v694, %v1206
        %v1719 = vsub.f32 %v695, %v1207
        %v1720 = vsub.f32 %v696, %v1208
        %v1721 = vsub.f32 %v697, %v1209
        %v1722 = vsub.f32 %v698, %v1210
        %v1723 = vsub.f32 %v699, %v1211
        %v1724 = vsub.f32 %v700, %v1212
        %v1725 = vsub.f32 %v701, %v1213
        %v1726 = vsub.f32 %v702, %v1214
        %v1727 = vsub.f32 %v703, %v1215
        %v1728 = vsub.f32 %v704, %v1216
        %v1729 = vsub.f32 %v705, %v1217
        %v1730 = vsub.f32 %v706, %v1218
        %v1731 = vsub.f32 %v707, %v1219
        %v1732 = vsub.f32 %v708, %v1220
        %v1733 = vsub.f32 %v709, %v1221
        %v1734 = vsub.f32 %v710, %v1222
        %v1735 = vsub.f32 %v711, %v1223
        %v1736 = vsub.f32 %v712, %v1224
        %v1737 = vsub.f32 %v713, %v1225
        %v1738 = vsub.f32 %v714, %v1226
        %v1739 = vsub.f32 %v715, %v1227
        %v1740 = vsub.f32 %v716, %v1228
        %v1741 = vsub.f32 %v717, %v1229
        %v1742 = vsub.f32 %v718, %v1230
        %v1743 = vsub.f32 %v719, %v1231
        %v1744 = vsub.f32 %v720, %v1232
        %v1745 = vsub.f32 %v721, %v1233
        %v1746 = vsub.f32 %v722, %v1234
        %v1747 = vsub.f32 %v723, %v1235
        %v1748 = vsub.f32 %v724, %v1236
        %v1749 = vsub.f32 %v725, %v1237
        %v1750 = vsub.f32 %v726, %v1238
        %v1751 = vsub.f32 %v727, %v1239
        %v1752 = vsub.f32 %v728, %v1240
        %v1753 = vsub.f32 %v729, %v1241
        %v1754 = vsub.f32 %v730, %v1242
        %v1755 = vsub.f32 %v731, %v1243
        %v1756 = vsub.f32 %v732, %v1244
        %v1757 = vsub.f32 %v733, %v1245
        %v1758 = vsub.f32 %v734, %v1246
        %v1759 = vsub.f32 %v735, %v1247
        %v1760 = vsub.f32 %v736, %v1248
        %v1761 = vsub.f32 %v737, %v1249
        %v1762 = vsub.f32 %v738, %v1250
        %v1763 = vsub.f32 %v739, %v1251
        %v1764 = vsub.f32 %v740, %v1252
        %v1765 = vsub.f32 %v741, %v1253
        %v1766 = vsub.f32 %v742, %v1254
        %v1767 = vsub.f32 %v743, %v1255
        %v1768 = vsub.f32 %v744, %v1256
        %v1769 = vsub.f32 %v745, %v1257
        %v1770 = vsub.f32 %v746, %v1258
        %v1771 = vsub.f32 %v747, %v1259
        %v1772 = vsub.f32 %v748, %v1260
        %v1773 = vsub.f32 %v749, %v1261
        %v1774 = vsub.f32 %v750, %v1262
        %v1775 = vsub.f32 %v751, %v1263
        %v1776 = vsub.f32 %v752, %v1264
        %v1777 = vsub.f32 %v753, %v1265
        %v1778 = vsub.f32 %v754, %v1266
        %v1779 = vsub.f32 %v755, %v1267
        %v1780 = vsub.f32 %v756, %v1268
        %v1781 = vsub.f32 %v757, %v1269
        %v1782 = vsub.f32 %v758, %v1270
        %v1783 = vsub.f32 %v759, %v1271
        %v1784 = vsub.f32 %v760, %v1272
        %v1785 = vsub.f32 %v761, %v1273
        %v1786 = vsub.f32 %v762, %v1274
        %v1787 = vsub.f32 %v763, %v1275
        %v1788 = vsub.f32 %v764, %v1276
        %v1789 = vsub.f32 %v765, %v1277
        %v1790 = vsub.f32 %v766, %v1278
        %v1791 = vsub.f32 %v767, %v1279
        %v1792 = vsub.f32 %v768, %v1280
        %v1793 = vsub.f32 %v769, %v1281
        %v1794 = vsub.f32 %v770, %v1282
        %v1795 = vsub.f32 %v771, %v1283
        %v1796 = vsub.f32 %v772, %v1284
        %v1797 = vsub.f32 %v773, %v1285
        %v1798 = vsub.f32 %v774, %v1286
        %v1799 = vsub.f32 %v775, %v1287
        %v1800 = vsub.f32 %v776, %v1288
        %v1801 = vsub.f32 %v777, %v1289
        %v1802 = vsub.f32 %v778, %v1290
        %v1803 = vsub.f32 %v779, %v1291
        %v1804 = vsub.f32 %v780, %v1292
        %v1805 = vsub.f32 %v781, %v1293
        %v1806 = vsub.f32 %v782, %v1294
        %v1807 = vsub.f32 %v783, %v1295
        %v1808 = vsub.f32 %v784, %v1296
        %v1809 = vsub.f32 %v785, %v1297
        %v1810 = vsub.f32 %v786, %v1298
        %v1811 = vsub.f32 %v787, %v1299
        %v1812 = vsub.f32 %v788, %v1300
        %v1813 = vsub.f32 %v789, %v1301
        %v1814 = vsub.f32 %v790, %v1302
        %v1815 = vsub.f32 %v791, %v1303
        %v1816 = vsub.f32 %v792, %v1304
        %v1817 = vsub.f32 %v793, %v1305
        %v1818 = vsub.f32 %v794, %v1306
        %v1819 = vsub.f32 %v795, %v1307
        %v1820 = vsub.f32 %v796, %v1308
        %v1821 = vsub.f32 %v797, %v1309
        %v1822 = vsub.f32 %v798, %v1310
        %v1823 = vsub.f32 %v799, %v1311
        %v1824 = vsub.f32 %v800, %v1312
        %v1825 = vsub.f32 %v801, %v1313
        %v1826 = vsub.f32 %v802, %v1314
        %v1827 = vsub.f32 %v803, %v1315
        %v1828 = vsub.f32 %v804, %v1316
        %v1829 = vsub.f32 %v805, %v1317
        %v1830 = vsub.f32 %v806, %v1318
        %v1831 = vsub.f32 %v807, %v1319
        %v1832 = vsub.f32 %v808, %v1320
        %v1833 = vsub.f32 %v809, %v1321
        %v1834 = vsub.f32 %v810, %v1322
        %v1835 = vsub.f32 %v811, %v1323
        %v1836 = vsub.f32 %v812, %v1324
        %v1837 = vsub.f32 %v813, %v1325
        %v1838 = vsub.f32 %v814, %v1326
        %v1839 = vsub.f32 %v815, %v1327
        %v1840 = vsub.f32 %v816, %v1328
        %v1841 = vsub.f32 %v817, %v1329
        %v1842 = vsub.f32 %v818, %v1330
        %v1843 = vsub.f32 %v819, %v1331
        %v1844 = vsub.f32 %v820, %v1332
        %v1845 = vsub.f32 %v821, %v1333
        %v1846 = vsub.f32 %v822, %v1334
        %v1847 = vsub.f32 %v823, %v1335
        %v1848 = vsub.f32 %v824, %v1336
        %v1849 = vsub.f32 %v825, %v1337
        %v1850 = vsub.f32 %v826, %v1338
        %v1851 = vsub.f32 %v827, %v1339
        %v1852 = vsub.f32 %v828, %v1340
        %v1853 = vsub.f32 %v829, %v1341
        %v1854 = vsub.f32 %v830, %v1342
        %v1855 = vsub.f32 %v831, %v1343
        %v1856 = vsub.f32 %v832, %v1344
        %v1857 = vsub.f32 %v833, %v1345
        %v1858 = vsub.f32 %v834, %v1346
        %v1859 = vsub.f32 %v835, %v1347
        %v1860 = vsub.f32 %v836, %v1348
        %v1861 = vsub.f32 %v837, %v1349
        %v1862 = vsub.f32 %v838, %v1350
        %v1863 = vsub.f32 %v839, %v1351
        %v1864 = vsub.f32 %v840, %v1352
        %v1865 = vsub.f32 %v841, %v1353
        %v1866 = vsub.f32 %v842, %v1354
        %v1867 = vsub.f32 %v843, %v1355
        %v1868 = vsub.f32 %v844, %v1356
        %v1869 = vsub.f32 %v845, %v1357
        %v1870 = vsub.f32 %v846, %v1358
        %v1871 = vsub.f32 %v847, %v1359
        %v1872 = vsub.f32 %v848, %v1360
        %v1873 = vsub.f32 %v849, %v1361
        %v1874 = vsub.f32 %v850, %v1362
        %v1875 = vsub.f32 %v851, %v1363
        %v1876 = vsub.f32 %v852, %v1364
        %v1877 = vsub.f32 %v853, %v1365
        %v1878 = vsub.f32 %v854, %v1366
        %v1879 = vsub.f32 %v855, %v1367
        %v1880 = vsub.f32 %v856, %v1368
        %v1881 = vsub.f32 %v857, %v1369
        %v1882 = vsub.f32 %v858, %v1370
        %v1883 = vsub.f32 %v859, %v1371
        %v1884 = vsub.f32 %v860, %v1372
        %v1885 = vsub.f32 %v861, %v1373
        %v1886 = vsub.f32 %v862, %v1374
        %v1887 = vsub.f32 %v863, %v1375
        %v1888 = vsub.f32 %v864, %v1376
        %v1889 = vsub.f32 %v865, %v1377
        %v1890 = vsub.f32 %v866, %v1378
        %v1891 = vsub.f32 %v867, %v1379
        %v1892 = vsub.f32 %v868, %v1380
        %v1893 = vsub.f32 %v869, %v1381
        %v1894 = vsub.f32 %v870, %v1382
        %v1895 = vsub.f32 %v871, %v1383
        %v1896 = vsub.f32 %v872, %v1384
        %v1897 = vsub.f32 %v873, %v1385
        %v1898 = vsub.f32 %v874, %v1386
        %v1899 = vsub.f32 %v875, %v1387
        %v1900 = vsub.f32 %v876, %v1388
        %v1901 = vsub.f32 %v877, %v1389
        %v1902 = vsub.f32 %v878, %v1390
        %v1903 = vsub.f32 %v879, %v1391
        %v1904 = vsub.f32 %v880, %v1392
        %v1905 = vsub.f32 %v881, %v1393
        %v1906 = vsub.f32 %v882, %v1394
        %v1907 = vsub.f32 %v883, %v1395
        %v1908 = vsub.f32 %v884, %v1396
        %v1909 = vsub.f32 %v885, %v1397
        %v1910 = vsub.f32 %v886, %v1398
        %v1911 = vsub.f32 %v887, %v1399
        %v1912 = vsub.f32 %v888, %v1400
        %v1913 = vsub.f32 %v889, %v1401
        %v1914 = vsub.f32 %v890, %v1402
        %v1915 = vsub.f32 %v891, %v1403
        %v1916 = vsub.f32 %v892, %v1404
        %v1917 = vsub.f32 %v893, %v1405
        %v1918 = vsub.f32 %v894, %v1406
        %v1919 = vsub.f32 %v895, %v1407
        %v1920 = vsub.f32 %v896, %v1408
        %v1921 = vsub.f32 %v897, %v1409
        %v1922 = vsub.f32 %v1666, 0.5
        %v1923 = vsub.f32 %v1667, 0.5
        %v1924 = vsub.f32 %v1668, 0.5
        %v1925 = vsub.f32 %v1669, 0.5
        %v1926 = vsub.f32 %v1670, 0.5
        %v1927 = vsub.f32 %v1671, 0.5
        %v1928 = vsub.f32 %v1672, 0.5
        %v1929 = vsub.f32 %v1673, 0.5
        %v1930 = vsub.f32 %v1674, 0.5
        %v1931 = vsub.f32 %v1675, 0.5
        %v1932 = vsub.f32 %v1676, 0.5
        %v1933 = vsub.f32 %v1677, 0.5
        %v1934 = vsub.f32 %v1678, 0.5
        %v1935 = vsub.f32 %v1679, 0.5
        %v1936 = vsub.f32 %v1680, 0.5
        %v1937 = vsub.f32 %v1681, 0.5
        %v1938 = vsub.f32 %v1682, 0.5
        %v1939 = vsub.f32 %v1683, 0.5
        %v1940 = vsub.f32 %v1684, 0.5
        %v1941 = vsub.f32 %v1685, 0.5
        %v1942 = vsub.f32 %v1686, 0.5
        %v1943 = vsub.f32 %v1687, 0.5
        %v1944 = vsub.f32 %v1688, 0.5
        %v1945 = vsub.f32 %v1689, 0.5
        %v1946 = vsub.f32 %v1690, 0.5
        %v1947 = vsub.f32 %v1691, 0.5
        %v1948 = vsub.f32 %v1692, 0.5
        %v1949 = vsub.f32 %v1693, 0.5
        %v1950 = vsub.f32 %v1694, 0.5
        %v1951 = vsub.f32 %v1695, 0.5
        %v1952 = vsub.f32 %v1696, 0.5
        %v1953 = vsub.f32 %v1697, 0.5
        %v1954 = vsub.f32 %v1698, 0.5
        %v1955 = vsub.f32 %v1699, 0.5
        %v1956 = vsub.f32 %v1700, 0.5
        %v1957 = vsub.f32 %v1701, 0.5
        %v1958 = vsub.f32 %v1702, 0.5
        %v1959 = vsub.f32 %v1703, 0.5
        %v1960 = vsub.f32 %v1704, 0.5
        %v1961 = vsub.f32 %v1705, 0.5
        %v1962 = vsub.f32 %v1706, 0.5
        %v1963 = vsub.f32 %v1707, 0.5
        %v1964 = vsub.f32 %v1708, 0.5
        %v1965 = vsub.f32 %v1709, 0.5
        %v1966 = vsub.f32 %v1710, 0.5
        %v1967 = vsub.f32 %v1711, 0.5
        %v1968 = vsub.f32 %v1712, 0.5
        %v1969 = vsub.f32 %v1713, 0.5
        %v1970 = vsub.f32 %v1714, 0.5
        %v1971 = vsub.f32 %v1715, 0.5
        %v1972 = vsub.f32 %v1716, 0.5
        %v1973 = vsub.f32 %v1717, 0.5
        %v1974 = vsub.f32 %v1718, 0.5
        %v1975 = vsub.f32 %v1719, 0.5
        %v1976 = vsub.f32 %v1720, 0.5
        %v1977 = vsub.f32 %v1721, 0.5
        %v1978 = vsub.f32 %v1722, 0.5
        %v1979 = vsub.f32 %v1723, 0.5
        %v1980 = vsub.f32 %v1724, 0.5
        %v1981 = vsub.f32 %v1725, 0.5
        %v1982 = vsub.f32 %v1726, 0.5
        %v1983 = vsub.f32 %v1727, 0.5
        %v1984 = vsub.f32 %v1728, 0.5
        %v1985 = vsub.f32 %v1729, 0.5
        %v1986 = vsub.f32 %v1730, 0.5
        %v1987 = vsub.f32 %v1731, 0.5
        %v1988 = vsub.f32 %v1732, 0.5
        %v1989 = vsub.f32 %v1733, 0.5
        %v1990 = vsub.f32 %v1734, 0.5
        %v1991 = vsub.f32 %v1735, 0.5
        %v1992 = vsub.f32 %v1736, 0.5
        %v1993 = vsub.f32 %v1737, 0.5
        %v1994 = vsub.f32 %v1738, 0.5
        %v1995 = vsub.f32 %v1739, 0.5
        %v1996 = vsub.f32 %v1740, 0.5
        %v1997 = vsub.f32 %v1741, 0.5
        %v1998 = vsub.f32 %v1742, 0.5
        %v1999 = vsub.f32 %v1743, 0.5
        %v2000 = vsub.f32 %v1744, 0.5
        %v2001 = vsub.f32 %v1745, 0.5
        %v2002 = vsub.f32 %v1746, 0.5
        %v2003 = vsub.f32 %v1747, 0.5
        %v2004 = vsub.f32 %v1748, 0.5
        %v2005 = vsub.f32 %v1749, 0.5
        %v2006 = vsub.f32 %v1750, 0.5
        %v2007 = vsub.f32 %v1751, 0.5
        %v2008 = vsub.f32 %v1752, 0.5
        %v2009 = vsub.f32 %v1753, 0.5
        %v2010 = vsub.f32 %v1754, 0.5
        %v2011 = vsub.f32 %v1755, 0.5
        %v2012 = vsub.f32 %v1756, 0.5
        %v2013 = vsub.f32 %v1757, 0.5
        %v2014 = vsub.f32 %v1758, 0.5
        %v2015 = vsub.f32 %v1759, 0.5
        %v2016 = vsub.f32 %v1760, 0.5
        %v2017 = vsub.f32 %v1761, 0.5
        %v2018 = vsub.f32 %v1762, 0.5
        %v2019 = vsub.f32 %v1763, 0.5
        %v2020 = vsub.f32 %v1764, 0.5
        %v2021 = vsub.f32 %v1765, 0.5
        %v2022 = vsub.f32 %v1766, 0.5
        %v2023 = vsub.f32 %v1767, 0.5
        %v2024 = vsub.f32 %v1768, 0.5
        %v2025 = vsub.f32 %v1769, 0.5
        %v2026 = vsub.f32 %v1770, 0.5
        %v2027 = vsub.f32 %v1771, 0.5
        %v2028 = vsub.f32 %v1772, 0.5
        %v2029 = vsub.f32 %v1773, 0.5
        %v2030 = vsub.f32 %v1774, 0.5
        %v2031 = vsub.f32 %v1775, 0.5
        %v2032 = vsub.f32 %v1776, 0.5
        %v2033 = vsub.f32 %v1777, 0.5
        %v2034 = vsub.f32 %v1778, 0.5
        %v2035 = vsub.f32 %v1779, 0.5
        %v2036 = vsub.f32 %v1780, 0.5
        %v2037 = vsub.f32 %v1781, 0.5
        %v2038 = vsub.f32 %v1782, 0.5
        %v2039 = vsub.f32 %v1783, 0.5
        %v2040 = vsub.f32 %v1784, 0.5
        %v2041 = vsub.f32 %v1785, 0.5
        %v2042 = vsub.f32 %v1786, 0.5
        %v2043 = vsub.f32 %v1787, 0.5
        %v2044 = vsub.f32 %v1788, 0.5
        %v2045 = vsub.f32 %v1789, 0.5
        %v2046 = vsub.f32 %v1790, 0.5
        %v2047 = vsub.f32 %v1791, 0.5
        %v2048 = vsub.f32 %v1792, 0.5
        %v2049 = vsub.f32 %v1793, 0.5
        %v2050 = vsub.f32 %v1794, 0.5
        %v2051 = vsub.f32 %v1795, 0.5
        %v2052 = vsub.f32 %v1796, 0.5
        %v2053 = vsub.f32 %v1797, 0.5
        %v2054 = vsub.f32 %v1798, 0.5
        %v2055 = vsub.f32 %v1799, 0.5
        %v2056 = vsub.f32 %v1800, 0.5
        %v2057 = vsub.f32 %v1801, 0.5
        %v2058 = vsub.f32 %v1802, 0.5
        %v2059 = vsub.f32 %v1803, 0.5
        %v2060 = vsub.f32 %v1804, 0.5
        %v2061 = vsub.f32 %v1805, 0.5
        %v2062 = vsub.f32 %v1806, 0.5
        %v2063 = vsub.f32 %v1807, 0.5
        %v2064 = vsub.f32 %v1808, 0.5
        %v2065 = vsub.f32 %v1809, 0.5
        %v2066 = vsub.f32 %v1810, 0.5
        %v2067 = vsub.f32 %v1811, 0.5
        %v2068 = vsub.f32 %v1812, 0.5
        %v2069 = vsub.f32 %v1813, 0.5
        %v2070 = vsub.f32 %v1814, 0.5
        %v2071 = vsub.f32 %v1815, 0.5
        %v2072 = vsub.f32 %v1816, 0.5
        %v2073 = vsub.f32 %v1817, 0.5
        %v2074 = vsub.f32 %v1818, 0.5
        %v2075 = vsub.f32 %v1819, 0.5
        %v2076 = vsub.f32 %v1820, 0.5
        %v2077 = vsub.f32 %v1821, 0.5
        %v2078 = vsub.f32 %v1822, 0.5
        %v2079 = vsub.f32 %v1823, 0.5
        %v2080 = vsub.f32 %v1824, 0.5
        %v2081 = vsub.f32 %v1825, 0.5
        %v2082 = vsub.f32 %v1826, 0.5
        %v2083 = vsub.f32 %v1827, 0.5
        %v2084 = vsub.f32 %v1828, 0.5
        %v2085 = vsub.f32 %v1829, 0.5
        %v2086 = vsub.f32 %v1830, 0.5
        %v2087 = vsub.f32 %v1831, 0.5
        %v2088 = vsub.f32 %v1832, 0.5
        %v2089 = vsub.f32 %v1833, 0.5
        %v2090 = vsub.f32 %v1834, 0.5
        %v2091 = vsub.f32 %v1835, 0.5
        %v2092 = vsub.f32 %v1836, 0.5
        %v2093 = vsub.f32 %v1837, 0.5
        %v2094 = vsub.f32 %v1838, 0.5
        %v2095 = vsub.f32 %v1839, 0.5
        %v2096 = vsub.f32 %v1840, 0.5
        %v2097 = vsub.f32 %v1841, 0.5
        %v2098 = vsub.f32 %v1842, 0.5
        %v2099 = vsub.f32 %v1843, 0.5
        %v2100 = vsub.f32 %v1844, 0.5
        %v2101 = vsub.f32 %v1845, 0.5
        %v2102 = vsub.f32 %v1846, 0.5
        %v2103 = vsub.f32 %v1847, 0.5
        %v2104 = vsub.f32 %v1848, 0.5
        %v2105 = vsub.f32 %v1849, 0.5
        %v2106 = vsub.f32 %v1850, 0.5
        %v2107 = vsub.f32 %v1851, 0.5
        %v2108 = vsub.f32 %v1852, 0.5
        %v2109 = vsub.f32 %v1853, 0.5
        %v2110 = vsub.f32 %v1854, 0.5
        %v2111 = vsub.f32 %v1855, 0.5
        %v2112 = vsub.f32 %v1856, 0.5
        %v2113 = vsub.f32 %v1857, 0.5
        %v2114 = vsub.f32 %v1858, 0.5
        %v2115 = vsub.f32 %v1859, 0.5
        %v2116 = vsub.f32 %v1860, 0.5
        %v2117 = vsub.f32 %v1861, 0.5
        %v2118 = vsub.f32 %v1862, 0.5
        %v2119 = vsub.f32 %v1863, 0.5
        %v2120 = vsub.f32 %v1864, 0.5
        %v2121 = vsub.f32 %v1865, 0.5
        %v2122 = vsub.f32 %v1866, 0.5
        %v2123 = vsub.f32 %v1867, 0.5
        %v2124 = vsub.f32 %v1868, 0.5
        %v2125 = vsub.f32 %v1869, 0.5
        %v2126 = vsub.f32 %v1870, 0.5
        %v2127 = vsub.f32 %v1871, 0.5
        %v2128 = vsub.f32 %v1872, 0.5
        %v2129 = vsub.f32 %v1873, 0.5
        %v2130 = vsub.f32 %v1874, 0.5
        %v2131 = vsub.f32 %v1875, 0.5
        %v2132 = vsub.f32 %v1876, 0.5
        %v2133 = vsub.f32 %v1877, 0.5
        %v2134 = vsub.f32 %v1878, 0.5
        %v2135 = vsub.f32 %v1879, 0.5
        %v2136 = vsub.f32 %v1880, 0.5
        %v2137 = vsub.f32 %v1881, 0.5
        %v2138 = vsub.f32 %v1882, 0.5
        %v2139 = vsub.f32 %v1883, 0.5
        %v2140 = vsub.f32 %v1884, 0.5
        %v2141 = vsub.f32 %v1885, 0.5
        %v2142 = vsub.f32 %v1886, 0.5
        %v2143 = vsub.f32 %v1887, 0.5
        %v2144 = vsub.f32 %v1888, 0.5
        %v2145 = vsub.f32 %v1889, 0.5
        %v2146 = vsub.f32 %v1890, 0.5
        %v2147 = vsub.f32 %v1891, 0.5
        %v2148 = vsub.f32 %v1892, 0.5
        %v2149 = vsub.f32 %v1893, 0.5
        %v2150 = vsub.f32 %v1894, 0.5
        %v2151 = vsub.f32 %v1895, 0.5
        %v2152 = vsub.f32 %v1896, 0.5
        %v2153 = vsub.f32 %v1897, 0.5
        %v2154 = vsub.f32 %v1898, 0.5
        %v2155 = vsub.f32 %v1899, 0.5
        %v2156 = vsub.f32 %v1900, 0.5
        %v2157 = vsub.f32 %v1901, 0.5
        %v2158 = vsub.f32 %v1902, 0.5
        %v2159 = vsub.f32 %v1903, 0.5
        %v2160 = vsub.f32 %v1904, 0.5
        %v2161 = vsub.f32 %v1905, 0.5
        %v2162 = vsub.f32 %v1906, 0.5
        %v2163 = vsub.f32 %v1907, 0.5
        %v2164 = vsub.f32 %v1908, 0.5
        %v2165 = vsub.f32 %v1909, 0.5
        %v2166 = vsub.f32 %v1910, 0.5
        %v2167 = vsub.f32 %v1911, 0.5
        %v2168 = vsub.f32 %v1912, 0.5
        %v2169 = vsub.f32 %v1913, 0.5
        %v2170 = vsub.f32 %v1914, 0.5
        %v2171 = vsub.f32 %v1915, 0.5
        %v2172 = vsub.f32 %v1916, 0.5
        %v2173 = vsub.f32 %v1917, 0.5
        %v2174 = vsub.f32 %v1918, 0.5
        %v2175 = vsub.f32 %v1919, 0.5
        %v2176 = vsub.f32 %v1920, 0.5
        %v2177 = vsub.f32 %v1921, 0.5
        %v2178 = vsub.f32 %v1154, %v642
        %v2179 = vsub.f32 %v1155, %v643
        %v2180 = vsub.f32 %v1156, %v644
        %v2181 = vsub.f32 %v1157, %v645
        %v2182 = vsub.f32 %v1158, %v646
        %v2183 = vsub.f32 %v1159, %v647
        %v2184 = vsub.f32 %v1160, %v648
        %v2185 = vsub.f32 %v1161, %v649
        %v2186 = vsub.f32 %v1162, %v650
        %v2187 = vsub.f32 %v1163, %v651
        %v2188 = vsub.f32 %v1164, %v652
        %v2189 = vsub.f32 %v1165, %v653
        %v2190 = vsub.f32 %v1166, %v654
        %v2191 = vsub.f32 %v1167, %v655
        %v2192 = vsub.f32 %v1168, %v656
        %v2193 = vsub.f32 %v1169, %v657
        %v2194 = vsub.f32 %v1170, %v658
        %v2195 = vsub.f32 %v1171, %v659
        %v2196 = vsub.f32 %v1172, %v660
        %v2197 = vsub.f32 %v1173, %v661
        %v2198 = vsub.f32 %v1174, %v662
        %v2199 = vsub.f32 %v1175, %v663
        %v2200 = vsub.f32 %v1176, %v664
        %v2201 = vsub.f32 %v1177, %v665
        %v2202 = vsub.f32 %v1178, %v666
        %v2203 = vsub.f32 %v1179, %v667
        %v2204 = vsub.f32 %v1180, %v668
        %v2205 = vsub.f32 %v1181, %v669
        %v2206 = vsub.f32 %v1182, %v670
        %v2207 = vsub.f32 %v1183, %v671
        %v2208 = vsub.f32 %v1184, %v672
        %v2209 = vsub.f32 %v1185, %v673
        %v2210 = vsub.f32 %v1186, %v674
        %v2211 = vsub.f32 %v1187, %v675
        %v2212 = vsub.f32 %v1188, %v676
        %v2213 = vsub.f32 %v1189, %v677
        %v2214 = vsub.f32 %v1190, %v678
        %v2215 = vsub.f32 %v1191, %v679
        %v2216 = vsub.f32 %v1192, %v680
        %v2217 = vsub.f32 %v1193, %v681
        %v2218 = vsub.f32 %v1194, %v682
        %v2219 = vsub.f32 %v1195, %v683
        %v2220 = vsub.f32 %v1196, %v684
        %v2221 = vsub.f32 %v1197, %v685
        %v2222 = vsub.f32 %v1198, %v686
        %v2223 = vsub.f32 %v1199, %v687
        %v2224 = vsub.f32 %v1200, %v688
        %v2225 = vsub.f32 %v1201, %v689
        %v2226 = vsub.f32 %v1202, %v690
        %v2227 = vsub.f32 %v1203, %v691
        %v2228 = vsub.f32 %v1204, %v692
        %v2229 = vsub.f32 %v1205, %v693
        %v2230 = vsub.f32 %v1206, %v694
        %v2231 = vsub.f32 %v1207, %v695
        %v2232 = vsub.f32 %v1208, %v696
        %v2233 = vsub.f32 %v1209, %v697
        %v2234 = vsub.f32 %v1210, %v698
        %v2235 = vsub.f32 %v1211, %v699
        %v2236 = vsub.f32 %v1212, %v700
        %v2237 = vsub.f32 %v1213, %v701
        %v2238 = vsub.f32 %v1214, %v702
        %v2239 = vsub.f32 %v1215, %v703
        %v2240 = vsub.f32 %v1216, %v704
        %v2241 = vsub.f32 %v1217, %v705
        %v2242 = vsub.f32 %v1218, %v706
        %v2243 = vsub.f32 %v1219, %v707
        %v2244 = vsub.f32 %v1220, %v708
        %v2245 = vsub.f32 %v1221, %v709
        %v2246 = vsub.f32 %v1222, %v710
        %v2247 = vsub.f32 %v1223, %v711
        %v2248 = vsub.f32 %v1224, %v712
        %v2249 = vsub.f32 %v1225, %v713
        %v2250 = vsub.f32 %v1226, %v714
        %v2251 = vsub.f32 %v1227, %v715
        %v2252 = vsub.f32 %v1228, %v716
        %v2253 = vsub.f32 %v1229, %v717
        %v2254 = vsub.f32 %v1230, %v718
        %v2255 = vsub.f32 %v1231, %v719
        %v2256 = vsub.f32 %v1232, %v720
        %v2257 = vsub.f32 %v1233, %v721
        %v2258 = vsub.f32 %v1234, %v722
        %v2259 = vsub.f32 %v1235, %v723
        %v2260 = vsub.f32 %v1236, %v724
        %v2261 = vsub.f32 %v1237, %v725
        %v2262 = vsub.f32 %v1238, %v726
        %v2263 = vsub.f32 %v1239, %v727
        %v2264 = vsub.f32 %v1240, %v728
        %v2265 = vsub.f32 %v1241, %v729
        %v2266 = vsub.f32 %v1242, %v730
        %v2267 = vsub.f32 %v1243, %v731
        %v2268 = vsub.f32 %v1244, %v732
        %v2269 = vsub.f32 %v1245, %v733
        %v2270 = vsub.f32 %v1246, %v734
        %v2271 = vsub.f32 %v1247, %v735
        %v2272 = vsub.f32 %v1248, %v736
        %v2273 = vsub.f32 %v1249, %v737
        %v2274 = vsub.f32 %v1250, %v738
        %v2275 = vsub.f32 %v1251, %v739
        %v2276 = vsub.f32 %v1252, %v740
        %v2277 = vsub.f32 %v1253, %v741
        %v2278 = vsub.f32 %v1254, %v742
        %v2279 = vsub.f32 %v1255, %v743
        %v2280 = vsub.f32 %v1256, %v744
        %v2281 = vsub.f32 %v1257, %v745
        %v2282 = vsub.f32 %v1258, %v746
        %v2283 = vsub.f32 %v1259, %v747
        %v2284 = vsub.f32 %v1260, %v748
        %v2285 = vsub.f32 %v1261, %v749
        %v2286 = vsub.f32 %v1262, %v750
        %v2287 = vsub.f32 %v1263, %v751
        %v2288 = vsub.f32 %v1264, %v752
        %v2289 = vsub.f32 %v1265, %v753
        %v2290 = vsub.f32 %v1266, %v754
        %v2291 = vsub.f32 %v1267, %v755
        %v2292 = vsub.f32 %v1268, %v756
        %v2293 = vsub.f32 %v1269, %v757
        %v2294 = vsub.f32 %v1270, %v758
        %v2295 = vsub.f32 %v1271, %v759
        %v2296 = vsub.f32 %v1272, %v760
        %v2297 = vsub.f32 %v1273, %v761
        %v2298 = vsub.f32 %v1274, %v762
        %v2299 = vsub.f32 %v1275, %v763
        %v2300 = vsub.f32 %v1276, %v764
        %v2301 = vsub.f32 %v1277, %v765
        %v2302 = vsub.f32 %v1278, %v766
        %v2303 = vsub.f32 %v1279, %v767
        %v2304 = vsub.f32 %v1280, %v768
        %v2305 = vsub.f32 %v1281, %v769
        %v2306 = vsub.f32 %v1282, %v770
        %v2307 = vsub.f32 %v1283, %v771
        %v2308 = vsub.f32 %v1284, %v772
        %v2309 = vsub.f32 %v1285, %v773
        %v2310 = vsub.f32 %v1286, %v774
        %v2311 = vsub.f32 %v1287, %v775
        %v2312 = vsub.f32 %v1288, %v776
        %v2313 = vsub.f32 %v1289, %v777
        %v2314 = vsub.f32 %v1290, %v778
        %v2315 = vsub.f32 %v1291, %v779
        %v2316 = vsub.f32 %v1292, %v780
        %v2317 = vsub.f32 %v1293, %v781
        %v2318 = vsub.f32 %v1294, %v782
        %v2319 = vsub.f32 %v1295, %v783
        %v2320 = vsub.f32 %v1296, %v784
        %v2321 = vsub.f32 %v1297, %v785
        %v2322 = vsub.f32 %v1298, %v786
        %v2323 = vsub.f32 %v1299, %v787
        %v2324 = vsub.f32 %v1300, %v788
        %v2325 = vsub.f32 %v1301, %v789
        %v2326 = vsub.f32 %v1302, %v790
        %v2327 = vsub.f32 %v1303, %v791
        %v2328 = vsub.f32 %v1304, %v792
        %v2329 = vsub.f32 %v1305, %v793
        %v2330 = vsub.f32 %v1306, %v794
        %v2331 = vsub.f32 %v1307, %v795
        %v2332 = vsub.f32 %v1308, %v796
        %v2333 = vsub.f32 %v1309, %v797
        %v2334 = vsub.f32 %v1310, %v798
        %v2335 = vsub.f32 %v1311, %v799
        %v2336 = vsub.f32 %v1312, %v800
        %v2337 = vsub.f32 %v1313, %v801
        %v2338 = vsub.f32 %v1314, %v802
        %v2339 = vsub.f32 %v1315, %v803
        %v2340 = vsub.f32 %v1316, %v804
        %v2341 = vsub.f32 %v1317, %v805
        %v2342 = vsub.f32 %v1318, %v806
        %v2343 = vsub.f32 %v1319, %v807
        %v2344 = vsub.f32 %v1320, %v808
        %v2345 = vsub.f32 %v1321, %v809
        %v2346 = vsub.f32 %v1322, %v810
        %v2347 = vsub.f32 %v1323, %v811
        %v2348 = vsub.f32 %v1324, %v812
        %v2349 = vsub.f32 %v1325, %v813
        %v2350 = vsub.f32 %v1326, %v814
        %v2351 = vsub.f32 %v1327, %v815
        %v2352 = vsub.f32 %v1328, %v816
        %v2353 = vsub.f32 %v1329, %v817
        %v2354 = vsub.f32 %v1330, %v818
        %v2355 = vsub.f32 %v1331, %v819
        %v2356 = vsub.f32 %v1332, %v820
        %v2357 = vsub.f32 %v1333, %v821
        %v2358 = vsub.f32 %v1334, %v822
        %v2359 = vsub.f32 %v1335, %v823
        %v2360 = vsub.f32 %v1336, %v824
        %v2361 = vsub.f32 %v1337, %v825
        %v2362 = vsub.f32 %v1338, %v826
        %v2363 = vsub.f32 %v1339, %v827
        %v2364 = vsub.f32 %v1340, %v828
        %v2365 = vsub.f32 %v1341, %v829
        %v2366 = vsub.f32 %v1342, %v830
        %v2367 = vsub.f32 %v1343, %v831
        %v2368 = vsub.f32 %v1344, %v832
        %v2369 = vsub.f32 %v1345, %v833
        %v2370 = vsub.f32 %v1346, %v834
        %v2371 = vsub.f32 %v1347, %v835
        %v2372 = vsub.f32 %v1348, %v836
        %v2373 = vsub.f32 %v1349, %v837
        %v2374 = vsub.f32 %v1350, %v838
        %v2375 = vsub.f32 %v1351, %v839
        %v2376 = vsub.f32 %v1352, %v840
        %v2377 = vsub.f32 %v1353, %v841
        %v2378 = vsub.f32 %v1354, %v842
        %v2379 = vsub.f32 %v1355, %v843
        %v2380 = vsub.f32 %v1356, %v844
        %v2381 = vsub.f32 %v1357, %v845
        %v2382 = vsub.f32 %v1358, %v846
        %v2383 = vsub.f32 %v1359, %v847
        %v2384 = vsub.f32 %v1360, %v848
        %v2385 = vsub.f32 %v1361, %v849
        %v2386 = vsub.f32 %v1362, %v850
        %v2387 = vsub.f32 %v1363, %v851
        %v2388 = vsub.f32 %v1364, %v852
        %v2389 = vsub.f32 %v1365, %v853
        %v2390 = vsub.f32 %v1366, %v854
        %v2391 = vsub.f32 %v1367, %v855
        %v2392 = vsub.f32 %v1368, %v856
        %v2393 = vsub.f32 %v1369, %v857
        %v2394 = vsub.f32 %v1370, %v858
        %v2395 = vsub.f32 %v1371, %v859
        %v2396 = vsub.f32 %v1372, %v860
        %v2397 = vsub.f32 %v1373, %v861
        %v2398 = vsub.f32 %v1374, %v862
        %v2399 = vsub.f32 %v1375, %v863
        %v2400 = vsub.f32 %v1376, %v864
        %v2401 = vsub.f32 %v1377, %v865
        %v2402 = vsub.f32 %v1378, %v866
        %v2403 = vsub.f32 %v1379, %v867
        %v2404 = vsub.f32 %v1380, %v868
        %v2405 = vsub.f32 %v1381, %v869
        %v2406 = vsub.f32 %v1382, %v870
        %v2407 = vsub.f32 %v1383, %v871
        %v2408 = vsub.f32 %v1384, %v872
        %v2409 = vsub.f32 %v1385, %v873
        %v2410 = vsub.f32 %v1386, %v874
        %v2411 = vsub.f32 %v1387, %v875
        %v2412 = vsub.f32 %v1388, %v876
        %v2413 = vsub.f32 %v1389, %v877
        %v2414 = vsub.f32 %v1390, %v878
        %v2415 = vsub.f32 %v1391, %v879
        %v2416 = vsub.f32 %v1392, %v880
        %v2417 = vsub.f32 %v1393, %v881
        %v2418 = vsub.f32 %v1394, %v882
        %v2419 = vsub.f32 %v1395, %v883
        %v2420 = vsub.f32 %v1396, %v884
        %v2421 = vsub.f32 %v1397, %v885
        %v2422 = vsub.f32 %v1398, %v886
        %v2423 = vsub.f32 %v1399, %v887
        %v2424 = vsub.f32 %v1400, %v888
        %v2425 = vsub.f32 %v1401, %v889
        %v2426 = vsub.f32 %v1402, %v890
        %v2427 = vsub.f32 %v1403, %v891
        %v2428 = vsub.f32 %v1404, %v892
        %v2429 = vsub.f32 %v1405, %v893
        %v2430 = vsub.f32 %v1406, %v894
        %v2431 = vsub.f32 %v1407, %v895
        %v2432 = vsub.f32 %v1408, %v896
        %v2433 = vsub.f32 %v1409, %v897
        %v2434 = vmul.f32 %v2178, 2.0
        %v2435 = vmul.f32 %v2179, 2.0
        %v2436 = vmul.f32 %v2180, 2.0
        %v2437 = vmul.f32 %v2181, 2.0
        %v2438 = vmul.f32 %v2182, 2.0
        %v2439 = vmul.f32 %v2183, 2.0
        %v2440 = vmul.f32 %v2184, 2.0
        %v2441 = vmul.f32 %v2185, 2.0
        %v2442 = vmul.f32 %v2186, 2.0
        %v2443 = vmul.f32 %v2187, 2.0
        %v2444 = vmul.f32 %v2188, 2.0
        %v2445 = vmul.f32 %v2189, 2.0
        %v2446 = vmul.f32 %v2190, 2.0
        %v2447 = vmul.f32 %v2191, 2.0
        %v2448 = vmul.f32 %v2192, 2.0
        %v2449 = vmul.f32 %v2193, 2.0
        %v2450 = vmul.f32 %v2194, 2.0
        %v2451 = vmul.f32 %v2195, 2.0
        %v2452 = vmul.f32 %v2196, 2.0
        %v2453 = vmul.f32 %v2197, 2.0
        %v2454 = vmul.f32 %v2198, 2.0
        %v2455 = vmul.f32 %v2199, 2.0
        %v2456 = vmul.f32 %v2200, 2.0
        %v2457 = vmul.f32 %v2201, 2.0
        %v2458 = vmul.f32 %v2202, 2.0
        %v2459 = vmul.f32 %v2203, 2.0
        %v2460 = vmul.f32 %v2204, 2.0
        %v2461 = vmul.f32 %v2205, 2.0
        %v2462 = vmul.f32 %v2206, 2.0
        %v2463 = vmul.f32 %v2207, 2.0
        %v2464 = vmul.f32 %v2208, 2.0
        %v2465 = vmul.f32 %v2209, 2.0
        %v2466 = vmul.f32 %v2210, 2.0
        %v2467 = vmul.f32 %v2211, 2.0
        %v2468 = vmul.f32 %v2212, 2.0
        %v2469 = vmul.f32 %v2213, 2.0
        %v2470 = vmul.f32 %v2214, 2.0
        %v2471 = vmul.f32 %v2215, 2.0
        %v2472 = vmul.f32 %v2216, 2.0
        %v2473 = vmul.f32 %v2217, 2.0
        %v2474 = vmul.f32 %v2218, 2.0
        %v2475 = vmul.f32 %v2219, 2.0
        %v2476 = vmul.f32 %v2220, 2.0
        %v2477 = vmul.f32 %v2221, 2.0
        %v2478 = vmul.f32 %v2222, 2.0
        %v2479 = vmul.f32 %v2223, 2.0
        %v2480 = vmul.f32 %v2224, 2.0
        %v2481 = vmul.f32 %v2225, 2.0
        %v2482 = vmul.f32 %v2226, 2.0
        %v2483 = vmul.f32 %v2227, 2.0
        %v2484 = vmul.f32 %v2228, 2.0
        %v2485 = vmul.f32 %v2229, 2.0
        %v2486 = vmul.f32 %v2230, 2.0
        %v2487 = vmul.f32 %v2231, 2.0
        %v2488 = vmul.f32 %v2232, 2.0
        %v2489 = vmul.f32 %v2233, 2.0
        %v2490 = vmul.f32 %v2234, 2.0
        %v2491 = vmul.f32 %v2235, 2.0
        %v2492 = vmul.f32 %v2236, 2.0
        %v2493 = vmul.f32 %v2237, 2.0
        %v2494 = vmul.f32 %v2238, 2.0
        %v2495 = vmul.f32 %v2239, 2.0
        %v2496 = vmul.f32 %v2240, 2.0
        %v2497 = vmul.f32 %v2241, 2.0
        %v2498 = vmul.f32 %v2242, 2.0
        %v2499 = vmul.f32 %v2243, 2.0
        %v2500 = vmul.f32 %v2244, 2.0
        %v2501 = vmul.f32 %v2245, 2.0
        %v2502 = vmul.f32 %v2246, 2.0
        %v2503 = vmul.f32 %v2247, 2.0
        %v2504 = vmul.f32 %v2248, 2.0
        %v2505 = vmul.f32 %v2249, 2.0
        %v2506 = vmul.f32 %v2250, 2.0
        %v2507 = vmul.f32 %v2251, 2.0
        %v2508 = vmul.f32 %v2252, 2.0
        %v2509 = vmul.f32 %v2253, 2.0
        %v2510 = vmul.f32 %v2254, 2.0
        %v2511 = vmul.f32 %v2255, 2.0
        %v2512 = vmul.f32 %v2256, 2.0
        %v2513 = vmul.f32 %v2257, 2.0
        %v2514 = vmul.f32 %v2258, 2.0
        %v2515 = vmul.f32 %v2259, 2.0
        %v2516 = vmul.f32 %v2260, 2.0
        %v2517 = vmul.f32 %v2261, 2.0
        %v2518 = vmul.f32 %v2262, 2.0
        %v2519 = vmul.f32 %v2263, 2.0
        %v2520 = vmul.f32 %v2264, 2.0
        %v2521 = vmul.f32 %v2265, 2.0
        %v2522 = vmul.f32 %v2266, 2.0
        %v2523 = vmul.f32 %v2267, 2.0
        %v2524 = vmul.f32 %v2268, 2.0
        %v2525 = vmul.f32 %v2269, 2.0
        %v2526 = vmul.f32 %v2270, 2.0
        %v2527 = vmul.f32 %v2271, 2.0
        %v2528 = vmul.f32 %v2272, 2.0
        %v2529 = vmul.f32 %v2273, 2.0
        %v2530 = vmul.f32 %v2274, 2.0
        %v2531 = vmul.f32 %v2275, 2.0
        %v2532 = vmul.f32 %v2276, 2.0
        %v2533 = vmul.f32 %v2277, 2.0
        %v2534 = vmul.f32 %v2278, 2.0
        %v2535 = vmul.f32 %v2279, 2.0
        %v2536 = vmul.f32 %v2280, 2.0
        %v2537 = vmul.f32 %v2281, 2.0
        %v2538 = vmul.f32 %v2282, 2.0
        %v2539 = vmul.f32 %v2283, 2.0
        %v2540 = vmul.f32 %v2284, 2.0
        %v2541 = vmul.f32 %v2285, 2.0
        %v2542 = vmul.f32 %v2286, 2.0
        %v2543 = vmul.f32 %v2287, 2.0
        %v2544 = vmul.f32 %v2288, 2.0
        %v2545 = vmul.f32 %v2289, 2.0
        %v2546 = vmul.f32 %v2290, 2.0
        %v2547 = vmul.f32 %v2291, 2.0
        %v2548 = vmul.f32 %v2292, 2.0
        %v2549 = vmul.f32 %v2293, 2.0
        %v2550 = vmul.f32 %v2294, 2.0
        %v2551 = vmul.f32 %v2295, 2.0
        %v2552 = vmul.f32 %v2296, 2.0
        %v2553 = vmul.f32 %v2297, 2.0
        %v2554 = vmul.f32 %v2298, 2.0
        %v2555 = vmul.f32 %v2299, 2.0
        %v2556 = vmul.f32 %v2300, 2.0
        %v2557 = vmul.f32 %v2301, 2.0
        %v2558 = vmul.f32 %v2302, 2.0
        %v2559 = vmul.f32 %v2303, 2.0
        %v2560 = vmul.f32 %v2304, 2.0
        %v2561 = vmul.f32 %v2305, 2.0
        %v2562 = vmul.f32 %v2306, 2.0
        %v2563 = vmul.f32 %v2307, 2.0
        %v2564 = vmul.f32 %v2308, 2.0
        %v2565 = vmul.f32 %v2309, 2.0
        %v2566 = vmul.f32 %v2310, 2.0
        %v2567 = vmul.f32 %v2311, 2.0
        %v2568 = vmul.f32 %v2312, 2.0
        %v2569 = vmul.f32 %v2313, 2.0
        %v2570 = vmul.f32 %v2314, 2.0
        %v2571 = vmul.f32 %v2315, 2.0
        %v2572 = vmul.f32 %v2316, 2.0
        %v2573 = vmul.f32 %v2317, 2.0
        %v2574 = vmul.f32 %v2318, 2.0
        %v2575 = vmul.f32 %v2319, 2.0
        %v2576 = vmul.f32 %v2320, 2.0
        %v2577 = vmul.f32 %v2321, 2.0
        %v2578 = vmul.f32 %v2322, 2.0
        %v2579 = vmul.f32 %v2323, 2.0
        %v2580 = vmul.f32 %v2324, 2.0
        %v2581 = vmul.f32 %v2325, 2.0
        %v2582 = vmul.f32 %v2326, 2.0
        %v2583 = vmul.f32 %v2327, 2.0
        %v2584 = vmul.f32 %v2328, 2.0
        %v2585 = vmul.f32 %v2329, 2.0
        %v2586 = vmul.f32 %v2330, 2.0
        %v2587 = vmul.f32 %v2331, 2.0
        %v2588 = vmul.f32 %v2332, 2.0
        %v2589 = vmul.f32 %v2333, 2.0
        %v2590 = vmul.f32 %v2334, 2.0
        %v2591 = vmul.f32 %v2335, 2.0
        %v2592 = vmul.f32 %v2336, 2.0
        %v2593 = vmul.f32 %v2337, 2.0
        %v2594 = vmul.f32 %v2338, 2.0
        %v2595 = vmul.f32 %v2339, 2.0
        %v2596 = vmul.f32 %v2340, 2.0
        %v2597 = vmul.f32 %v2341, 2.0
        %v2598 = vmul.f32 %v2342, 2.0
        %v2599 = vmul.f32 %v2343, 2.0
        %v2600 = vmul.f32 %v2344, 2.0
        %v2601 = vmul.f32 %v2345, 2.0
        %v2602 = vmul.f32 %v2346, 2.0
        %v2603 = vmul.f32 %v2347, 2.0
        %v2604 = vmul.f32 %v2348, 2.0
        %v2605 = vmul.f32 %v2349, 2.0
        %v2606 = vmul.f32 %v2350, 2.0
        %v2607 = vmul.f32 %v2351, 2.0
        %v2608 = vmul.f32 %v2352, 2.0
        %v2609 = vmul.f32 %v2353, 2.0
        %v2610 = vmul.f32 %v2354, 2.0
        %v2611 = vmul.f32 %v2355, 2.0
        %v2612 = vmul.f32 %v2356, 2.0
        %v2613 = vmul.f32 %v2357, 2.0
        %v2614 = vmul.f32 %v2358, 2.0
        %v2615 = vmul.f32 %v2359, 2.0
        %v2616 = vmul.f32 %v2360, 2.0
        %v2617 = vmul.f32 %v2361, 2.0
        %v2618 = vmul.f32 %v2362, 2.0
        %v2619 = vmul.f32 %v2363, 2.0
        %v2620 = vmul.f32 %v2364, 2.0
        %v2621 = vmul.f32 %v2365, 2.0
        %v2622 = vmul.f32 %v2366, 2.0
        %v2623 = vmul.f32 %v2367, 2.0
        %v2624 = vmul.f32 %v2368, 2.0
        %v2625 = vmul.f32 %v2369, 2.0
        %v2626 = vmul.f32 %v2370, 2.0
        %v2627 = vmul.f32 %v2371, 2.0
        %v2628 = vmul.f32 %v2372, 2.0
        %v2629 = vmul.f32 %v2373, 2.0
        %v2630 = vmul.f32 %v2374, 2.0
        %v2631 = vmul.f32 %v2375, 2.0
        %v2632 = vmul.f32 %v2376, 2.0
        %v2633 = vmul.f32 %v2377, 2.0
        %v2634 = vmul.f32 %v2378, 2.0
        %v2635 = vmul.f32 %v2379, 2.0
        %v2636 = vmul.f32 %v2380, 2.0
        %v2637 = vmul.f32 %v2381, 2.0
        %v2638 = vmul.f32 %v2382, 2.0
        %v2639 = vmul.f32 %v2383, 2.0
        %v2640 = vmul.f32 %v2384, 2.0
        %v2641 = vmul.f32 %v2385, 2.0
        %v2642 = vmul.f32 %v2386, 2.0
        %v2643 = vmul.f32 %v2387, 2.0
        %v2644 = vmul.f32 %v2388, 2.0
        %v2645 = vmul.f32 %v2389, 2.0
        %v2646 = vmul.f32 %v2390, 2.0
        %v2647 = vmul.f32 %v2391, 2.0
        %v2648 = vmul.f32 %v2392, 2.0
        %v2649 = vmul.f32 %v2393, 2.0
        %v2650 = vmul.f32 %v2394, 2.0
        %v2651 = vmul.f32 %v2395, 2.0
        %v2652 = vmul.f32 %v2396, 2.0
        %v2653 = vmul.f32 %v2397, 2.0
        %v2654 = vmul.f32 %v2398, 2.0
        %v2655 = vmul.f32 %v2399, 2.0
        %v2656 = vmul.f32 %v2400, 2.0
        %v2657 = vmul.f32 %v2401, 2.0
        %v2658 = vmul.f32 %v2402, 2.0
        %v2659 = vmul.f32 %v2403, 2.0
        %v2660 = vmul.f32 %v2404, 2.0
        %v2661 = vmul.f32 %v2405, 2.0
        %v2662 = vmul.f32 %v2406, 2.0
        %v2663 = vmul.f32 %v2407, 2.0
        %v2664 = vmul.f32 %v2408, 2.0
        %v2665 = vmul.f32 %v2409, 2.0
        %v2666 = vmul.f32 %v2410, 2.0
        %v2667 = vmul.f32 %v2411, 2.0
        %v2668 = vmul.f32 %v2412, 2.0
        %v2669 = vmul.f32 %v2413, 2.0
        %v2670 = vmul.f32 %v2414, 2.0
        %v2671 = vmul.f32 %v2415, 2.0
        %v2672 = vmul.f32 %v2416, 2.0
        %v2673 = vmul.f32 %v2417, 2.0
        %v2674 = vmul.f32 %v2418, 2.0
        %v2675 = vmul.f32 %v2419, 2.0
        %v2676 = vmul.f32 %v2420, 2.0
        %v2677 = vmul.f32 %v2421, 2.0
        %v2678 = vmul.f32 %v2422, 2.0
        %v2679 = vmul.f32 %v2423, 2.0
        %v2680 = vmul.f32 %v2424, 2.0
        %v2681 = vmul.f32 %v2425, 2.0
        %v2682 = vmul.f32 %v2426, 2.0
        %v2683 = vmul.f32 %v2427, 2.0
        %v2684 = vmul.f32 %v2428, 2.0
        %v2685 = vmul.f32 %v2429, 2.0
        %v2686 = vmul.f32 %v2430, 2.0
        %v2687 = vmul.f32 %v2431, 2.0
        %v2688 = vmul.f32 %v2432, 2.0
        %v2689 = vmul.f32 %v2433, 2.0
        %v2690 = vmul.f32 %v2434, 1.442695
        %v2691 = vpow.pop %v2690
        %v2692 = vmul.f32 %v2435, 1.442695
        %v2693 = vpow.pop %v2692
        %v2694 = vmul.f32 %v2436, 1.442695
        %v2695 = vpow.pop %v2694
        %v2696 = vmul.f32 %v2437, 1.442695
        %v2697 = vpow.pop %v2696
        %v2698 = vmul.f32 %v2438, 1.442695
        %v2699 = vpow.pop %v2698
        %v2700 = vmul.f32 %v2439, 1.442695
        %v2701 = vpow.pop %v2700
        %v2702 = vmul.f32 %v2440, 1.442695
        %v2703 = vpow.pop %v2702
        %v2704 = vmul.f32 %v2441, 1.442695
        %v2705 = vpow.pop %v2704
        %v2706 = vmul.f32 %v2442, 1.442695
        %v2707 = vpow.pop %v2706
        %v2708 = vmul.f32 %v2443, 1.442695
        %v2709 = vpow.pop %v2708
        %v2710 = vmul.f32 %v2444, 1.442695
        %v2711 = vpow.pop %v2710
        %v2712 = vmul.f32 %v2445, 1.442695
        %v2713 = vpow.pop %v2712
        %v2714 = vmul.f32 %v2446, 1.442695
        %v2715 = vpow.pop %v2714
        %v2716 = vmul.f32 %v2447, 1.442695
        %v2717 = vpow.pop %v2716
        %v2718 = vmul.f32 %v2448, 1.442695
        %v2719 = vpow.pop %v2718
        %v2720 = vmul.f32 %v2449, 1.442695
        %v2721 = vpow.pop %v2720
        %v2722 = vmul.f32 %v2450, 1.442695
        %v2723 = vpow.pop %v2722
        %v2724 = vmul.f32 %v2451, 1.442695
        %v2725 = vpow.pop %v2724
        %v2726 = vmul.f32 %v2452, 1.442695
        %v2727 = vpow.pop %v2726
        %v2728 = vmul.f32 %v2453, 1.442695
        %v2729 = vpow.pop %v2728
        %v2730 = vmul.f32 %v2454, 1.442695
        %v2731 = vpow.pop %v2730
        %v2732 = vmul.f32 %v2455, 1.442695
        %v2733 = vpow.pop %v2732
        %v2734 = vmul.f32 %v2456, 1.442695
        %v2735 = vpow.pop %v2734
        %v2736 = vmul.f32 %v2457, 1.442695
        %v2737 = vpow.pop %v2736
        %v2738 = vmul.f32 %v2458, 1.442695
        %v2739 = vpow.pop %v2738
        %v2740 = vmul.f32 %v2459, 1.442695
        %v2741 = vpow.pop %v2740
        %v2742 = vmul.f32 %v2460, 1.442695
        %v2743 = vpow.pop %v2742
        %v2744 = vmul.f32 %v2461, 1.442695
        %v2745 = vpow.pop %v2744
        %v2746 = vmul.f32 %v2462, 1.442695
        %v2747 = vpow.pop %v2746
        %v2748 = vmul.f32 %v2463, 1.442695
        %v2749 = vpow.pop %v2748
        %v2750 = vmul.f32 %v2464, 1.442695
        %v2751 = vpow.pop %v2750
        %v2752 = vmul.f32 %v2465, 1.442695
        %v2753 = vpow.pop %v2752
        %v2754 = vmul.f32 %v2466, 1.442695
        %v2755 = vpow.pop %v2754
        %v2756 = vmul.f32 %v2467, 1.442695
        %v2757 = vpow.pop %v2756
        %v2758 = vmul.f32 %v2468, 1.442695
        %v2759 = vpow.pop %v2758
        %v2760 = vmul.f32 %v2469, 1.442695
        %v2761 = vpow.pop %v2760
        %v2762 = vmul.f32 %v2470, 1.442695
        %v2763 = vpow.pop %v2762
        %v2764 = vmul.f32 %v2471, 1.442695
        %v2765 = vpow.pop %v2764
        %v2766 = vmul.f32 %v2472, 1.442695
        %v2767 = vpow.pop %v2766
        %v2768 = vmul.f32 %v2473, 1.442695
        %v2769 = vpow.pop %v2768
        %v2770 = vmul.f32 %v2474, 1.442695
        %v2771 = vpow.pop %v2770
        %v2772 = vmul.f32 %v2475, 1.442695
        %v2773 = vpow.pop %v2772
        %v2774 = vmul.f32 %v2476, 1.442695
        %v2775 = vpow.pop %v2774
        %v2776 = vmul.f32 %v2477, 1.442695
        %v2777 = vpow.pop %v2776
        %v2778 = vmul.f32 %v2478, 1.442695
        %v2779 = vpow.pop %v2778
        %v2780 = vmul.f32 %v2479, 1.442695
        %v2781 = vpow.pop %v2780
        %v2782 = vmul.f32 %v2480, 1.442695
        %v2783 = vpow.pop %v2782
        %v2784 = vmul.f32 %v2481, 1.442695
        %v2785 = vpow.pop %v2784
        %v2786 = vmul.f32 %v2482, 1.442695
        %v2787 = vpow.pop %v2786
        %v2788 = vmul.f32 %v2483, 1.442695
        %v2789 = vpow.pop %v2788
        %v2790 = vmul.f32 %v2484, 1.442695
        %v2791 = vpow.pop %v2790
        %v2792 = vmul.f32 %v2485, 1.442695
        %v2793 = vpow.pop %v2792
        %v2794 = vmul.f32 %v2486, 1.442695
        %v2795 = vpow.pop %v2794
        %v2796 = vmul.f32 %v2487, 1.442695
        %v2797 = vpow.pop %v2796
        %v2798 = vmul.f32 %v2488, 1.442695
        %v2799 = vpow.pop %v2798
        %v2800 = vmul.f32 %v2489, 1.442695
        %v2801 = vpow.pop %v2800
        %v2802 = vmul.f32 %v2490, 1.442695
        %v2803 = vpow.pop %v2802
        %v2804 = vmul.f32 %v2491, 1.442695
        %v2805 = vpow.pop %v2804
        %v2806 = vmul.f32 %v2492, 1.442695
        %v2807 = vpow.pop %v2806
        %v2808 = vmul.f32 %v2493, 1.442695
        %v2809 = vpow.pop %v2808
        %v2810 = vmul.f32 %v2494, 1.442695
        %v2811 = vpow.pop %v2810
        %v2812 = vmul.f32 %v2495, 1.442695
        %v2813 = vpow.pop %v2812
        %v2814 = vmul.f32 %v2496, 1.442695
        %v2815 = vpow.pop %v2814
        %v2816 = vmul.f32 %v2497, 1.442695
        %v2817 = vpow.pop %v2816
        %v2818 = vmul.f32 %v2498, 1.442695
        %v2819 = vpow.pop %v2818
        %v2820 = vmul.f32 %v2499, 1.442695
        %v2821 = vpow.pop %v2820
        %v2822 = vmul.f32 %v2500, 1.442695
        %v2823 = vpow.pop %v2822
        %v2824 = vmul.f32 %v2501, 1.442695
        %v2825 = vpow.pop %v2824
        %v2826 = vmul.f32 %v2502, 1.442695
        %v2827 = vpow.pop %v2826
        %v2828 = vmul.f32 %v2503, 1.442695
        %v2829 = vpow.pop %v2828
        %v2830 = vmul.f32 %v2504, 1.442695
        %v2831 = vpow.pop %v2830
        %v2832 = vmul.f32 %v2505, 1.442695
        %v2833 = vpow.pop %v2832
        %v2834 = vmul.f32 %v2506, 1.442695
        %v2835 = vpow.pop %v2834
        %v2836 = vmul.f32 %v2507, 1.442695
        %v2837 = vpow.pop %v2836
        %v2838 = vmul.f32 %v2508, 1.442695
        %v2839 = vpow.pop %v2838
        %v2840 = vmul.f32 %v2509, 1.442695
        %v2841 = vpow.pop %v2840
        %v2842 = vmul.f32 %v2510, 1.442695
        %v2843 = vpow.pop %v2842
        %v2844 = vmul.f32 %v2511, 1.442695
        %v2845 = vpow.pop %v2844
        %v2846 = vmul.f32 %v2512, 1.442695
        %v2847 = vpow.pop %v2846
        %v2848 = vmul.f32 %v2513, 1.442695
        %v2849 = vpow.pop %v2848
        %v2850 = vmul.f32 %v2514, 1.442695
        %v2851 = vpow.pop %v2850
        %v2852 = vmul.f32 %v2515, 1.442695
        %v2853 = vpow.pop %v2852
        %v2854 = vmul.f32 %v2516, 1.442695
        %v2855 = vpow.pop %v2854
        %v2856 = vmul.f32 %v2517, 1.442695
        %v2857 = vpow.pop %v2856
        %v2858 = vmul.f32 %v2518, 1.442695
        %v2859 = vpow.pop %v2858
        %v2860 = vmul.f32 %v2519, 1.442695
        %v2861 = vpow.pop %v2860
        %v2862 = vmul.f32 %v2520, 1.442695
        %v2863 = vpow.pop %v2862
        %v2864 = vmul.f32 %v2521, 1.442695
        %v2865 = vpow.pop %v2864
        %v2866 = vmul.f32 %v2522, 1.442695
        %v2867 = vpow.pop %v2866
        %v2868 = vmul.f32 %v2523, 1.442695
        %v2869 = vpow.pop %v2868
        %v2870 = vmul.f32 %v2524, 1.442695
        %v2871 = vpow.pop %v2870
        %v2872 = vmul.f32 %v2525, 1.442695
        %v2873 = vpow.pop %v2872
        %v2874 = vmul.f32 %v2526, 1.442695
        %v2875 = vpow.pop %v2874
        %v2876 = vmul.f32 %v2527, 1.442695
        %v2877 = vpow.pop %v2876
        %v2878 = vmul.f32 %v2528, 1.442695
        %v2879 = vpow.pop %v2878
        %v2880 = vmul.f32 %v2529, 1.442695
        %v2881 = vpow.pop %v2880
        %v2882 = vmul.f32 %v2530, 1.442695
        %v2883 = vpow.pop %v2882
        %v2884 = vmul.f32 %v2531, 1.442695
        %v2885 = vpow.pop %v2884
        %v2886 = vmul.f32 %v2532, 1.442695
        %v2887 = vpow.pop %v2886
        %v2888 = vmul.f32 %v2533, 1.442695
        %v2889 = vpow.pop %v2888
        %v2890 = vmul.f32 %v2534, 1.442695
        %v2891 = vpow.pop %v2890
        %v2892 = vmul.f32 %v2535, 1.442695
        %v2893 = vpow.pop %v2892
        %v2894 = vmul.f32 %v2536, 1.442695
        %v2895 = vpow.pop %v2894
        %v2896 = vmul.f32 %v2537, 1.442695
        %v2897 = vpow.pop %v2896
        %v2898 = vmul.f32 %v2538, 1.442695
        %v2899 = vpow.pop %v2898
        %v2900 = vmul.f32 %v2539, 1.442695
        %v2901 = vpow.pop %v2900
        %v2902 = vmul.f32 %v2540, 1.442695
        %v2903 = vpow.pop %v2902
        %v2904 = vmul.f32 %v2541, 1.442695
        %v2905 = vpow.pop %v2904
        %v2906 = vmul.f32 %v2542, 1.442695
        %v2907 = vpow.pop %v2906
        %v2908 = vmul.f32 %v2543, 1.442695
        %v2909 = vpow.pop %v2908
        %v2910 = vmul.f32 %v2544, 1.442695
        %v2911 = vpow.pop %v2910
        %v2912 = vmul.f32 %v2545, 1.442695
        %v2913 = vpow.pop %v2912
        %v2914 = vmul.f32 %v2546, 1.442695
        %v2915 = vpow.pop %v2914
        %v2916 = vmul.f32 %v2547, 1.442695
        %v2917 = vpow.pop %v2916
        %v2918 = vmul.f32 %v2548, 1.442695
        %v2919 = vpow.pop %v2918
        %v2920 = vmul.f32 %v2549, 1.442695
        %v2921 = vpow.pop %v2920
        %v2922 = vmul.f32 %v2550, 1.442695
        %v2923 = vpow.pop %v2922
        %v2924 = vmul.f32 %v2551, 1.442695
        %v2925 = vpow.pop %v2924
        %v2926 = vmul.f32 %v2552, 1.442695
        %v2927 = vpow.pop %v2926
        %v2928 = vmul.f32 %v2553, 1.442695
        %v2929 = vpow.pop %v2928
        %v2930 = vmul.f32 %v2554, 1.442695
        %v2931 = vpow.pop %v2930
        %v2932 = vmul.f32 %v2555, 1.442695
        %v2933 = vpow.pop %v2932
        %v2934 = vmul.f32 %v2556, 1.442695
        %v2935 = vpow.pop %v2934
        %v2936 = vmul.f32 %v2557, 1.442695
        %v2937 = vpow.pop %v2936
        %v2938 = vmul.f32 %v2558, 1.442695
        %v2939 = vpow.pop %v2938
        %v2940 = vmul.f32 %v2559, 1.442695
        %v2941 = vpow.pop %v2940
        %v2942 = vmul.f32 %v2560, 1.442695
        %v2943 = vpow.pop %v2942
        %v2944 = vmul.f32 %v2561, 1.442695
        %v2945 = vpow.pop %v2944
        %v2946 = vmul.f32 %v2562, 1.442695
        %v2947 = vpow.pop %v2946
        %v2948 = vmul.f32 %v2563, 1.442695
        %v2949 = vpow.pop %v2948
        %v2950 = vmul.f32 %v2564, 1.442695
        %v2951 = vpow.pop %v2950
        %v2952 = vmul.f32 %v2565, 1.442695
        %v2953 = vpow.pop %v2952
        %v2954 = vmul.f32 %v2566, 1.442695
        %v2955 = vpow.pop %v2954
        %v2956 = vmul.f32 %v2567, 1.442695
        %v2957 = vpow.pop %v2956
        %v2958 = vmul.f32 %v2568, 1.442695
        %v2959 = vpow.pop %v2958
        %v2960 = vmul.f32 %v2569, 1.442695
        %v2961 = vpow.pop %v2960
        %v2962 = vmul.f32 %v2570, 1.442695
        %v2963 = vpow.pop %v2962
        %v2964 = vmul.f32 %v2571, 1.442695
        %v2965 = vpow.pop %v2964
        %v2966 = vmul.f32 %v2572, 1.442695
        %v2967 = vpow.pop %v2966
        %v2968 = vmul.f32 %v2573, 1.442695
        %v2969 = vpow.pop %v2968
        %v2970 = vmul.f32 %v2574, 1.442695
        %v2971 = vpow.pop %v2970
        %v2972 = vmul.f32 %v2575, 1.442695
        %v2973 = vpow.pop %v2972
        %v2974 = vmul.f32 %v2576, 1.442695
        %v2975 = vpow.pop %v2974
        %v2976 = vmul.f32 %v2577, 1.442695
        %v2977 = vpow.pop %v2976
        %v2978 = vmul.f32 %v2578, 1.442695
        %v2979 = vpow.pop %v2978
        %v2980 = vmul.f32 %v2579, 1.442695
        %v2981 = vpow.pop %v2980
        %v2982 = vmul.f32 %v2580, 1.442695
        %v2983 = vpow.pop %v2982
        %v2984 = vmul.f32 %v2581, 1.442695
        %v2985 = vpow.pop %v2984
        %v2986 = vmul.f32 %v2582, 1.442695
        %v2987 = vpow.pop %v2986
        %v2988 = vmul.f32 %v2583, 1.442695
        %v2989 = vpow.pop %v2988
        %v2990 = vmul.f32 %v2584, 1.442695
        %v2991 = vpow.pop %v2990
        %v2992 = vmul.f32 %v2585, 1.442695
        %v2993 = vpow.pop %v2992
        %v2994 = vmul.f32 %v2586, 1.442695
        %v2995 = vpow.pop %v2994
        %v2996 = vmul.f32 %v2587, 1.442695
        %v2997 = vpow.pop %v2996
        %v2998 = vmul.f32 %v2588, 1.442695
        %v2999 = vpow.pop %v2998
        %v3000 = vmul.f32 %v2589, 1.442695
        %v3001 = vpow.pop %v3000
        %v3002 = vmul.f32 %v2590, 1.442695
        %v3003 = vpow.pop %v3002
        %v3004 = vmul.f32 %v2591, 1.442695
        %v3005 = vpow.pop %v3004
        %v3006 = vmul.f32 %v2592, 1.442695
        %v3007 = vpow.pop %v3006
        %v3008 = vmul.f32 %v2593, 1.442695
        %v3009 = vpow.pop %v3008
        %v3010 = vmul.f32 %v2594, 1.442695
        %v3011 = vpow.pop %v3010
        %v3012 = vmul.f32 %v2595, 1.442695
        %v3013 = vpow.pop %v3012
        %v3014 = vmul.f32 %v2596, 1.442695
        %v3015 = vpow.pop %v3014
        %v3016 = vmul.f32 %v2597, 1.442695
        %v3017 = vpow.pop %v3016
        %v3018 = vmul.f32 %v2598, 1.442695
        %v3019 = vpow.pop %v3018
        %v3020 = vmul.f32 %v2599, 1.442695
        %v3021 = vpow.pop %v3020
        %v3022 = vmul.f32 %v2600, 1.442695
        %v3023 = vpow.pop %v3022
        %v3024 = vmul.f32 %v2601, 1.442695
        %v3025 = vpow.pop %v3024
        %v3026 = vmul.f32 %v2602, 1.442695
        %v3027 = vpow.pop %v3026
        %v3028 = vmul.f32 %v2603, 1.442695
        %v3029 = vpow.pop %v3028
        %v3030 = vmul.f32 %v2604, 1.442695
        %v3031 = vpow.pop %v3030
        %v3032 = vmul.f32 %v2605, 1.442695
        %v3033 = vpow.pop %v3032
        %v3034 = vmul.f32 %v2606, 1.442695
        %v3035 = vpow.pop %v3034
        %v3036 = vmul.f32 %v2607, 1.442695
        %v3037 = vpow.pop %v3036
        %v3038 = vmul.f32 %v2608, 1.442695
        %v3039 = vpow.pop %v3038
        %v3040 = vmul.f32 %v2609, 1.442695
        %v3041 = vpow.pop %v3040
        %v3042 = vmul.f32 %v2610, 1.442695
        %v3043 = vpow.pop %v3042
        %v3044 = vmul.f32 %v2611, 1.442695
        %v3045 = vpow.pop %v3044
        %v3046 = vmul.f32 %v2612, 1.442695
        %v3047 = vpow.pop %v3046
        %v3048 = vmul.f32 %v2613, 1.442695
        %v3049 = vpow.pop %v3048
        %v3050 = vmul.f32 %v2614, 1.442695
        %v3051 = vpow.pop %v3050
        %v3052 = vmul.f32 %v2615, 1.442695
        %v3053 = vpow.pop %v3052
        %v3054 = vmul.f32 %v2616, 1.442695
        %v3055 = vpow.pop %v3054
        %v3056 = vmul.f32 %v2617, 1.442695
        %v3057 = vpow.pop %v3056
        %v3058 = vmul.f32 %v2618, 1.442695
        %v3059 = vpow.pop %v3058
        %v3060 = vmul.f32 %v2619, 1.442695
        %v3061 = vpow.pop %v3060
        %v3062 = vmul.f32 %v2620, 1.442695
        %v3063 = vpow.pop %v3062
        %v3064 = vmul.f32 %v2621, 1.442695
        %v3065 = vpow.pop %v3064
        %v3066 = vmul.f32 %v2622, 1.442695
        %v3067 = vpow.pop %v3066
        %v3068 = vmul.f32 %v2623, 1.442695
        %v3069 = vpow.pop %v3068
        %v3070 = vmul.f32 %v2624, 1.442695
        %v3071 = vpow.pop %v3070
        %v3072 = vmul.f32 %v2625, 1.442695
        %v3073 = vpow.pop %v3072
        %v3074 = vmul.f32 %v2626, 1.442695
        %v3075 = vpow.pop %v3074
        %v3076 = vmul.f32 %v2627, 1.442695
        %v3077 = vpow.pop %v3076
        %v3078 = vmul.f32 %v2628, 1.442695
        %v3079 = vpow.pop %v3078
        %v3080 = vmul.f32 %v2629, 1.442695
        %v3081 = vpow.pop %v3080
        %v3082 = vmul.f32 %v2630, 1.442695
        %v3083 = vpow.pop %v3082
        %v3084 = vmul.f32 %v2631, 1.442695
        %v3085 = vpow.pop %v3084
        %v3086 = vmul.f32 %v2632, 1.442695
        %v3087 = vpow.pop %v3086
        %v3088 = vmul.f32 %v2633, 1.442695
        %v3089 = vpow.pop %v3088
        %v3090 = vmul.f32 %v2634, 1.442695
        %v3091 = vpow.pop %v3090
        %v3092 = vmul.f32 %v2635, 1.442695
        %v3093 = vpow.pop %v3092
        %v3094 = vmul.f32 %v2636, 1.442695
        %v3095 = vpow.pop %v3094
        %v3096 = vmul.f32 %v2637, 1.442695
        %v3097 = vpow.pop %v3096
        %v3098 = vmul.f32 %v2638, 1.442695
        %v3099 = vpow.pop %v3098
        %v3100 = vmul.f32 %v2639, 1.442695
        %v3101 = vpow.pop %v3100
        %v3102 = vmul.f32 %v2640, 1.442695
        %v3103 = vpow.pop %v3102
        %v3104 = vmul.f32 %v2641, 1.442695
        %v3105 = vpow.pop %v3104
        %v3106 = vmul.f32 %v2642, 1.442695
        %v3107 = vpow.pop %v3106
        %v3108 = vmul.f32 %v2643, 1.442695
        %v3109 = vpow.pop %v3108
        %v3110 = vmul.f32 %v2644, 1.442695
        %v3111 = vpow.pop %v3110
        %v3112 = vmul.f32 %v2645, 1.442695
        %v3113 = vpow.pop %v3112
        %v3114 = vmul.f32 %v2646, 1.442695
        %v3115 = vpow.pop %v3114
        %v3116 = vmul.f32 %v2647, 1.442695
        %v3117 = vpow.pop %v3116
        %v3118 = vmul.f32 %v2648, 1.442695
        %v3119 = vpow.pop %v3118
        %v3120 = vmul.f32 %v2649, 1.442695
        %v3121 = vpow.pop %v3120
        %v3122 = vmul.f32 %v2650, 1.442695
        %v3123 = vpow.pop %v3122
        %v3124 = vmul.f32 %v2651, 1.442695
        %v3125 = vpow.pop %v3124
        %v3126 = vmul.f32 %v2652, 1.442695
        %v3127 = vpow.pop %v3126
        %v3128 = vmul.f32 %v2653, 1.442695
        %v3129 = vpow.pop %v3128
        %v3130 = vmul.f32 %v2654, 1.442695
        %v3131 = vpow.pop %v3130
        %v3132 = vmul.f32 %v2655, 1.442695
        %v3133 = vpow.pop %v3132
        %v3134 = vmul.f32 %v2656, 1.442695
        %v3135 = vpow.pop %v3134
        %v3136 = vmul.f32 %v2657, 1.442695
        %v3137 = vpow.pop %v3136
        %v3138 = vmul.f32 %v2658, 1.442695
        %v3139 = vpow.pop %v3138
        %v3140 = vmul.f32 %v2659, 1.442695
        %v3141 = vpow.pop %v3140
        %v3142 = vmul.f32 %v2660, 1.442695
        %v3143 = vpow.pop %v3142
        %v3144 = vmul.f32 %v2661, 1.442695
        %v3145 = vpow.pop %v3144
        %v3146 = vmul.f32 %v2662, 1.442695
        %v3147 = vpow.pop %v3146
        %v3148 = vmul.f32 %v2663, 1.442695
        %v3149 = vpow.pop %v3148
        %v3150 = vmul.f32 %v2664, 1.442695
        %v3151 = vpow.pop %v3150
        %v3152 = vmul.f32 %v2665, 1.442695
        %v3153 = vpow.pop %v3152
        %v3154 = vmul.f32 %v2666, 1.442695
        %v3155 = vpow.pop %v3154
        %v3156 = vmul.f32 %v2667, 1.442695
        %v3157 = vpow.pop %v3156
        %v3158 = vmul.f32 %v2668, 1.442695
        %v3159 = vpow.pop %v3158
        %v3160 = vmul.f32 %v2669, 1.442695
        %v3161 = vpow.pop %v3160
        %v3162 = vmul.f32 %v2670, 1.442695
        %v3163 = vpow.pop %v3162
        %v3164 = vmul.f32 %v2671, 1.442695
        %v3165 = vpow.pop %v3164
        %v3166 = vmul.f32 %v2672, 1.442695
        %v3167 = vpow.pop %v3166
        %v3168 = vmul.f32 %v2673, 1.442695
        %v3169 = vpow.pop %v3168
        %v3170 = vmul.f32 %v2674, 1.442695
        %v3171 = vpow.pop %v3170
        %v3172 = vmul.f32 %v2675, 1.442695
        %v3173 = vpow.pop %v3172
        %v3174 = vmul.f32 %v2676, 1.442695
        %v3175 = vpow.pop %v3174
        %v3176 = vmul.f32 %v2677, 1.442695
        %v3177 = vpow.pop %v3176
        %v3178 = vmul.f32 %v2678, 1.442695
        %v3179 = vpow.pop %v3178
        %v3180 = vmul.f32 %v2679, 1.442695
        %v3181 = vpow.pop %v3180
        %v3182 = vmul.f32 %v2680, 1.442695
        %v3183 = vpow.pop %v3182
        %v3184 = vmul.f32 %v2681, 1.442695
        %v3185 = vpow.pop %v3184
        %v3186 = vmul.f32 %v2682, 1.442695
        %v3187 = vpow.pop %v3186
        %v3188 = vmul.f32 %v2683, 1.442695
        %v3189 = vpow.pop %v3188
        %v3190 = vmul.f32 %v2684, 1.442695
        %v3191 = vpow.pop %v3190
        %v3192 = vmul.f32 %v2685, 1.442695
        %v3193 = vpow.pop %v3192
        %v3194 = vmul.f32 %v2686, 1.442695
        %v3195 = vpow.pop %v3194
        %v3196 = vmul.f32 %v2687, 1.442695
        %v3197 = vpow.pop %v3196
        %v3198 = vmul.f32 %v2688, 1.442695
        %v3199 = vpow.pop %v3198
        %v3200 = vmul.f32 %v2689, 1.442695
        %v3201 = vpow.pop %v3200
        %v3202 = vmul.f32 %v2691, 0.5
        %v3203 = vmul.f32 %v2693, 0.5
        %v3204 = vmul.f32 %v2695, 0.5
        %v3205 = vmul.f32 %v2697, 0.5
        %v3206 = vmul.f32 %v2699, 0.5
        %v3207 = vmul.f32 %v2701, 0.5
        %v3208 = vmul.f32 %v2703, 0.5
        %v3209 = vmul.f32 %v2705, 0.5
        %v3210 = vmul.f32 %v2707, 0.5
        %v3211 = vmul.f32 %v2709, 0.5
        %v3212 = vmul.f32 %v2711, 0.5
        %v3213 = vmul.f32 %v2713, 0.5
        %v3214 = vmul.f32 %v2715, 0.5
        %v3215 = vmul.f32 %v2717, 0.5
        %v3216 = vmul.f32 %v2719, 0.5
        %v3217 = vmul.f32 %v2721, 0.5
        %v3218 = vmul.f32 %v2723, 0.5
        %v3219 = vmul.f32 %v2725, 0.5
        %v3220 = vmul.f32 %v2727, 0.5
        %v3221 = vmul.f32 %v2729, 0.5
        %v3222 = vmul.f32 %v2731, 0.5
        %v3223 = vmul.f32 %v2733, 0.5
        %v3224 = vmul.f32 %v2735, 0.5
        %v3225 = vmul.f32 %v2737, 0.5
        %v3226 = vmul.f32 %v2739, 0.5
        %v3227 = vmul.f32 %v2741, 0.5
        %v3228 = vmul.f32 %v2743, 0.5
        %v3229 = vmul.f32 %v2745, 0.5
        %v3230 = vmul.f32 %v2747, 0.5
        %v3231 = vmul.f32 %v2749, 0.5
        %v3232 = vmul.f32 %v2751, 0.5
        %v3233 = vmul.f32 %v2753, 0.5
        %v3234 = vmul.f32 %v2755, 0.5
        %v3235 = vmul.f32 %v2757, 0.5
        %v3236 = vmul.f32 %v2759, 0.5
        %v3237 = vmul.f32 %v2761, 0.5
        %v3238 = vmul.f32 %v2763, 0.5
        %v3239 = vmul.f32 %v2765, 0.5
        %v3240 = vmul.f32 %v2767, 0.5
        %v3241 = vmul.f32 %v2769, 0.5
        %v3242 = vmul.f32 %v2771, 0.5
        %v3243 = vmul.f32 %v2773, 0.5
        %v3244 = vmul.f32 %v2775, 0.5
        %v3245 = vmul.f32 %v2777, 0.5
        %v3246 = vmul.f32 %v2779, 0.5
        %v3247 = vmul.f32 %v2781, 0.5
        %v3248 = vmul.f32 %v2783, 0.5
        %v3249 = vmul.f32 %v2785, 0.5
        %v3250 = vmul.f32 %v2787, 0.5
        %v3251 = vmul.f32 %v2789, 0.5
        %v3252 = vmul.f32 %v2791, 0.5
        %v3253 = vmul.f32 %v2793, 0.5
        %v3254 = vmul.f32 %v2795, 0.5
        %v3255 = vmul.f32 %v2797, 0.5
        %v3256 = vmul.f32 %v2799, 0.5
        %v3257 = vmul.f32 %v2801, 0.5
        %v3258 = vmul.f32 %v2803, 0.5
        %v3259 = vmul.f32 %v2805, 0.5
        %v3260 = vmul.f32 %v2807, 0.5
        %v3261 = vmul.f32 %v2809, 0.5
        %v3262 = vmul.f32 %v2811, 0.5
        %v3263 = vmul.f32 %v2813, 0.5
        %v3264 = vmul.f32 %v2815, 0.5
        %v3265 = vmul.f32 %v2817, 0.5
        %v3266 = vmul.f32 %v2819, 0.5
        %v3267 = vmul.f32 %v2821, 0.5
        %v3268 = vmul.f32 %v2823, 0.5
        %v3269 = vmul.f32 %v2825, 0.5
        %v3270 = vmul.f32 %v2827, 0.5
        %v3271 = vmul.f32 %v2829, 0.5
        %v3272 = vmul.f32 %v2831, 0.5
        %v3273 = vmul.f32 %v2833, 0.5
        %v3274 = vmul.f32 %v2835, 0.5
        %v3275 = vmul.f32 %v2837, 0.5
        %v3276 = vmul.f32 %v2839, 0.5
        %v3277 = vmul.f32 %v2841, 0.5
        %v3278 = vmul.f32 %v2843, 0.5
        %v3279 = vmul.f32 %v2845, 0.5
        %v3280 = vmul.f32 %v2847, 0.5
        %v3281 = vmul.f32 %v2849, 0.5
        %v3282 = vmul.f32 %v2851, 0.5
        %v3283 = vmul.f32 %v2853, 0.5
        %v3284 = vmul.f32 %v2855, 0.5
        %v3285 = vmul.f32 %v2857, 0.5
        %v3286 = vmul.f32 %v2859, 0.5
        %v3287 = vmul.f32 %v2861, 0.5
        %v3288 = vmul.f32 %v2863, 0.5
        %v3289 = vmul.f32 %v2865, 0.5
        %v3290 = vmul.f32 %v2867, 0.5
        %v3291 = vmul.f32 %v2869, 0.5
        %v3292 = vmul.f32 %v2871, 0.5
        %v3293 = vmul.f32 %v2873, 0.5
        %v3294 = vmul.f32 %v2875, 0.5
        %v3295 = vmul.f32 %v2877, 0.5
        %v3296 = vmul.f32 %v2879, 0.5
        %v3297 = vmul.f32 %v2881, 0.5
        %v3298 = vmul.f32 %v2883, 0.5
        %v3299 = vmul.f32 %v2885, 0.5
        %v3300 = vmul.f32 %v2887, 0.5
        %v3301 = vmul.f32 %v2889, 0.5
        %v3302 = vmul.f32 %v2891, 0.5
        %v3303 = vmul.f32 %v2893, 0.5
        %v3304 = vmul.f32 %v2895, 0.5
        %v3305 = vmul.f32 %v2897, 0.5
        %v3306 = vmul.f32 %v2899, 0.5
        %v3307 = vmul.f32 %v2901, 0.5
        %v3308 = vmul.f32 %v2903, 0.5
        %v3309 = vmul.f32 %v2905, 0.5
        %v3310 = vmul.f32 %v2907, 0.5
        %v3311 = vmul.f32 %v2909, 0.5
        %v3312 = vmul.f32 %v2911, 0.5
        %v3313 = vmul.f32 %v2913, 0.5
        %v3314 = vmul.f32 %v2915, 0.5
        %v3315 = vmul.f32 %v2917, 0.5
        %v3316 = vmul.f32 %v2919, 0.5
        %v3317 = vmul.f32 %v2921, 0.5
        %v3318 = vmul.f32 %v2923, 0.5
        %v3319 = vmul.f32 %v2925, 0.5
        %v3320 = vmul.f32 %v2927, 0.5
        %v3321 = vmul.f32 %v2929, 0.5
        %v3322 = vmul.f32 %v2931, 0.5
        %v3323 = vmul.f32 %v2933, 0.5
        %v3324 = vmul.f32 %v2935, 0.5
        %v3325 = vmul.f32 %v2937, 0.5
        %v3326 = vmul.f32 %v2939, 0.5
        %v3327 = vmul.f32 %v2941, 0.5
        %v3328 = vmul.f32 %v2943, 0.5
        %v3329 = vmul.f32 %v2945, 0.5
        %v3330 = vmul.f32 %v2947, 0.5
        %v3331 = vmul.f32 %v2949, 0.5
        %v3332 = vmul.f32 %v2951, 0.5
        %v3333 = vmul.f32 %v2953, 0.5
        %v3334 = vmul.f32 %v2955, 0.5
        %v3335 = vmul.f32 %v2957, 0.5
        %v3336 = vmul.f32 %v2959, 0.5
        %v3337 = vmul.f32 %v2961, 0.5
        %v3338 = vmul.f32 %v2963, 0.5
        %v3339 = vmul.f32 %v2965, 0.5
        %v3340 = vmul.f32 %v2967, 0.5
        %v3341 = vmul.f32 %v2969, 0.5
        %v3342 = vmul.f32 %v2971, 0.5
        %v3343 = vmul.f32 %v2973, 0.5
        %v3344 = vmul.f32 %v2975, 0.5
        %v3345 = vmul.f32 %v2977, 0.5
        %v3346 = vmul.f32 %v2979, 0.5
        %v3347 = vmul.f32 %v2981, 0.5
        %v3348 = vmul.f32 %v2983, 0.5
        %v3349 = vmul.f32 %v2985, 0.5
        %v3350 = vmul.f32 %v2987, 0.5
        %v3351 = vmul.f32 %v2989, 0.5
        %v3352 = vmul.f32 %v2991, 0.5
        %v3353 = vmul.f32 %v2993, 0.5
        %v3354 = vmul.f32 %v2995, 0.5
        %v3355 = vmul.f32 %v2997, 0.5
        %v3356 = vmul.f32 %v2999, 0.5
        %v3357 = vmul.f32 %v3001, 0.5
        %v3358 = vmul.f32 %v3003, 0.5
        %v3359 = vmul.f32 %v3005, 0.5
        %v3360 = vmul.f32 %v3007, 0.5
        %v3361 = vmul.f32 %v3009, 0.5
        %v3362 = vmul.f32 %v3011, 0.5
        %v3363 = vmul.f32 %v3013, 0.5
        %v3364 = vmul.f32 %v3015, 0.5
        %v3365 = vmul.f32 %v3017, 0.5
        %v3366 = vmul.f32 %v3019, 0.5
        %v3367 = vmul.f32 %v3021, 0.5
        %v3368 = vmul.f32 %v3023, 0.5
        %v3369 = vmul.f32 %v3025, 0.5
        %v3370 = vmul.f32 %v3027, 0.5
        %v3371 = vmul.f32 %v3029, 0.5
        %v3372 = vmul.f32 %v3031, 0.5
        %v3373 = vmul.f32 %v3033, 0.5
        %v3374 = vmul.f32 %v3035, 0.5
        %v3375 = vmul.f32 %v3037, 0.5
        %v3376 = vmul.f32 %v3039, 0.5
        %v3377 = vmul.f32 %v3041, 0.5
        %v3378 = vmul.f32 %v3043, 0.5
        %v3379 = vmul.f32 %v3045, 0.5
        %v3380 = vmul.f32 %v3047, 0.5
        %v3381 = vmul.f32 %v3049, 0.5
        %v3382 = vmul.f32 %v3051, 0.5
        %v3383 = vmul.f32 %v3053, 0.5
        %v3384 = vmul.f32 %v3055, 0.5
        %v3385 = vmul.f32 %v3057, 0.5
        %v3386 = vmul.f32 %v3059, 0.5
        %v3387 = vmul.f32 %v3061, 0.5
        %v3388 = vmul.f32 %v3063, 0.5
        %v3389 = vmul.f32 %v3065, 0.5
        %v3390 = vmul.f32 %v3067, 0.5
        %v3391 = vmul.f32 %v3069, 0.5
        %v3392 = vmul.f32 %v3071, 0.5
        %v3393 = vmul.f32 %v3073, 0.5
        %v3394 = vmul.f32 %v3075, 0.5
        %v3395 = vmul.f32 %v3077, 0.5
        %v3396 = vmul.f32 %v3079, 0.5
        %v3397 = vmul.f32 %v3081, 0.5
        %v3398 = vmul.f32 %v3083, 0.5
        %v3399 = vmul.f32 %v3085, 0.5
        %v3400 = vmul.f32 %v3087, 0.5
        %v3401 = vmul.f32 %v3089, 0.5
        %v3402 = vmul.f32 %v3091, 0.5
        %v3403 = vmul.f32 %v3093, 0.5
        %v3404 = vmul.f32 %v3095, 0.5
        %v3405 = vmul.f32 %v3097, 0.5
        %v3406 = vmul.f32 %v3099, 0.5
        %v3407 = vmul.f32 %v3101, 0.5
        %v3408 = vmul.f32 %v3103, 0.5
        %v3409 = vmul.f32 %v3105, 0.5
        %v3410 = vmul.f32 %v3107, 0.5
        %v3411 = vmul.f32 %v3109, 0.5
        %v3412 = vmul.f32 %v3111, 0.5
        %v3413 = vmul.f32 %v3113, 0.5
        %v3414 = vmul.f32 %v3115, 0.5
        %v3415 = vmul.f32 %v3117, 0.5
        %v3416 = vmul.f32 %v3119, 0.5
        %v3417 = vmul.f32 %v3121, 0.5
        %v3418 = vmul.f32 %v3123, 0.5
        %v3419 = vmul.f32 %v3125, 0.5
        %v3420 = vmul.f32 %v3127, 0.5
        %v3421 = vmul.f32 %v3129, 0.5
        %v3422 = vmul.f32 %v3131, 0.5
        %v3423 = vmul.f32 %v3133, 0.5
        %v3424 = vmul.f32 %v3135, 0.5
        %v3425 = vmul.f32 %v3137, 0.5
        %v3426 = vmul.f32 %v3139, 0.5
        %v3427 = vmul.f32 %v3141, 0.5
        %v3428 = vmul.f32 %v3143, 0.5
        %v3429 = vmul.f32 %v3145, 0.5
        %v3430 = vmul.f32 %v3147, 0.5
        %v3431 = vmul.f32 %v3149, 0.5
        %v3432 = vmul.f32 %v3151, 0.5
        %v3433 = vmul.f32 %v3153, 0.5
        %v3434 = vmul.f32 %v3155, 0.5
        %v3435 = vmul.f32 %v3157, 0.5
        %v3436 = vmul.f32 %v3159, 0.5
        %v3437 = vmul.f32 %v3161, 0.5
        %v3438 = vmul.f32 %v3163, 0.5
        %v3439 = vmul.f32 %v3165, 0.5
        %v3440 = vmul.f32 %v3167, 0.5
        %v3441 = vmul.f32 %v3169, 0.5
        %v3442 = vmul.f32 %v3171, 0.5
        %v3443 = vmul.f32 %v3173, 0.5
        %v3444 = vmul.f32 %v3175, 0.5
        %v3445 = vmul.f32 %v3177, 0.5
        %v3446 = vmul.f32 %v3179, 0.5
        %v3447 = vmul.f32 %v3181, 0.5
        %v3448 = vmul.f32 %v3183, 0.5
        %v3449 = vmul.f32 %v3185, 0.5
        %v3450 = vmul.f32 %v3187, 0.5
        %v3451 = vmul.f32 %v3189, 0.5
        %v3452 = vmul.f32 %v3191, 0.5
        %v3453 = vmul.f32 %v3193, 0.5
        %v3454 = vmul.f32 %v3195, 0.5
        %v3455 = vmul.f32 %v3197, 0.5
        %v3456 = vmul.f32 %v3199, 0.5
        %v3457 = vmul.f32 %v3201, 0.5
        %v3458 = vadd.f32 %v1922, %v3202
        %v3459 = vadd.f32 %v1923, %v3203
        %v3460 = vadd.f32 %v1924, %v3204
        %v3461 = vadd.f32 %v1925, %v3205
        %v3462 = vadd.f32 %v1926, %v3206
        %v3463 = vadd.f32 %v1927, %v3207
        %v3464 = vadd.f32 %v1928, %v3208
        %v3465 = vadd.f32 %v1929, %v3209
        %v3466 = vadd.f32 %v1930, %v3210
        %v3467 = vadd.f32 %v1931, %v3211
        %v3468 = vadd.f32 %v1932, %v3212
        %v3469 = vadd.f32 %v1933, %v3213
        %v3470 = vadd.f32 %v1934, %v3214
        %v3471 = vadd.f32 %v1935, %v3215
        %v3472 = vadd.f32 %v1936, %v3216
        %v3473 = vadd.f32 %v1937, %v3217
        %v3474 = vadd.f32 %v1938, %v3218
        %v3475 = vadd.f32 %v1939, %v3219
        %v3476 = vadd.f32 %v1940, %v3220
        %v3477 = vadd.f32 %v1941, %v3221
        %v3478 = vadd.f32 %v1942, %v3222
        %v3479 = vadd.f32 %v1943, %v3223
        %v3480 = vadd.f32 %v1944, %v3224
        %v3481 = vadd.f32 %v1945, %v3225
        %v3482 = vadd.f32 %v1946, %v3226
        %v3483 = vadd.f32 %v1947, %v3227
        %v3484 = vadd.f32 %v1948, %v3228
        %v3485 = vadd.f32 %v1949, %v3229
        %v3486 = vadd.f32 %v1950, %v3230
        %v3487 = vadd.f32 %v1951, %v3231
        %v3488 = vadd.f32 %v1952, %v3232
        %v3489 = vadd.f32 %v1953, %v3233
        %v3490 = vadd.f32 %v1954, %v3234
        %v3491 = vadd.f32 %v1955, %v3235
        %v3492 = vadd.f32 %v1956, %v3236
        %v3493 = vadd.f32 %v1957, %v3237
        %v3494 = vadd.f32 %v1958, %v3238
        %v3495 = vadd.f32 %v1959, %v3239
        %v3496 = vadd.f32 %v1960, %v3240
        %v3497 = vadd.f32 %v1961, %v3241
        %v3498 = vadd.f32 %v1962, %v3242
        %v3499 = vadd.f32 %v1963, %v3243
        %v3500 = vadd.f32 %v1964, %v3244
        %v3501 = vadd.f32 %v1965, %v3245
        %v3502 = vadd.f32 %v1966, %v3246
        %v3503 = vadd.f32 %v1967, %v3247
        %v3504 = vadd.f32 %v1968, %v3248
        %v3505 = vadd.f32 %v1969, %v3249
        %v3506 = vadd.f32 %v1970, %v3250
        %v3507 = vadd.f32 %v1971, %v3251
        %v3508 = vadd.f32 %v1972, %v3252
        %v3509 = vadd.f32 %v1973, %v3253
        %v3510 = vadd.f32 %v1974, %v3254
        %v3511 = vadd.f32 %v1975, %v3255
        %v3512 = vadd.f32 %v1976, %v3256
        %v3513 = vadd.f32 %v1977, %v3257
        %v3514 = vadd.f32 %v1978, %v3258
        %v3515 = vadd.f32 %v1979, %v3259
        %v3516 = vadd.f32 %v1980, %v3260
        %v3517 = vadd.f32 %v1981, %v3261
        %v3518 = vadd.f32 %v1982, %v3262
        %v3519 = vadd.f32 %v1983, %v3263
        %v3520 = vadd.f32 %v1984, %v3264
        %v3521 = vadd.f32 %v1985, %v3265
        %v3522 = vadd.f32 %v1986, %v3266
        %v3523 = vadd.f32 %v1987, %v3267
        %v3524 = vadd.f32 %v1988, %v3268
        %v3525 = vadd.f32 %v1989, %v3269
        %v3526 = vadd.f32 %v1990, %v3270
        %v3527 = vadd.f32 %v1991, %v3271
        %v3528 = vadd.f32 %v1992, %v3272
        %v3529 = vadd.f32 %v1993, %v3273
        %v3530 = vadd.f32 %v1994, %v3274
        %v3531 = vadd.f32 %v1995, %v3275
        %v3532 = vadd.f32 %v1996, %v3276
        %v3533 = vadd.f32 %v1997, %v3277
        %v3534 = vadd.f32 %v1998, %v3278
        %v3535 = vadd.f32 %v1999, %v3279
        %v3536 = vadd.f32 %v2000, %v3280
        %v3537 = vadd.f32 %v2001, %v3281
        %v3538 = vadd.f32 %v2002, %v3282
        %v3539 = vadd.f32 %v2003, %v3283
        %v3540 = vadd.f32 %v2004, %v3284
        %v3541 = vadd.f32 %v2005, %v3285
        %v3542 = vadd.f32 %v2006, %v3286
        %v3543 = vadd.f32 %v2007, %v3287
        %v3544 = vadd.f32 %v2008, %v3288
        %v3545 = vadd.f32 %v2009, %v3289
        %v3546 = vadd.f32 %v2010, %v3290
        %v3547 = vadd.f32 %v2011, %v3291
        %v3548 = vadd.f32 %v2012, %v3292
        %v3549 = vadd.f32 %v2013, %v3293
        %v3550 = vadd.f32 %v2014, %v3294
        %v3551 = vadd.f32 %v2015, %v3295
        %v3552 = vadd.f32 %v2016, %v3296
        %v3553 = vadd.f32 %v2017, %v3297
        %v3554 = vadd.f32 %v2018, %v3298
        %v3555 = vadd.f32 %v2019, %v3299
        %v3556 = vadd.f32 %v2020, %v3300
        %v3557 = vadd.f32 %v2021, %v3301
        %v3558 = vadd.f32 %v2022, %v3302
        %v3559 = vadd.f32 %v2023, %v3303
        %v3560 = vadd.f32 %v2024, %v3304
        %v3561 = vadd.f32 %v2025, %v3305
        %v3562 = vadd.f32 %v2026, %v3306
        %v3563 = vadd.f32 %v2027, %v3307
        %v3564 = vadd.f32 %v2028, %v3308
        %v3565 = vadd.f32 %v2029, %v3309
        %v3566 = vadd.f32 %v2030, %v3310
        %v3567 = vadd.f32 %v2031, %v3311
        %v3568 = vadd.f32 %v2032, %v3312
        %v3569 = vadd.f32 %v2033, %v3313
        %v3570 = vadd.f32 %v2034, %v3314
        %v3571 = vadd.f32 %v2035, %v3315
        %v3572 = vadd.f32 %v2036, %v3316
        %v3573 = vadd.f32 %v2037, %v3317
        %v3574 = vadd.f32 %v2038, %v3318
        %v3575 = vadd.f32 %v2039, %v3319
        %v3576 = vadd.f32 %v2040, %v3320
        %v3577 = vadd.f32 %v2041, %v3321
        %v3578 = vadd.f32 %v2042, %v3322
        %v3579 = vadd.f32 %v2043, %v3323
        %v3580 = vadd.f32 %v2044, %v3324
        %v3581 = vadd.f32 %v2045, %v3325
        %v3582 = vadd.f32 %v2046, %v3326
        %v3583 = vadd.f32 %v2047, %v3327
        %v3584 = vadd.f32 %v2048, %v3328
        %v3585 = vadd.f32 %v2049, %v3329
        %v3586 = vadd.f32 %v2050, %v3330
        %v3587 = vadd.f32 %v2051, %v3331
        %v3588 = vadd.f32 %v2052, %v3332
        %v3589 = vadd.f32 %v2053, %v3333
        %v3590 = vadd.f32 %v2054, %v3334
        %v3591 = vadd.f32 %v2055, %v3335
        %v3592 = vadd.f32 %v2056, %v3336
        %v3593 = vadd.f32 %v2057, %v3337
        %v3594 = vadd.f32 %v2058, %v3338
        %v3595 = vadd.f32 %v2059, %v3339
        %v3596 = vadd.f32 %v2060, %v3340
        %v3597 = vadd.f32 %v2061, %v3341
        %v3598 = vadd.f32 %v2062, %v3342
        %v3599 = vadd.f32 %v2063, %v3343
        %v3600 = vadd.f32 %v2064, %v3344
        %v3601 = vadd.f32 %v2065, %v3345
        %v3602 = vadd.f32 %v2066, %v3346
        %v3603 = vadd.f32 %v2067, %v3347
        %v3604 = vadd.f32 %v2068, %v3348
        %v3605 = vadd.f32 %v2069, %v3349
        %v3606 = vadd.f32 %v2070, %v3350
        %v3607 = vadd.f32 %v2071, %v3351
        %v3608 = vadd.f32 %v2072, %v3352
        %v3609 = vadd.f32 %v2073, %v3353
        %v3610 = vadd.f32 %v2074, %v3354
        %v3611 = vadd.f32 %v2075, %v3355
        %v3612 = vadd.f32 %v2076, %v3356
        %v3613 = vadd.f32 %v2077, %v3357
        %v3614 = vadd.f32 %v2078, %v3358
        %v3615 = vadd.f32 %v2079, %v3359
        %v3616 = vadd.f32 %v2080, %v3360
        %v3617 = vadd.f32 %v2081, %v3361
        %v3618 = vadd.f32 %v2082, %v3362
        %v3619 = vadd.f32 %v2083, %v3363
        %v3620 = vadd.f32 %v2084, %v3364
        %v3621 = vadd.f32 %v2085, %v3365
        %v3622 = vadd.f32 %v2086, %v3366
        %v3623 = vadd.f32 %v2087, %v3367
        %v3624 = vadd.f32 %v2088, %v3368
        %v3625 = vadd.f32 %v2089, %v3369
        %v3626 = vadd.f32 %v2090, %v3370
        %v3627 = vadd.f32 %v2091, %v3371
        %v3628 = vadd.f32 %v2092, %v3372
        %v3629 = vadd.f32 %v2093, %v3373
        %v3630 = vadd.f32 %v2094, %v3374
        %v3631 = vadd.f32 %v2095, %v3375
        %v3632 = vadd.f32 %v2096, %v3376
        %v3633 = vadd.f32 %v2097, %v3377
        %v3634 = vadd.f32 %v2098, %v3378
        %v3635 = vadd.f32 %v2099, %v3379
        %v3636 = vadd.f32 %v2100, %v3380
        %v3637 = vadd.f32 %v2101, %v3381
        %v3638 = vadd.f32 %v2102, %v3382
        %v3639 = vadd.f32 %v2103, %v3383
        %v3640 = vadd.f32 %v2104, %v3384
        %v3641 = vadd.f32 %v2105, %v3385
        %v3642 = vadd.f32 %v2106, %v3386
        %v3643 = vadd.f32 %v2107, %v3387
        %v3644 = vadd.f32 %v2108, %v3388
        %v3645 = vadd.f32 %v2109, %v3389
        %v3646 = vadd.f32 %v2110, %v3390
        %v3647 = vadd.f32 %v2111, %v3391
        %v3648 = vadd.f32 %v2112, %v3392
        %v3649 = vadd.f32 %v2113, %v3393
        %v3650 = vadd.f32 %v2114, %v3394
        %v3651 = vadd.f32 %v2115, %v3395
        %v3652 = vadd.f32 %v2116, %v3396
        %v3653 = vadd.f32 %v2117, %v3397
        %v3654 = vadd.f32 %v2118, %v3398
        %v3655 = vadd.f32 %v2119, %v3399
        %v3656 = vadd.f32 %v2120, %v3400
        %v3657 = vadd.f32 %v2121, %v3401
        %v3658 = vadd.f32 %v2122, %v3402
        %v3659 = vadd.f32 %v2123, %v3403
        %v3660 = vadd.f32 %v2124, %v3404
        %v3661 = vadd.f32 %v2125, %v3405
        %v3662 = vadd.f32 %v2126, %v3406
        %v3663 = vadd.f32 %v2127, %v3407
        %v3664 = vadd.f32 %v2128, %v3408
        %v3665 = vadd.f32 %v2129, %v3409
        %v3666 = vadd.f32 %v2130, %v3410
        %v3667 = vadd.f32 %v2131, %v3411
        %v3668 = vadd.f32 %v2132, %v3412
        %v3669 = vadd.f32 %v2133, %v3413
        %v3670 = vadd.f32 %v2134, %v3414
        %v3671 = vadd.f32 %v2135, %v3415
        %v3672 = vadd.f32 %v2136, %v3416
        %v3673 = vadd.f32 %v2137, %v3417
        %v3674 = vadd.f32 %v2138, %v3418
        %v3675 = vadd.f32 %v2139, %v3419
        %v3676 = vadd.f32 %v2140, %v3420
        %v3677 = vadd.f32 %v2141, %v3421
        %v3678 = vadd.f32 %v2142, %v3422
        %v3679 = vadd.f32 %v2143, %v3423
        %v3680 = vadd.f32 %v2144, %v3424
        %v3681 = vadd.f32 %v2145, %v3425
        %v3682 = vadd.f32 %v2146, %v3426
        %v3683 = vadd.f32 %v2147, %v3427
        %v3684 = vadd.f32 %v2148, %v3428
        %v3685 = vadd.f32 %v2149, %v3429
        %v3686 = vadd.f32 %v2150, %v3430
        %v3687 = vadd.f32 %v2151, %v3431
        %v3688 = vadd.f32 %v2152, %v3432
        %v3689 = vadd.f32 %v2153, %v3433
        %v3690 = vadd.f32 %v2154, %v3434
        %v3691 = vadd.f32 %v2155, %v3435
        %v3692 = vadd.f32 %v2156, %v3436
        %v3693 = vadd.f32 %v2157, %v3437
        %v3694 = vadd.f32 %v2158, %v3438
        %v3695 = vadd.f32 %v2159, %v3439
        %v3696 = vadd.f32 %v2160, %v3440
        %v3697 = vadd.f32 %v2161, %v3441
        %v3698 = vadd.f32 %v2162, %v3442
        %v3699 = vadd.f32 %v2163, %v3443
        %v3700 = vadd.f32 %v2164, %v3444
        %v3701 = vadd.f32 %v2165, %v3445
        %v3702 = vadd.f32 %v2166, %v3446
        %v3703 = vadd.f32 %v2167, %v3447
        %v3704 = vadd.f32 %v2168, %v3448
        %v3705 = vadd.f32 %v2169, %v3449
        %v3706 = vadd.f32 %v2170, %v3450
        %v3707 = vadd.f32 %v2171, %v3451
        %v3708 = vadd.f32 %v2172, %v3452
        %v3709 = vadd.f32 %v2173, %v3453
        %v3710 = vadd.f32 %v2174, %v3454
        %v3711 = vadd.f32 %v2175, %v3455
        %v3712 = vadd.f32 %v2176, %v3456
        %v3713 = vadd.f32 %v2177, %v3457
        %v3714 = vmul.f32 %v1410, 0.5
        %v3715 = vmul.f32 %v1411, 0.5
        %v3716 = vmul.f32 %v1412, 0.5
        %v3717 = vmul.f32 %v1413, 0.5
        %v3718 = vmul.f32 %v1414, 0.5
        %v3719 = vmul.f32 %v1415, 0.5
        %v3720 = vmul.f32 %v1416, 0.5
        %v3721 = vmul.f32 %v1417, 0.5
        %v3722 = vmul.f32 %v1418, 0.5
        %v3723 = vmul.f32 %v1419, 0.5
        %v3724 = vmul.f32 %v1420, 0.5
        %v3725 = vmul.f32 %v1421, 0.5
        %v3726 = vmul.f32 %v1422, 0.5
        %v3727 = vmul.f32 %v1423, 0.5
        %v3728 = vmul.f32 %v1424, 0.5
        %v3729 = vmul.f32 %v1425, 0.5
        %v3730 = vmul.f32 %v1426, 0.5
        %v3731 = vmul.f32 %v1427, 0.5
        %v3732 = vmul.f32 %v1428, 0.5
        %v3733 = vmul.f32 %v1429, 0.5
        %v3734 = vmul.f32 %v1430, 0.5
        %v3735 = vmul.f32 %v1431, 0.5
        %v3736 = vmul.f32 %v1432, 0.5
        %v3737 = vmul.f32 %v1433, 0.5
        %v3738 = vmul.f32 %v1434, 0.5
        %v3739 = vmul.f32 %v1435, 0.5
        %v3740 = vmul.f32 %v1436, 0.5
        %v3741 = vmul.f32 %v1437, 0.5
        %v3742 = vmul.f32 %v1438, 0.5
        %v3743 = vmul.f32 %v1439, 0.5
        %v3744 = vmul.f32 %v1440, 0.5
        %v3745 = vmul.f32 %v1441, 0.5
        %v3746 = vmul.f32 %v1442, 0.5
        %v3747 = vmul.f32 %v1443, 0.5
        %v3748 = vmul.f32 %v1444, 0.5
        %v3749 = vmul.f32 %v1445, 0.5
        %v3750 = vmul.f32 %v1446, 0.5
        %v3751 = vmul.f32 %v1447, 0.5
        %v3752 = vmul.f32 %v1448, 0.5
        %v3753 = vmul.f32 %v1449, 0.5
        %v3754 = vmul.f32 %v1450, 0.5
        %v3755 = vmul.f32 %v1451, 0.5
        %v3756 = vmul.f32 %v1452, 0.5
        %v3757 = vmul.f32 %v1453, 0.5
        %v3758 = vmul.f32 %v1454, 0.5
        %v3759 = vmul.f32 %v1455, 0.5
        %v3760 = vmul.f32 %v1456, 0.5
        %v3761 = vmul.f32 %v1457, 0.5
        %v3762 = vmul.f32 %v1458, 0.5
        %v3763 = vmul.f32 %v1459, 0.5
        %v3764 = vmul.f32 %v1460, 0.5
        %v3765 = vmul.f32 %v1461, 0.5
        %v3766 = vmul.f32 %v1462, 0.5
        %v3767 = vmul.f32 %v1463, 0.5
        %v3768 = vmul.f32 %v1464, 0.5
        %v3769 = vmul.f32 %v1465, 0.5
        %v3770 = vmul.f32 %v1466, 0.5
        %v3771 = vmul.f32 %v1467, 0.5
        %v3772 = vmul.f32 %v1468, 0.5
        %v3773 = vmul.f32 %v1469, 0.5
        %v3774 = vmul.f32 %v1470, 0.5
        %v3775 = vmul.f32 %v1471, 0.5
        %v3776 = vmul.f32 %v1472, 0.5
        %v3777 = vmul.f32 %v1473, 0.5
        %v3778 = vmul.f32 %v1474, 0.5
        %v3779 = vmul.f32 %v1475, 0.5
        %v3780 = vmul.f32 %v1476, 0.5
        %v3781 = vmul.f32 %v1477, 0.5
        %v3782 = vmul.f32 %v1478, 0.5
        %v3783 = vmul.f32 %v1479, 0.5
        %v3784 = vmul.f32 %v1480, 0.5
        %v3785 = vmul.f32 %v1481, 0.5
        %v3786 = vmul.f32 %v1482, 0.5
        %v3787 = vmul.f32 %v1483, 0.5
        %v3788 = vmul.f32 %v1484, 0.5
        %v3789 = vmul.f32 %v1485, 0.5
        %v3790 = vmul.f32 %v1486, 0.5
        %v3791 = vmul.f32 %v1487, 0.5
        %v3792 = vmul.f32 %v1488, 0.5
        %v3793 = vmul.f32 %v1489, 0.5
        %v3794 = vmul.f32 %v1490, 0.5
        %v3795 = vmul.f32 %v1491, 0.5
        %v3796 = vmul.f32 %v1492, 0.5
        %v3797 = vmul.f32 %v1493, 0.5
        %v3798 = vmul.f32 %v1494, 0.5
        %v3799 = vmul.f32 %v1495, 0.5
        %v3800 = vmul.f32 %v1496, 0.5
        %v3801 = vmul.f32 %v1497, 0.5
        %v3802 = vmul.f32 %v1498, 0.5
        %v3803 = vmul.f32 %v1499, 0.5
        %v3804 = vmul.f32 %v1500, 0.5
        %v3805 = vmul.f32 %v1501, 0.5
        %v3806 = vmul.f32 %v1502, 0.5
        %v3807 = vmul.f32 %v1503, 0.5
        %v3808 = vmul.f32 %v1504, 0.5
        %v3809 = vmul.f32 %v1505, 0.5
        %v3810 = vmul.f32 %v1506, 0.5
        %v3811 = vmul.f32 %v1507, 0.5
        %v3812 = vmul.f32 %v1508, 0.5
        %v3813 = vmul.f32 %v1509, 0.5
        %v3814 = vmul.f32 %v1510, 0.5
        %v3815 = vmul.f32 %v1511, 0.5
        %v3816 = vmul.f32 %v1512, 0.5
        %v3817 = vmul.f32 %v1513, 0.5
        %v3818 = vmul.f32 %v1514, 0.5
        %v3819 = vmul.f32 %v1515, 0.5
        %v3820 = vmul.f32 %v1516, 0.5
        %v3821 = vmul.f32 %v1517, 0.5
        %v3822 = vmul.f32 %v1518, 0.5
        %v3823 = vmul.f32 %v1519, 0.5
        %v3824 = vmul.f32 %v1520, 0.5
        %v3825 = vmul.f32 %v1521, 0.5
        %v3826 = vmul.f32 %v1522, 0.5
        %v3827 = vmul.f32 %v1523, 0.5
        %v3828 = vmul.f32 %v1524, 0.5
        %v3829 = vmul.f32 %v1525, 0.5
        %v3830 = vmul.f32 %v1526, 0.5
        %v3831 = vmul.f32 %v1527, 0.5
        %v3832 = vmul.f32 %v1528, 0.5
        %v3833 = vmul.f32 %v1529, 0.5
        %v3834 = vmul.f32 %v1530, 0.5
        %v3835 = vmul.f32 %v1531, 0.5
        %v3836 = vmul.f32 %v1532, 0.5
        %v3837 = vmul.f32 %v1533, 0.5
        %v3838 = vmul.f32 %v1534, 0.5
        %v3839 = vmul.f32 %v1535, 0.5
        %v3840 = vmul.f32 %v1536, 0.5
        %v3841 = vmul.f32 %v1537, 0.5
        %v3842 = vmul.f32 %v1538, 0.5
        %v3843 = vmul.f32 %v1539, 0.5
        %v3844 = vmul.f32 %v1540, 0.5
        %v3845 = vmul.f32 %v1541, 0.5
        %v3846 = vmul.f32 %v1542, 0.5
        %v3847 = vmul.f32 %v1543, 0.5
        %v3848 = vmul.f32 %v1544, 0.5
        %v3849 = vmul.f32 %v1545, 0.5
        %v3850 = vmul.f32 %v1546, 0.5
        %v3851 = vmul.f32 %v1547, 0.5
        %v3852 = vmul.f32 %v1548, 0.5
        %v3853 = vmul.f32 %v1549, 0.5
        %v3854 = vmul.f32 %v1550, 0.5
        %v3855 = vmul.f32 %v1551, 0.5
        %v3856 = vmul.f32 %v1552, 0.5
        %v3857 = vmul.f32 %v1553, 0.5
        %v3858 = vmul.f32 %v1554, 0.5
        %v3859 = vmul.f32 %v1555, 0.5
        %v3860 = vmul.f32 %v1556, 0.5
        %v3861 = vmul.f32 %v1557, 0.5
        %v3862 = vmul.f32 %v1558, 0.5
        %v3863 = vmul.f32 %v1559, 0.5
        %v3864 = vmul.f32 %v1560, 0.5
        %v3865 = vmul.f32 %v1561, 0.5
        %v3866 = vmul.f32 %v1562, 0.5
        %v3867 = vmul.f32 %v1563, 0.5
        %v3868 = vmul.f32 %v1564, 0.5
        %v3869 = vmul.f32 %v1565, 0.5
        %v3870 = vmul.f32 %v1566, 0.5
        %v3871 = vmul.f32 %v1567, 0.5
        %v3872 = vmul.f32 %v1568, 0.5
        %v3873 = vmul.f32 %v1569, 0.5
        %v3874 = vmul.f32 %v1570, 0.5
        %v3875 = vmul.f32 %v1571, 0.5
        %v3876 = vmul.f32 %v1572, 0.5
        %v3877 = vmul.f32 %v1573, 0.5
        %v3878 = vmul.f32 %v1574, 0.5
        %v3879 = vmul.f32 %v1575, 0.5
        %v3880 = vmul.f32 %v1576, 0.5
        %v3881 = vmul.f32 %v1577, 0.5
        %v3882 = vmul.f32 %v1578, 0.5
        %v3883 = vmul.f32 %v1579, 0.5
        %v3884 = vmul.f32 %v1580, 0.5
        %v3885 = vmul.f32 %v1581, 0.5
        %v3886 = vmul.f32 %v1582, 0.5
        %v3887 = vmul.f32 %v1583, 0.5
        %v3888 = vmul.f32 %v1584, 0.5
        %v3889 = vmul.f32 %v1585, 0.5
        %v3890 = vmul.f32 %v1586, 0.5
        %v3891 = vmul.f32 %v1587, 0.5
        %v3892 = vmul.f32 %v1588, 0.5
        %v3893 = vmul.f32 %v1589, 0.5
        %v3894 = vmul.f32 %v1590, 0.5
        %v3895 = vmul.f32 %v1591, 0.5
        %v3896 = vmul.f32 %v1592, 0.5
        %v3897 = vmul.f32 %v1593, 0.5
        %v3898 = vmul.f32 %v1594, 0.5
        %v3899 = vmul.f32 %v1595, 0.5
        %v3900 = vmul.f32 %v1596, 0.5
        %v3901 = vmul.f32 %v1597, 0.5
        %v3902 = vmul.f32 %v1598, 0.5
        %v3903 = vmul.f32 %v1599, 0.5
        %v3904 = vmul.f32 %v1600, 0.5
        %v3905 = vmul.f32 %v1601, 0.5
        %v3906 = vmul.f32 %v1602, 0.5
        %v3907 = vmul.f32 %v1603, 0.5
        %v3908 = vmul.f32 %v1604, 0.5
        %v3909 = vmul.f32 %v1605, 0.5
        %v3910 = vmul.f32 %v1606, 0.5
        %v3911 = vmul.f32 %v1607, 0.5
        %v3912 = vmul.f32 %v1608, 0.5
        %v3913 = vmul.f32 %v1609, 0.5
        %v3914 = vmul.f32 %v1610, 0.5
        %v3915 = vmul.f32 %v1611, 0.5
        %v3916 = vmul.f32 %v1612, 0.5
        %v3917 = vmul.f32 %v1613, 0.5
        %v3918 = vmul.f32 %v1614, 0.5
        %v3919 = vmul.f32 %v1615, 0.5
        %v3920 = vmul.f32 %v1616, 0.5
        %v3921 = vmul.f32 %v1617, 0.5
        %v3922 = vmul.f32 %v1618, 0.5
        %v3923 = vmul.f32 %v1619, 0.5
        %v3924 = vmul.f32 %v1620, 0.5
        %v3925 = vmul.f32 %v1621, 0.5
        %v3926 = vmul.f32 %v1622, 0.5
        %v3927 = vmul.f32 %v1623, 0.5
        %v3928 = vmul.f32 %v1624, 0.5
        %v3929 = vmul.f32 %v1625, 0.5
        %v3930 = vmul.f32 %v1626, 0.5
        %v3931 = vmul.f32 %v1627, 0.5
        %v3932 = vmul.f32 %v1628, 0.5
        %v3933 = vmul.f32 %v1629, 0.5
        %v3934 = vmul.f32 %v1630, 0.5
        %v3935 = vmul.f32 %v1631, 0.5
        %v3936 = vmul.f32 %v1632, 0.5
        %v3937 = vmul.f32 %v1633, 0.5
        %v3938 = vmul.f32 %v1634, 0.5
        %v3939 = vmul.f32 %v1635, 0.5
        %v3940 = vmul.f32 %v1636, 0.5
        %v3941 = vmul.f32 %v1637, 0.5
        %v3942 = vmul.f32 %v1638, 0.5
        %v3943 = vmul.f32 %v1639, 0.5
        %v3944 = vmul.f32 %v1640, 0.5
        %v3945 = vmul.f32 %v1641, 0.5
        %v3946 = vmul.f32 %v1642, 0.5
        %v3947 = vmul.f32 %v1643, 0.5
        %v3948 = vmul.f32 %v1644, 0.5
        %v3949 = vmul.f32 %v1645, 0.5
        %v3950 = vmul.f32 %v1646, 0.5
        %v3951 = vmul.f32 %v1647, 0.5
        %v3952 = vmul.f32 %v1648, 0.5
        %v3953 = vmul.f32 %v1649, 0.5
        %v3954 = vmul.f32 %v1650, 0.5
        %v3955 = vmul.f32 %v1651, 0.5
        %v3956 = vmul.f32 %v1652, 0.5
        %v3957 = vmul.f32 %v1653, 0.5
        %v3958 = vmul.f32 %v1654, 0.5
        %v3959 = vmul.f32 %v1655, 0.5
        %v3960 = vmul.f32 %v1656, 0.5
        %v3961 = vmul.f32 %v1657, 0.5
        %v3962 = vmul.f32 %v1658, 0.5
        %v3963 = vmul.f32 %v1659, 0.5
        %v3964 = vmul.f32 %v1660, 0.5
        %v3965 = vmul.f32 %v1661, 0.5
        %v3966 = vmul.f32 %v1662, 0.5
        %v3967 = vmul.f32 %v1663, 0.5
        %v3968 = vmul.f32 %v1664, 0.5
        %v3969 = vmul.f32 %v1665, 0.5
        %v3970 = vmul.f32 %v3714, %v1410
        %v3971 = vmul.f32 %v3715, %v1411
        %v3972 = vmul.f32 %v3716, %v1412
        %v3973 = vmul.f32 %v3717, %v1413
        %v3974 = vmul.f32 %v3718, %v1414
        %v3975 = vmul.f32 %v3719, %v1415
        %v3976 = vmul.f32 %v3720, %v1416
        %v3977 = vmul.f32 %v3721, %v1417
        %v3978 = vmul.f32 %v3722, %v1418
        %v3979 = vmul.f32 %v3723, %v1419
        %v3980 = vmul.f32 %v3724, %v1420
        %v3981 = vmul.f32 %v3725, %v1421
        %v3982 = vmul.f32 %v3726, %v1422
        %v3983 = vmul.f32 %v3727, %v1423
        %v3984 = vmul.f32 %v3728, %v1424
        %v3985 = vmul.f32 %v3729, %v1425
        %v3986 = vmul.f32 %v3730, %v1426
        %v3987 = vmul.f32 %v3731, %v1427
        %v3988 = vmul.f32 %v3732, %v1428
        %v3989 = vmul.f32 %v3733, %v1429
        %v3990 = vmul.f32 %v3734, %v1430
        %v3991 = vmul.f32 %v3735, %v1431
        %v3992 = vmul.f32 %v3736, %v1432
        %v3993 = vmul.f32 %v3737, %v1433
        %v3994 = vmul.f32 %v3738, %v1434
        %v3995 = vmul.f32 %v3739, %v1435
        %v3996 = vmul.f32 %v3740, %v1436
        %v3997 = vmul.f32 %v3741, %v1437
        %v3998 = vmul.f32 %v3742, %v1438
        %v3999 = vmul.f32 %v3743, %v1439
        %v4000 = vmul.f32 %v3744, %v1440
        %v4001 = vmul.f32 %v3745, %v1441
        %v4002 = vmul.f32 %v3746, %v1442
        %v4003 = vmul.f32 %v3747, %v1443
        %v4004 = vmul.f32 %v3748, %v1444
        %v4005 = vmul.f32 %v3749, %v1445
        %v4006 = vmul.f32 %v3750, %v1446
        %v4007 = vmul.f32 %v3751, %v1447
        %v4008 = vmul.f32 %v3752, %v1448
        %v4009 = vmul.f32 %v3753, %v1449
        %v4010 = vmul.f32 %v3754, %v1450
        %v4011 = vmul.f32 %v3755, %v1451
        %v4012 = vmul.f32 %v3756, %v1452
        %v4013 = vmul.f32 %v3757, %v1453
        %v4014 = vmul.f32 %v3758, %v1454
        %v4015 = vmul.f32 %v3759, %v1455
        %v4016 = vmul.f32 %v3760, %v1456
        %v4017 = vmul.f32 %v3761, %v1457
        %v4018 = vmul.f32 %v3762, %v1458
        %v4019 = vmul.f32 %v3763, %v1459
        %v4020 = vmul.f32 %v3764, %v1460
        %v4021 = vmul.f32 %v3765, %v1461
        %v4022 = vmul.f32 %v3766, %v1462
        %v4023 = vmul.f32 %v3767, %v1463
        %v4024 = vmul.f32 %v3768, %v1464
        %v4025 = vmul.f32 %v3769, %v1465
        %v4026 = vmul.f32 %v3770, %v1466
        %v4027 = vmul.f32 %v3771, %v1467
        %v4028 = vmul.f32 %v3772, %v1468
        %v4029 = vmul.f32 %v3773, %v1469
        %v4030 = vmul.f32 %v3774, %v1470
        %v4031 = vmul.f32 %v3775, %v1471
        %v4032 = vmul.f32 %v3776, %v1472
        %v4033 = vmul.f32 %v3777, %v1473
        %v4034 = vmul.f32 %v3778, %v1474
        %v4035 = vmul.f32 %v3779, %v1475
        %v4036 = vmul.f32 %v3780, %v1476
        %v4037 = vmul.f32 %v3781, %v1477
        %v4038 = vmul.f32 %v3782, %v1478
        %v4039 = vmul.f32 %v3783, %v1479
        %v4040 = vmul.f32 %v3784, %v1480
        %v4041 = vmul.f32 %v3785, %v1481
        %v4042 = vmul.f32 %v3786, %v1482
        %v4043 = vmul.f32 %v3787, %v1483
        %v4044 = vmul.f32 %v3788, %v1484
        %v4045 = vmul.f32 %v3789, %v1485
        %v4046 = vmul.f32 %v3790, %v1486
        %v4047 = vmul.f32 %v3791, %v1487
        %v4048 = vmul.f32 %v3792, %v1488
        %v4049 = vmul.f32 %v3793, %v1489
        %v4050 = vmul.f32 %v3794, %v1490
        %v4051 = vmul.f32 %v3795, %v1491
        %v4052 = vmul.f32 %v3796, %v1492
        %v4053 = vmul.f32 %v3797, %v1493
        %v4054 = vmul.f32 %v3798, %v1494
        %v4055 = vmul.f32 %v3799, %v1495
        %v4056 = vmul.f32 %v3800, %v1496
        %v4057 = vmul.f32 %v3801, %v1497
        %v4058 = vmul.f32 %v3802, %v1498
        %v4059 = vmul.f32 %v3803, %v1499
        %v4060 = vmul.f32 %v3804, %v1500
        %v4061 = vmul.f32 %v3805, %v1501
        %v4062 = vmul.f32 %v3806, %v1502
        %v4063 = vmul.f32 %v3807, %v1503
        %v4064 = vmul.f32 %v3808, %v1504
        %v4065 = vmul.f32 %v3809, %v1505
        %v4066 = vmul.f32 %v3810, %v1506
        %v4067 = vmul.f32 %v3811, %v1507
        %v4068 = vmul.f32 %v3812, %v1508
        %v4069 = vmul.f32 %v3813, %v1509
        %v4070 = vmul.f32 %v3814, %v1510
        %v4071 = vmul.f32 %v3815, %v1511
        %v4072 = vmul.f32 %v3816, %v1512
        %v4073 = vmul.f32 %v3817, %v1513
        %v4074 = vmul.f32 %v3818, %v1514
        %v4075 = vmul.f32 %v3819, %v1515
        %v4076 = vmul.f32 %v3820, %v1516
        %v4077 = vmul.f32 %v3821, %v1517
        %v4078 = vmul.f32 %v3822, %v1518
        %v4079 = vmul.f32 %v3823, %v1519
        %v4080 = vmul.f32 %v3824, %v1520
        %v4081 = vmul.f32 %v3825, %v1521
        %v4082 = vmul.f32 %v3826, %v1522
        %v4083 = vmul.f32 %v3827, %v1523
        %v4084 = vmul.f32 %v3828, %v1524
        %v4085 = vmul.f32 %v3829, %v1525
        %v4086 = vmul.f32 %v3830, %v1526
        %v4087 = vmul.f32 %v3831, %v1527
        %v4088 = vmul.f32 %v3832, %v1528
        %v4089 = vmul.f32 %v3833, %v1529
        %v4090 = vmul.f32 %v3834, %v1530
        %v4091 = vmul.f32 %v3835, %v1531
        %v4092 = vmul.f32 %v3836, %v1532
        %v4093 = vmul.f32 %v3837, %v1533
        %v4094 = vmul.f32 %v3838, %v1534
        %v4095 = vmul.f32 %v3839, %v1535
        %v4096 = vmul.f32 %v3840, %v1536
        %v4097 = vmul.f32 %v3841, %v1537
        %v4098 = vmul.f32 %v3842, %v1538
        %v4099 = vmul.f32 %v3843, %v1539
        %v4100 = vmul.f32 %v3844, %v1540
        %v4101 = vmul.f32 %v3845, %v1541
        %v4102 = vmul.f32 %v3846, %v1542
        %v4103 = vmul.f32 %v3847, %v1543
        %v4104 = vmul.f32 %v3848, %v1544
        %v4105 = vmul.f32 %v3849, %v1545
        %v4106 = vmul.f32 %v3850, %v1546
        %v4107 = vmul.f32 %v3851, %v1547
        %v4108 = vmul.f32 %v3852, %v1548
        %v4109 = vmul.f32 %v3853, %v1549
        %v4110 = vmul.f32 %v3854, %v1550
        %v4111 = vmul.f32 %v3855, %v1551
        %v4112 = vmul.f32 %v3856, %v1552
        %v4113 = vmul.f32 %v3857, %v1553
        %v4114 = vmul.f32 %v3858, %v1554
        %v4115 = vmul.f32 %v3859, %v1555
        %v4116 = vmul.f32 %v3860, %v1556
        %v4117 = vmul.f32 %v3861, %v1557
        %v4118 = vmul.f32 %v3862, %v1558
        %v4119 = vmul.f32 %v3863, %v1559
        %v4120 = vmul.f32 %v3864, %v1560
        %v4121 = vmul.f32 %v3865, %v1561
        %v4122 = vmul.f32 %v3866, %v1562
        %v4123 = vmul.f32 %v3867, %v1563
        %v4124 = vmul.f32 %v3868, %v1564
        %v4125 = vmul.f32 %v3869, %v1565
        %v4126 = vmul.f32 %v3870, %v1566
        %v4127 = vmul.f32 %v3871, %v1567
        %v4128 = vmul.f32 %v3872, %v1568
        %v4129 = vmul.f32 %v3873, %v1569
        %v4130 = vmul.f32 %v3874, %v1570
        %v4131 = vmul.f32 %v3875, %v1571
        %v4132 = vmul.f32 %v3876, %v1572
        %v4133 = vmul.f32 %v3877, %v1573
        %v4134 = vmul.f32 %v3878, %v1574
        %v4135 = vmul.f32 %v3879, %v1575
        %v4136 = vmul.f32 %v3880, %v1576
        %v4137 = vmul.f32 %v3881, %v1577
        %v4138 = vmul.f32 %v3882, %v1578
        %v4139 = vmul.f32 %v3883, %v1579
        %v4140 = vmul.f32 %v3884, %v1580
        %v4141 = vmul.f32 %v3885, %v1581
        %v4142 = vmul.f32 %v3886, %v1582
        %v4143 = vmul.f32 %v3887, %v1583
        %v4144 = vmul.f32 %v3888, %v1584
        %v4145 = vmul.f32 %v3889, %v1585
        %v4146 = vmul.f32 %v3890, %v1586
        %v4147 = vmul.f32 %v3891, %v1587
        %v4148 = vmul.f32 %v3892, %v1588
        %v4149 = vmul.f32 %v3893, %v1589
        %v4150 = vmul.f32 %v3894, %v1590
        %v4151 = vmul.f32 %v3895, %v1591
        %v4152 = vmul.f32 %v3896, %v1592
        %v4153 = vmul.f32 %v3897, %v1593
        %v4154 = vmul.f32 %v3898, %v1594
        %v4155 = vmul.f32 %v3899, %v1595
        %v4156 = vmul.f32 %v3900, %v1596
        %v4157 = vmul.f32 %v3901, %v1597
        %v4158 = vmul.f32 %v3902, %v1598
        %v4159 = vmul.f32 %v3903, %v1599
        %v4160 = vmul.f32 %v3904, %v1600
        %v4161 = vmul.f32 %v3905, %v1601
        %v4162 = vmul.f32 %v3906, %v1602
        %v4163 = vmul.f32 %v3907, %v1603
        %v4164 = vmul.f32 %v3908, %v1604
        %v4165 = vmul.f32 %v3909, %v1605
        %v4166 = vmul.f32 %v3910, %v1606
        %v4167 = vmul.f32 %v3911, %v1607
        %v4168 = vmul.f32 %v3912, %v1608
        %v4169 = vmul.f32 %v3913, %v1609
        %v4170 = vmul.f32 %v3914, %v1610
        %v4171 = vmul.f32 %v3915, %v1611
        %v4172 = vmul.f32 %v3916, %v1612
        %v4173 = vmul.f32 %v3917, %v1613
        %v4174 = vmul.f32 %v3918, %v1614
        %v4175 = vmul.f32 %v3919, %v1615
        %v4176 = vmul.f32 %v3920, %v1616
        %v4177 = vmul.f32 %v3921, %v1617
        %v4178 = vmul.f32 %v3922, %v1618
        %v4179 = vmul.f32 %v3923, %v1619
        %v4180 = vmul.f32 %v3924, %v1620
        %v4181 = vmul.f32 %v3925, %v1621
        %v4182 = vmul.f32 %v3926, %v1622
        %v4183 = vmul.f32 %v3927, %v1623
        %v4184 = vmul.f32 %v3928, %v1624
        %v4185 = vmul.f32 %v3929, %v1625
        %v4186 = vmul.f32 %v3930, %v1626
        %v4187 = vmul.f32 %v3931, %v1627
        %v4188 = vmul.f32 %v3932, %v1628
        %v4189 = vmul.f32 %v3933, %v1629
        %v4190 = vmul.f32 %v3934, %v1630
        %v4191 = vmul.f32 %v3935, %v1631
        %v4192 = vmul.f32 %v3936, %v1632
        %v4193 = vmul.f32 %v3937, %v1633
        %v4194 = vmul.f32 %v3938, %v1634
        %v4195 = vmul.f32 %v3939, %v1635
        %v4196 = vmul.f32 %v3940, %v1636
        %v4197 = vmul.f32 %v3941, %v1637
        %v4198 = vmul.f32 %v3942, %v1638
        %v4199 = vmul.f32 %v3943, %v1639
        %v4200 = vmul.f32 %v3944, %v1640
        %v4201 = vmul.f32 %v3945, %v1641
        %v4202 = vmul.f32 %v3946, %v1642
        %v4203 = vmul.f32 %v3947, %v1643
        %v4204 = vmul.f32 %v3948, %v1644
        %v4205 = vmul.f32 %v3949, %v1645
        %v4206 = vmul.f32 %v3950, %v1646
        %v4207 = vmul.f32 %v3951, %v1647
        %v4208 = vmul.f32 %v3952, %v1648
        %v4209 = vmul.f32 %v3953, %v1649
        %v4210 = vmul.f32 %v3954, %v1650
        %v4211 = vmul.f32 %v3955, %v1651
        %v4212 = vmul.f32 %v3956, %v1652
        %v4213 = vmul.f32 %v3957, %v1653
        %v4214 = vmul.f32 %v3958, %v1654
        %v4215 = vmul.f32 %v3959, %v1655
        %v4216 = vmul.f32 %v3960, %v1656
        %v4217 = vmul.f32 %v3961, %v1657
        %v4218 = vmul.f32 %v3962, %v1658
        %v4219 = vmul.f32 %v3963, %v1659
        %v4220 = vmul.f32 %v3964, %v1660
        %v4221 = vmul.f32 %v3965, %v1661
        %v4222 = vmul.f32 %v3966, %v1662
        %v4223 = vmul.f32 %v3967, %v1663
        %v4224 = vmul.f32 %v3968, %v1664
        %v4225 = vmul.f32 %v3969, %v1665
        %v4226 = vmul.f32 %v642, -2.0
        %v4227 = vmul.f32 %v643, -2.0
        %v4228 = vmul.f32 %v644, -2.0
        %v4229 = vmul.f32 %v645, -2.0
        %v4230 = vmul.f32 %v646, -2.0
        %v4231 = vmul.f32 %v647, -2.0
        %v4232 = vmul.f32 %v648, -2.0
        %v4233 = vmul.f32 %v649, -2.0
        %v4234 = vmul.f32 %v650, -2.0
        %v4235 = vmul.f32 %v651, -2.0
        %v4236 = vmul.f32 %v652, -2.0
        %v4237 = vmul.f32 %v653, -2.0
        %v4238 = vmul.f32 %v654, -2.0
        %v4239 = vmul.f32 %v655, -2.0
        %v4240 = vmul.f32 %v656, -2.0
        %v4241 = vmul.f32 %v657, -2.0
        %v4242 = vmul.f32 %v658, -2.0
        %v4243 = vmul.f32 %v659, -2.0
        %v4244 = vmul.f32 %v660, -2.0
        %v4245 = vmul.f32 %v661, -2.0
        %v4246 = vmul.f32 %v662, -2.0
        %v4247 = vmul.f32 %v663, -2.0
        %v4248 = vmul.f32 %v664, -2.0
        %v4249 = vmul.f32 %v665, -2.0
        %v4250 = vmul.f32 %v666, -2.0
        %v4251 = vmul.f32 %v667, -2.0
        %v4252 = vmul.f32 %v668, -2.0
        %v4253 = vmul.f32 %v669, -2.0
        %v4254 = vmul.f32 %v670, -2.0
        %v4255 = vmul.f32 %v671, -2.0
        %v4256 = vmul.f32 %v672, -2.0
        %v4257 = vmul.f32 %v673, -2.0
        %v4258 = vmul.f32 %v674, -2.0
        %v4259 = vmul.f32 %v675, -2.0
        %v4260 = vmul.f32 %v676, -2.0
        %v4261 = vmul.f32 %v677, -2.0
        %v4262 = vmul.f32 %v678, -2.0
        %v4263 = vmul.f32 %v679, -2.0
        %v4264 = vmul.f32 %v680, -2.0
        %v4265 = vmul.f32 %v681, -2.0
        %v4266 = vmul.f32 %v682, -2.0
        %v4267 = vmul.f32 %v683, -2.0
        %v4268 = vmul.f32 %v684, -2.0
        %v4269 = vmul.f32 %v685, -2.0
        %v4270 = vmul.f32 %v686, -2.0
        %v4271 = vmul.f32 %v687, -2.0
        %v4272 = vmul.f32 %v688, -2.0
        %v4273 = vmul.f32 %v689, -2.0
        %v4274 = vmul.f32 %v690, -2.0
        %v4275 = vmul.f32 %v691, -2.0
        %v4276 = vmul.f32 %v692, -2.0
        %v4277 = vmul.f32 %v693, -2.0
        %v4278 = vmul.f32 %v694, -2.0
        %v4279 = vmul.f32 %v695, -2.0
        %v4280 = vmul.f32 %v696, -2.0
        %v4281 = vmul.f32 %v697, -2.0
        %v4282 = vmul.f32 %v698, -2.0
        %v4283 = vmul.f32 %v699, -2.0
        %v4284 = vmul.f32 %v700, -2.0
        %v4285 = vmul.f32 %v701, -2.0
        %v4286 = vmul.f32 %v702, -2.0
        %v4287 = vmul.f32 %v703, -2.0
        %v4288 = vmul.f32 %v704, -2.0
        %v4289 = vmul.f32 %v705, -2.0
        %v4290 = vmul.f32 %v706, -2.0
        %v4291 = vmul.f32 %v707, -2.0
        %v4292 = vmul.f32 %v708, -2.0
        %v4293 = vmul.f32 %v709, -2.0
        %v4294 = vmul.f32 %v710, -2.0
        %v4295 = vmul.f32 %v711, -2.0
        %v4296 = vmul.f32 %v712, -2.0
        %v4297 = vmul.f32 %v713, -2.0
        %v4298 = vmul.f32 %v714, -2.0
        %v4299 = vmul.f32 %v715, -2.0
        %v4300 = vmul.f32 %v716, -2.0
        %v4301 = vmul.f32 %v717, -2.0
        %v4302 = vmul.f32 %v718, -2.0
        %v4303 = vmul.f32 %v719, -2.0
        %v4304 = vmul.f32 %v720, -2.0
        %v4305 = vmul.f32 %v721, -2.0
        %v4306 = vmul.f32 %v722, -2.0
        %v4307 = vmul.f32 %v723, -2.0
        %v4308 = vmul.f32 %v724, -2.0
        %v4309 = vmul.f32 %v725, -2.0
        %v4310 = vmul.f32 %v726, -2.0
        %v4311 = vmul.f32 %v727, -2.0
        %v4312 = vmul.f32 %v728, -2.0
        %v4313 = vmul.f32 %v729, -2.0
        %v4314 = vmul.f32 %v730, -2.0
        %v4315 = vmul.f32 %v731, -2.0
        %v4316 = vmul.f32 %v732, -2.0
        %v4317 = vmul.f32 %v733, -2.0
        %v4318 = vmul.f32 %v734, -2.0
        %v4319 = vmul.f32 %v735, -2.0
        %v4320 = vmul.f32 %v736, -2.0
        %v4321 = vmul.f32 %v737, -2.0
        %v4322 = vmul.f32 %v738, -2.0
        %v4323 = vmul.f32 %v739, -2.0
        %v4324 = vmul.f32 %v740, -2.0
        %v4325 = vmul.f32 %v741, -2.0
        %v4326 = vmul.f32 %v742, -2.0
        %v4327 = vmul.f32 %v743, -2.0
        %v4328 = vmul.f32 %v744, -2.0
        %v4329 = vmul.f32 %v745, -2.0
        %v4330 = vmul.f32 %v746, -2.0
        %v4331 = vmul.f32 %v747, -2.0
        %v4332 = vmul.f32 %v748, -2.0
        %v4333 = vmul.f32 %v749, -2.0
        %v4334 = vmul.f32 %v750, -2.0
        %v4335 = vmul.f32 %v751, -2.0
        %v4336 = vmul.f32 %v752, -2.0
        %v4337 = vmul.f32 %v753, -2.0
        %v4338 = vmul.f32 %v754, -2.0
        %v4339 = vmul.f32 %v755, -2.0
        %v4340 = vmul.f32 %v756, -2.0
        %v4341 = vmul.f32 %v757, -2.0
        %v4342 = vmul.f32 %v758, -2.0
        %v4343 = vmul.f32 %v759, -2.0
        %v4344 = vmul.f32 %v760, -2.0
        %v4345 = vmul.f32 %v761, -2.0
        %v4346 = vmul.f32 %v762, -2.0
        %v4347 = vmul.f32 %v763, -2.0
        %v4348 = vmul.f32 %v764, -2.0
        %v4349 = vmul.f32 %v765, -2.0
        %v4350 = vmul.f32 %v766, -2.0
        %v4351 = vmul.f32 %v767, -2.0
        %v4352 = vmul.f32 %v768, -2.0
        %v4353 = vmul.f32 %v769, -2.0
        %v4354 = vmul.f32 %v770, -2.0
        %v4355 = vmul.f32 %v771, -2.0
        %v4356 = vmul.f32 %v772, -2.0
        %v4357 = vmul.f32 %v773, -2.0
        %v4358 = vmul.f32 %v774, -2.0
        %v4359 = vmul.f32 %v775, -2.0
        %v4360 = vmul.f32 %v776, -2.0
        %v4361 = vmul.f32 %v777, -2.0
        %v4362 = vmul.f32 %v778, -2.0
        %v4363 = vmul.f32 %v779, -2.0
        %v4364 = vmul.f32 %v780, -2.0
        %v4365 = vmul.f32 %v781, -2.0
        %v4366 = vmul.f32 %v782, -2.0
        %v4367 = vmul.f32 %v783, -2.0
        %v4368 = vmul.f32 %v784, -2.0
        %v4369 = vmul.f32 %v785, -2.0
        %v4370 = vmul.f32 %v786, -2.0
        %v4371 = vmul.f32 %v787, -2.0
        %v4372 = vmul.f32 %v788, -2.0
        %v4373 = vmul.f32 %v789, -2.0
        %v4374 = vmul.f32 %v790, -2.0
        %v4375 = vmul.f32 %v791, -2.0
        %v4376 = vmul.f32 %v792, -2.0
        %v4377 = vmul.f32 %v793, -2.0
        %v4378 = vmul.f32 %v794, -2.0
        %v4379 = vmul.f32 %v795, -2.0
        %v4380 = vmul.f32 %v796, -2.0
        %v4381 = vmul.f32 %v797, -2.0
        %v4382 = vmul.f32 %v798, -2.0
        %v4383 = vmul.f32 %v799, -2.0
        %v4384 = vmul.f32 %v800, -2.0
        %v4385 = vmul.f32 %v801, -2.0
        %v4386 = vmul.f32 %v802, -2.0
        %v4387 = vmul.f32 %v803, -2.0
        %v4388 = vmul.f32 %v804, -2.0
        %v4389 = vmul.f32 %v805, -2.0
        %v4390 = vmul.f32 %v806, -2.0
        %v4391 = vmul.f32 %v807, -2.0
        %v4392 = vmul.f32 %v808, -2.0
        %v4393 = vmul.f32 %v809, -2.0
        %v4394 = vmul.f32 %v810, -2.0
        %v4395 = vmul.f32 %v811, -2.0
        %v4396 = vmul.f32 %v812, -2.0
        %v4397 = vmul.f32 %v813, -2.0
        %v4398 = vmul.f32 %v814, -2.0
        %v4399 = vmul.f32 %v815, -2.0
        %v4400 = vmul.f32 %v816, -2.0
        %v4401 = vmul.f32 %v817, -2.0
        %v4402 = vmul.f32 %v818, -2.0
        %v4403 = vmul.f32 %v819, -2.0
        %v4404 = vmul.f32 %v820, -2.0
        %v4405 = vmul.f32 %v821, -2.0
        %v4406 = vmul.f32 %v822, -2.0
        %v4407 = vmul.f32 %v823, -2.0
        %v4408 = vmul.f32 %v824, -2.0
        %v4409 = vmul.f32 %v825, -2.0
        %v4410 = vmul.f32 %v826, -2.0
        %v4411 = vmul.f32 %v827, -2.0
        %v4412 = vmul.f32 %v828, -2.0
        %v4413 = vmul.f32 %v829, -2.0
        %v4414 = vmul.f32 %v830, -2.0
        %v4415 = vmul.f32 %v831, -2.0
        %v4416 = vmul.f32 %v832, -2.0
        %v4417 = vmul.f32 %v833, -2.0
        %v4418 = vmul.f32 %v834, -2.0
        %v4419 = vmul.f32 %v835, -2.0
        %v4420 = vmul.f32 %v836, -2.0
        %v4421 = vmul.f32 %v837, -2.0
        %v4422 = vmul.f32 %v838, -2.0
        %v4423 = vmul.f32 %v839, -2.0
        %v4424 = vmul.f32 %v840, -2.0
        %v4425 = vmul.f32 %v841, -2.0
        %v4426 = vmul.f32 %v842, -2.0
        %v4427 = vmul.f32 %v843, -2.0
        %v4428 = vmul.f32 %v844, -2.0
        %v4429 = vmul.f32 %v845, -2.0
        %v4430 = vmul.f32 %v846, -2.0
        %v4431 = vmul.f32 %v847, -2.0
        %v4432 = vmul.f32 %v848, -2.0
        %v4433 = vmul.f32 %v849, -2.0
        %v4434 = vmul.f32 %v850, -2.0
        %v4435 = vmul.f32 %v851, -2.0
        %v4436 = vmul.f32 %v852, -2.0
        %v4437 = vmul.f32 %v853, -2.0
        %v4438 = vmul.f32 %v854, -2.0
        %v4439 = vmul.f32 %v855, -2.0
        %v4440 = vmul.f32 %v856, -2.0
        %v4441 = vmul.f32 %v857, -2.0
        %v4442 = vmul.f32 %v858, -2.0
        %v4443 = vmul.f32 %v859, -2.0
        %v4444 = vmul.f32 %v860, -2.0
        %v4445 = vmul.f32 %v861, -2.0
        %v4446 = vmul.f32 %v862, -2.0
        %v4447 = vmul.f32 %v863, -2.0
        %v4448 = vmul.f32 %v864, -2.0
        %v4449 = vmul.f32 %v865, -2.0
        %v4450 = vmul.f32 %v866, -2.0
        %v4451 = vmul.f32 %v867, -2.0
        %v4452 = vmul.f32 %v868, -2.0
        %v4453 = vmul.f32 %v869, -2.0
        %v4454 = vmul.f32 %v870, -2.0
        %v4455 = vmul.f32 %v871, -2.0
        %v4456 = vmul.f32 %v872, -2.0
        %v4457 = vmul.f32 %v873, -2.0
        %v4458 = vmul.f32 %v874, -2.0
        %v4459 = vmul.f32 %v875, -2.0
        %v4460 = vmul.f32 %v876, -2.0
        %v4461 = vmul.f32 %v877, -2.0
        %v4462 = vmul.f32 %v878, -2.0
        %v4463 = vmul.f32 %v879, -2.0
        %v4464 = vmul.f32 %v880, -2.0
        %v4465 = vmul.f32 %v881, -2.0
        %v4466 = vmul.f32 %v882, -2.0
        %v4467 = vmul.f32 %v883, -2.0
        %v4468 = vmul.f32 %v884, -2.0
        %v4469 = vmul.f32 %v885, -2.0
        %v4470 = vmul.f32 %v886, -2.0
        %v4471 = vmul.f32 %v887, -2.0
        %v4472 = vmul.f32 %v888, -2.0
        %v4473 = vmul.f32 %v889, -2.0
        %v4474 = vmul.f32 %v890, -2.0
        %v4475 = vmul.f32 %v891, -2.0
        %v4476 = vmul.f32 %v892, -2.0
        %v4477 = vmul.f32 %v893, -2.0
        %v4478 = vmul.f32 %v894, -2.0
        %v4479 = vmul.f32 %v895, -2.0
        %v4480 = vmul.f32 %v896, -2.0
        %v4481 = vmul.f32 %v897, -2.0
        %v4482 = vmul.f32 %v4226, 1.442695
        %v4483 = vpow.pop %v4482
        %v4484 = vmul.f32 %v4227, 1.442695
        %v4485 = vpow.pop %v4484
        %v4486 = vmul.f32 %v4228, 1.442695
        %v4487 = vpow.pop %v4486
        %v4488 = vmul.f32 %v4229, 1.442695
        %v4489 = vpow.pop %v4488
        %v4490 = vmul.f32 %v4230, 1.442695
        %v4491 = vpow.pop %v4490
        %v4492 = vmul.f32 %v4231, 1.442695
        %v4493 = vpow.pop %v4492
        %v4494 = vmul.f32 %v4232, 1.442695
        %v4495 = vpow.pop %v4494
        %v4496 = vmul.f32 %v4233, 1.442695
        %v4497 = vpow.pop %v4496
        %v4498 = vmul.f32 %v4234, 1.442695
        %v4499 = vpow.pop %v4498
        %v4500 = vmul.f32 %v4235, 1.442695
        %v4501 = vpow.pop %v4500
        %v4502 = vmul.f32 %v4236, 1.442695
        %v4503 = vpow.pop %v4502
        %v4504 = vmul.f32 %v4237, 1.442695
        %v4505 = vpow.pop %v4504
        %v4506 = vmul.f32 %v4238, 1.442695
        %v4507 = vpow.pop %v4506
        %v4508 = vmul.f32 %v4239, 1.442695
        %v4509 = vpow.pop %v4508
        %v4510 = vmul.f32 %v4240, 1.442695
        %v4511 = vpow.pop %v4510
        %v4512 = vmul.f32 %v4241, 1.442695
        %v4513 = vpow.pop %v4512
        %v4514 = vmul.f32 %v4242, 1.442695
        %v4515 = vpow.pop %v4514
        %v4516 = vmul.f32 %v4243, 1.442695
        %v4517 = vpow.pop %v4516
        %v4518 = vmul.f32 %v4244, 1.442695
        %v4519 = vpow.pop %v4518
        %v4520 = vmul.f32 %v4245, 1.442695
        %v4521 = vpow.pop %v4520
        %v4522 = vmul.f32 %v4246, 1.442695
        %v4523 = vpow.pop %v4522
        %v4524 = vmul.f32 %v4247, 1.442695
        %v4525 = vpow.pop %v4524
        %v4526 = vmul.f32 %v4248, 1.442695
        %v4527 = vpow.pop %v4526
        %v4528 = vmul.f32 %v4249, 1.442695
        %v4529 = vpow.pop %v4528
        %v4530 = vmul.f32 %v4250, 1.442695
        %v4531 = vpow.pop %v4530
        %v4532 = vmul.f32 %v4251, 1.442695
        %v4533 = vpow.pop %v4532
        %v4534 = vmul.f32 %v4252, 1.442695
        %v4535 = vpow.pop %v4534
        %v4536 = vmul.f32 %v4253, 1.442695
        %v4537 = vpow.pop %v4536
        %v4538 = vmul.f32 %v4254, 1.442695
        %v4539 = vpow.pop %v4538
        %v4540 = vmul.f32 %v4255, 1.442695
        %v4541 = vpow.pop %v4540
        %v4542 = vmul.f32 %v4256, 1.442695
        %v4543 = vpow.pop %v4542
        %v4544 = vmul.f32 %v4257, 1.442695
        %v4545 = vpow.pop %v4544
        %v4546 = vmul.f32 %v4258, 1.442695
        %v4547 = vpow.pop %v4546
        %v4548 = vmul.f32 %v4259, 1.442695
        %v4549 = vpow.pop %v4548
        %v4550 = vmul.f32 %v4260, 1.442695
        %v4551 = vpow.pop %v4550
        %v4552 = vmul.f32 %v4261, 1.442695
        %v4553 = vpow.pop %v4552
        %v4554 = vmul.f32 %v4262, 1.442695
        %v4555 = vpow.pop %v4554
        %v4556 = vmul.f32 %v4263, 1.442695
        %v4557 = vpow.pop %v4556
        %v4558 = vmul.f32 %v4264, 1.442695
        %v4559 = vpow.pop %v4558
        %v4560 = vmul.f32 %v4265, 1.442695
        %v4561 = vpow.pop %v4560
        %v4562 = vmul.f32 %v4266, 1.442695
        %v4563 = vpow.pop %v4562
        %v4564 = vmul.f32 %v4267, 1.442695
        %v4565 = vpow.pop %v4564
        %v4566 = vmul.f32 %v4268, 1.442695
        %v4567 = vpow.pop %v4566
        %v4568 = vmul.f32 %v4269, 1.442695
        %v4569 = vpow.pop %v4568
        %v4570 = vmul.f32 %v4270, 1.442695
        %v4571 = vpow.pop %v4570
        %v4572 = vmul.f32 %v4271, 1.442695
        %v4573 = vpow.pop %v4572
        %v4574 = vmul.f32 %v4272, 1.442695
        %v4575 = vpow.pop %v4574
        %v4576 = vmul.f32 %v4273, 1.442695
        %v4577 = vpow.pop %v4576
        %v4578 = vmul.f32 %v4274, 1.442695
        %v4579 = vpow.pop %v4578
        %v4580 = vmul.f32 %v4275, 1.442695
        %v4581 = vpow.pop %v4580
        %v4582 = vmul.f32 %v4276, 1.442695
        %v4583 = vpow.pop %v4582
        %v4584 = vmul.f32 %v4277, 1.442695
        %v4585 = vpow.pop %v4584
        %v4586 = vmul.f32 %v4278, 1.442695
        %v4587 = vpow.pop %v4586
        %v4588 = vmul.f32 %v4279, 1.442695
        %v4589 = vpow.pop %v4588
        %v4590 = vmul.f32 %v4280, 1.442695
        %v4591 = vpow.pop %v4590
        %v4592 = vmul.f32 %v4281, 1.442695
        %v4593 = vpow.pop %v4592
        %v4594 = vmul.f32 %v4282, 1.442695
        %v4595 = vpow.pop %v4594
        %v4596 = vmul.f32 %v4283, 1.442695
        %v4597 = vpow.pop %v4596
        %v4598 = vmul.f32 %v4284, 1.442695
        %v4599 = vpow.pop %v4598
        %v4600 = vmul.f32 %v4285, 1.442695
        %v4601 = vpow.pop %v4600
        %v4602 = vmul.f32 %v4286, 1.442695
        %v4603 = vpow.pop %v4602
        %v4604 = vmul.f32 %v4287, 1.442695
        %v4605 = vpow.pop %v4604
        %v4606 = vmul.f32 %v4288, 1.442695
        %v4607 = vpow.pop %v4606
        %v4608 = vmul.f32 %v4289, 1.442695
        %v4609 = vpow.pop %v4608
        %v4610 = vmul.f32 %v4290, 1.442695
        %v4611 = vpow.pop %v4610
        %v4612 = vmul.f32 %v4291, 1.442695
        %v4613 = vpow.pop %v4612
        %v4614 = vmul.f32 %v4292, 1.442695
        %v4615 = vpow.pop %v4614
        %v4616 = vmul.f32 %v4293, 1.442695
        %v4617 = vpow.pop %v4616
        %v4618 = vmul.f32 %v4294, 1.442695
        %v4619 = vpow.pop %v4618
        %v4620 = vmul.f32 %v4295, 1.442695
        %v4621 = vpow.pop %v4620
        %v4622 = vmul.f32 %v4296, 1.442695
        %v4623 = vpow.pop %v4622
        %v4624 = vmul.f32 %v4297, 1.442695
        %v4625 = vpow.pop %v4624
        %v4626 = vmul.f32 %v4298, 1.442695
        %v4627 = vpow.pop %v4626
        %v4628 = vmul.f32 %v4299, 1.442695
        %v4629 = vpow.pop %v4628
        %v4630 = vmul.f32 %v4300, 1.442695
        %v4631 = vpow.pop %v4630
        %v4632 = vmul.f32 %v4301, 1.442695
        %v4633 = vpow.pop %v4632
        %v4634 = vmul.f32 %v4302, 1.442695
        %v4635 = vpow.pop %v4634
        %v4636 = vmul.f32 %v4303, 1.442695
        %v4637 = vpow.pop %v4636
        %v4638 = vmul.f32 %v4304, 1.442695
        %v4639 = vpow.pop %v4638
        %v4640 = vmul.f32 %v4305, 1.442695
        %v4641 = vpow.pop %v4640
        %v4642 = vmul.f32 %v4306, 1.442695
        %v4643 = vpow.pop %v4642
        %v4644 = vmul.f32 %v4307, 1.442695
        %v4645 = vpow.pop %v4644
        %v4646 = vmul.f32 %v4308, 1.442695
        %v4647 = vpow.pop %v4646
        %v4648 = vmul.f32 %v4309, 1.442695
        %v4649 = vpow.pop %v4648
        %v4650 = vmul.f32 %v4310, 1.442695
        %v4651 = vpow.pop %v4650
        %v4652 = vmul.f32 %v4311, 1.442695
        %v4653 = vpow.pop %v4652
        %v4654 = vmul.f32 %v4312, 1.442695
        %v4655 = vpow.pop %v4654
        %v4656 = vmul.f32 %v4313, 1.442695
        %v4657 = vpow.pop %v4656
        %v4658 = vmul.f32 %v4314, 1.442695
        %v4659 = vpow.pop %v4658
        %v4660 = vmul.f32 %v4315, 1.442695
        %v4661 = vpow.pop %v4660
        %v4662 = vmul.f32 %v4316, 1.442695
        %v4663 = vpow.pop %v4662
        %v4664 = vmul.f32 %v4317, 1.442695
        %v4665 = vpow.pop %v4664
        %v4666 = vmul.f32 %v4318, 1.442695
        %v4667 = vpow.pop %v4666
        %v4668 = vmul.f32 %v4319, 1.442695
        %v4669 = vpow.pop %v4668
        %v4670 = vmul.f32 %v4320, 1.442695
        %v4671 = vpow.pop %v4670
        %v4672 = vmul.f32 %v4321, 1.442695
        %v4673 = vpow.pop %v4672
        %v4674 = vmul.f32 %v4322, 1.442695
        %v4675 = vpow.pop %v4674
        %v4676 = vmul.f32 %v4323, 1.442695
        %v4677 = vpow.pop %v4676
        %v4678 = vmul.f32 %v4324, 1.442695
        %v4679 = vpow.pop %v4678
        %v4680 = vmul.f32 %v4325, 1.442695
        %v4681 = vpow.pop %v4680
        %v4682 = vmul.f32 %v4326, 1.442695
        %v4683 = vpow.pop %v4682
        %v4684 = vmul.f32 %v4327, 1.442695
        %v4685 = vpow.pop %v4684
        %v4686 = vmul.f32 %v4328, 1.442695
        %v4687 = vpow.pop %v4686
        %v4688 = vmul.f32 %v4329, 1.442695
        %v4689 = vpow.pop %v4688
        %v4690 = vmul.f32 %v4330, 1.442695
        %v4691 = vpow.pop %v4690
        %v4692 = vmul.f32 %v4331, 1.442695
        %v4693 = vpow.pop %v4692
        %v4694 = vmul.f32 %v4332, 1.442695
        %v4695 = vpow.pop %v4694
        %v4696 = vmul.f32 %v4333, 1.442695
        %v4697 = vpow.pop %v4696
        %v4698 = vmul.f32 %v4334, 1.442695
        %v4699 = vpow.pop %v4698
        %v4700 = vmul.f32 %v4335, 1.442695
        %v4701 = vpow.pop %v4700
        %v4702 = vmul.f32 %v4336, 1.442695
        %v4703 = vpow.pop %v4702
        %v4704 = vmul.f32 %v4337, 1.442695
        %v4705 = vpow.pop %v4704
        %v4706 = vmul.f32 %v4338, 1.442695
        %v4707 = vpow.pop %v4706
        %v4708 = vmul.f32 %v4339, 1.442695
        %v4709 = vpow.pop %v4708
        %v4710 = vmul.f32 %v4340, 1.442695
        %v4711 = vpow.pop %v4710
        %v4712 = vmul.f32 %v4341, 1.442695
        %v4713 = vpow.pop %v4712
        %v4714 = vmul.f32 %v4342, 1.442695
        %v4715 = vpow.pop %v4714
        %v4716 = vmul.f32 %v4343, 1.442695
        %v4717 = vpow.pop %v4716
        %v4718 = vmul.f32 %v4344, 1.442695
        %v4719 = vpow.pop %v4718
        %v4720 = vmul.f32 %v4345, 1.442695
        %v4721 = vpow.pop %v4720
        %v4722 = vmul.f32 %v4346, 1.442695
        %v4723 = vpow.pop %v4722
        %v4724 = vmul.f32 %v4347, 1.442695
        %v4725 = vpow.pop %v4724
        %v4726 = vmul.f32 %v4348, 1.442695
        %v4727 = vpow.pop %v4726
        %v4728 = vmul.f32 %v4349, 1.442695
        %v4729 = vpow.pop %v4728
        %v4730 = vmul.f32 %v4350, 1.442695
        %v4731 = vpow.pop %v4730
        %v4732 = vmul.f32 %v4351, 1.442695
        %v4733 = vpow.pop %v4732
        %v4734 = vmul.f32 %v4352, 1.442695
        %v4735 = vpow.pop %v4734
        %v4736 = vmul.f32 %v4353, 1.442695
        %v4737 = vpow.pop %v4736
        %v4738 = vmul.f32 %v4354, 1.442695
        %v4739 = vpow.pop %v4738
        %v4740 = vmul.f32 %v4355, 1.442695
        %v4741 = vpow.pop %v4740
        %v4742 = vmul.f32 %v4356, 1.442695
        %v4743 = vpow.pop %v4742
        %v4744 = vmul.f32 %v4357, 1.442695
        %v4745 = vpow.pop %v4744
        %v4746 = vmul.f32 %v4358, 1.442695
        %v4747 = vpow.pop %v4746
        %v4748 = vmul.f32 %v4359, 1.442695
        %v4749 = vpow.pop %v4748
        %v4750 = vmul.f32 %v4360, 1.442695
        %v4751 = vpow.pop %v4750
        %v4752 = vmul.f32 %v4361, 1.442695
        %v4753 = vpow.pop %v4752
        %v4754 = vmul.f32 %v4362, 1.442695
        %v4755 = vpow.pop %v4754
        %v4756 = vmul.f32 %v4363, 1.442695
        %v4757 = vpow.pop %v4756
        %v4758 = vmul.f32 %v4364, 1.442695
        %v4759 = vpow.pop %v4758
        %v4760 = vmul.f32 %v4365, 1.442695
        %v4761 = vpow.pop %v4760
        %v4762 = vmul.f32 %v4366, 1.442695
        %v4763 = vpow.pop %v4762
        %v4764 = vmul.f32 %v4367, 1.442695
        %v4765 = vpow.pop %v4764
        %v4766 = vmul.f32 %v4368, 1.442695
        %v4767 = vpow.pop %v4766
        %v4768 = vmul.f32 %v4369, 1.442695
        %v4769 = vpow.pop %v4768
        %v4770 = vmul.f32 %v4370, 1.442695
        %v4771 = vpow.pop %v4770
        %v4772 = vmul.f32 %v4371, 1.442695
        %v4773 = vpow.pop %v4772
        %v4774 = vmul.f32 %v4372, 1.442695
        %v4775 = vpow.pop %v4774
        %v4776 = vmul.f32 %v4373, 1.442695
        %v4777 = vpow.pop %v4776
        %v4778 = vmul.f32 %v4374, 1.442695
        %v4779 = vpow.pop %v4778
        %v4780 = vmul.f32 %v4375, 1.442695
        %v4781 = vpow.pop %v4780
        %v4782 = vmul.f32 %v4376, 1.442695
        %v4783 = vpow.pop %v4782
        %v4784 = vmul.f32 %v4377, 1.442695
        %v4785 = vpow.pop %v4784
        %v4786 = vmul.f32 %v4378, 1.442695
        %v4787 = vpow.pop %v4786
        %v4788 = vmul.f32 %v4379, 1.442695
        %v4789 = vpow.pop %v4788
        %v4790 = vmul.f32 %v4380, 1.442695
        %v4791 = vpow.pop %v4790
        %v4792 = vmul.f32 %v4381, 1.442695
        %v4793 = vpow.pop %v4792
        %v4794 = vmul.f32 %v4382, 1.442695
        %v4795 = vpow.pop %v4794
        %v4796 = vmul.f32 %v4383, 1.442695
        %v4797 = vpow.pop %v4796
        %v4798 = vmul.f32 %v4384, 1.442695
        %v4799 = vpow.pop %v4798
        %v4800 = vmul.f32 %v4385, 1.442695
        %v4801 = vpow.pop %v4800
        %v4802 = vmul.f32 %v4386, 1.442695
        %v4803 = vpow.pop %v4802
        %v4804 = vmul.f32 %v4387, 1.442695
        %v4805 = vpow.pop %v4804
        %v4806 = vmul.f32 %v4388, 1.442695
        %v4807 = vpow.pop %v4806
        %v4808 = vmul.f32 %v4389, 1.442695
        %v4809 = vpow.pop %v4808
        %v4810 = vmul.f32 %v4390, 1.442695
        %v4811 = vpow.pop %v4810
        %v4812 = vmul.f32 %v4391, 1.442695
        %v4813 = vpow.pop %v4812
        %v4814 = vmul.f32 %v4392, 1.442695
        %v4815 = vpow.pop %v4814
        %v4816 = vmul.f32 %v4393, 1.442695
        %v4817 = vpow.pop %v4816
        %v4818 = vmul.f32 %v4394, 1.442695
        %v4819 = vpow.pop %v4818
        %v4820 = vmul.f32 %v4395, 1.442695
        %v4821 = vpow.pop %v4820
        %v4822 = vmul.f32 %v4396, 1.442695
        %v4823 = vpow.pop %v4822
        %v4824 = vmul.f32 %v4397, 1.442695
        %v4825 = vpow.pop %v4824
        %v4826 = vmul.f32 %v4398, 1.442695
        %v4827 = vpow.pop %v4826
        %v4828 = vmul.f32 %v4399, 1.442695
        %v4829 = vpow.pop %v4828
        %v4830 = vmul.f32 %v4400, 1.442695
        %v4831 = vpow.pop %v4830
        %v4832 = vmul.f32 %v4401, 1.442695
        %v4833 = vpow.pop %v4832
        %v4834 = vmul.f32 %v4402, 1.442695
        %v4835 = vpow.pop %v4834
        %v4836 = vmul.f32 %v4403, 1.442695
        %v4837 = vpow.pop %v4836
        %v4838 = vmul.f32 %v4404, 1.442695
        %v4839 = vpow.pop %v4838
        %v4840 = vmul.f32 %v4405, 1.442695
        %v4841 = vpow.pop %v4840
        %v4842 = vmul.f32 %v4406, 1.442695
        %v4843 = vpow.pop %v4842
        %v4844 = vmul.f32 %v4407, 1.442695
        %v4845 = vpow.pop %v4844
        %v4846 = vmul.f32 %v4408, 1.442695
        %v4847 = vpow.pop %v4846
        %v4848 = vmul.f32 %v4409, 1.442695
        %v4849 = vpow.pop %v4848
        %v4850 = vmul.f32 %v4410, 1.442695
        %v4851 = vpow.pop %v4850
        %v4852 = vmul.f32 %v4411, 1.442695
        %v4853 = vpow.pop %v4852
        %v4854 = vmul.f32 %v4412, 1.442695
        %v4855 = vpow.pop %v4854
        %v4856 = vmul.f32 %v4413, 1.442695
        %v4857 = vpow.pop %v4856
        %v4858 = vmul.f32 %v4414, 1.442695
        %v4859 = vpow.pop %v4858
        %v4860 = vmul.f32 %v4415, 1.442695
        %v4861 = vpow.pop %v4860
        %v4862 = vmul.f32 %v4416, 1.442695
        %v4863 = vpow.pop %v4862
        %v4864 = vmul.f32 %v4417, 1.442695
        %v4865 = vpow.pop %v4864
        %v4866 = vmul.f32 %v4418, 1.442695
        %v4867 = vpow.pop %v4866
        %v4868 = vmul.f32 %v4419, 1.442695
        %v4869 = vpow.pop %v4868
        %v4870 = vmul.f32 %v4420, 1.442695
        %v4871 = vpow.pop %v4870
        %v4872 = vmul.f32 %v4421, 1.442695
        %v4873 = vpow.pop %v4872
        %v4874 = vmul.f32 %v4422, 1.442695
        %v4875 = vpow.pop %v4874
        %v4876 = vmul.f32 %v4423, 1.442695
        %v4877 = vpow.pop %v4876
        %v4878 = vmul.f32 %v4424, 1.442695
        %v4879 = vpow.pop %v4878
        %v4880 = vmul.f32 %v4425, 1.442695
        %v4881 = vpow.pop %v4880
        %v4882 = vmul.f32 %v4426, 1.442695
        %v4883 = vpow.pop %v4882
        %v4884 = vmul.f32 %v4427, 1.442695
        %v4885 = vpow.pop %v4884
        %v4886 = vmul.f32 %v4428, 1.442695
        %v4887 = vpow.pop %v4886
        %v4888 = vmul.f32 %v4429, 1.442695
        %v4889 = vpow.pop %v4888
        %v4890 = vmul.f32 %v4430, 1.442695
        %v4891 = vpow.pop %v4890
        %v4892 = vmul.f32 %v4431, 1.442695
        %v4893 = vpow.pop %v4892
        %v4894 = vmul.f32 %v4432, 1.442695
        %v4895 = vpow.pop %v4894
        %v4896 = vmul.f32 %v4433, 1.442695
        %v4897 = vpow.pop %v4896
        %v4898 = vmul.f32 %v4434, 1.442695
        %v4899 = vpow.pop %v4898
        %v4900 = vmul.f32 %v4435, 1.442695
        %v4901 = vpow.pop %v4900
        %v4902 = vmul.f32 %v4436, 1.442695
        %v4903 = vpow.pop %v4902
        %v4904 = vmul.f32 %v4437, 1.442695
        %v4905 = vpow.pop %v4904
        %v4906 = vmul.f32 %v4438, 1.442695
        %v4907 = vpow.pop %v4906
        %v4908 = vmul.f32 %v4439, 1.442695
        %v4909 = vpow.pop %v4908
        %v4910 = vmul.f32 %v4440, 1.442695
        %v4911 = vpow.pop %v4910
        %v4912 = vmul.f32 %v4441, 1.442695
        %v4913 = vpow.pop %v4912
        %v4914 = vmul.f32 %v4442, 1.442695
        %v4915 = vpow.pop %v4914
        %v4916 = vmul.f32 %v4443, 1.442695
        %v4917 = vpow.pop %v4916
        %v4918 = vmul.f32 %v4444, 1.442695
        %v4919 = vpow.pop %v4918
        %v4920 = vmul.f32 %v4445, 1.442695
        %v4921 = vpow.pop %v4920
        %v4922 = vmul.f32 %v4446, 1.442695
        %v4923 = vpow.pop %v4922
        %v4924 = vmul.f32 %v4447, 1.442695
        %v4925 = vpow.pop %v4924
        %v4926 = vmul.f32 %v4448, 1.442695
        %v4927 = vpow.pop %v4926
        %v4928 = vmul.f32 %v4449, 1.442695
        %v4929 = vpow.pop %v4928
        %v4930 = vmul.f32 %v4450, 1.442695
        %v4931 = vpow.pop %v4930
        %v4932 = vmul.f32 %v4451, 1.442695
        %v4933 = vpow.pop %v4932
        %v4934 = vmul.f32 %v4452, 1.442695
        %v4935 = vpow.pop %v4934
        %v4936 = vmul.f32 %v4453, 1.442695
        %v4937 = vpow.pop %v4936
        %v4938 = vmul.f32 %v4454, 1.442695
        %v4939 = vpow.pop %v4938
        %v4940 = vmul.f32 %v4455, 1.442695
        %v4941 = vpow.pop %v4940
        %v4942 = vmul.f32 %v4456, 1.442695
        %v4943 = vpow.pop %v4942
        %v4944 = vmul.f32 %v4457, 1.442695
        %v4945 = vpow.pop %v4944
        %v4946 = vmul.f32 %v4458, 1.442695
        %v4947 = vpow.pop %v4946
        %v4948 = vmul.f32 %v4459, 1.442695
        %v4949 = vpow.pop %v4948
        %v4950 = vmul.f32 %v4460, 1.442695
        %v4951 = vpow.pop %v4950
        %v4952 = vmul.f32 %v4461, 1.442695
        %v4953 = vpow.pop %v4952
        %v4954 = vmul.f32 %v4462, 1.442695
        %v4955 = vpow.pop %v4954
        %v4956 = vmul.f32 %v4463, 1.442695
        %v4957 = vpow.pop %v4956
        %v4958 = vmul.f32 %v4464, 1.442695
        %v4959 = vpow.pop %v4958
        %v4960 = vmul.f32 %v4465, 1.442695
        %v4961 = vpow.pop %v4960
        %v4962 = vmul.f32 %v4466, 1.442695
        %v4963 = vpow.pop %v4962
        %v4964 = vmul.f32 %v4467, 1.442695
        %v4965 = vpow.pop %v4964
        %v4966 = vmul.f32 %v4468, 1.442695
        %v4967 = vpow.pop %v4966
        %v4968 = vmul.f32 %v4469, 1.442695
        %v4969 = vpow.pop %v4968
        %v4970 = vmul.f32 %v4470, 1.442695
        %v4971 = vpow.pop %v4970
        %v4972 = vmul.f32 %v4471, 1.442695
        %v4973 = vpow.pop %v4972
        %v4974 = vmul.f32 %v4472, 1.442695
        %v4975 = vpow.pop %v4974
        %v4976 = vmul.f32 %v4473, 1.442695
        %v4977 = vpow.pop %v4976
        %v4978 = vmul.f32 %v4474, 1.442695
        %v4979 = vpow.pop %v4978
        %v4980 = vmul.f32 %v4475, 1.442695
        %v4981 = vpow.pop %v4980
        %v4982 = vmul.f32 %v4476, 1.442695
        %v4983 = vpow.pop %v4982
        %v4984 = vmul.f32 %v4477, 1.442695
        %v4985 = vpow.pop %v4984
        %v4986 = vmul.f32 %v4478, 1.442695
        %v4987 = vpow.pop %v4986
        %v4988 = vmul.f32 %v4479, 1.442695
        %v4989 = vpow.pop %v4988
        %v4990 = vmul.f32 %v4480, 1.442695
        %v4991 = vpow.pop %v4990
        %v4992 = vmul.f32 %v4481, 1.442695
        %v4993 = vpow.pop %v4992
        %v4994 = vmul.f32 %v3970, %v4483
        %v4995 = vmul.f32 %v3971, %v4485
        %v4996 = vmul.f32 %v3972, %v4487
        %v4997 = vmul.f32 %v3973, %v4489
        %v4998 = vmul.f32 %v3974, %v4491
        %v4999 = vmul.f32 %v3975, %v4493
        %v5000 = vmul.f32 %v3976, %v4495
        %v5001 = vmul.f32 %v3977, %v4497
        %v5002 = vmul.f32 %v3978, %v4499
        %v5003 = vmul.f32 %v3979, %v4501
        %v5004 = vmul.f32 %v3980, %v4503
        %v5005 = vmul.f32 %v3981, %v4505
        %v5006 = vmul.f32 %v3982, %v4507
        %v5007 = vmul.f32 %v3983, %v4509
        %v5008 = vmul.f32 %v3984, %v4511
        %v5009 = vmul.f32 %v3985, %v4513
        %v5010 = vmul.f32 %v3986, %v4515
        %v5011 = vmul.f32 %v3987, %v4517
        %v5012 = vmul.f32 %v3988, %v4519
        %v5013 = vmul.f32 %v3989, %v4521
        %v5014 = vmul.f32 %v3990, %v4523
        %v5015 = vmul.f32 %v3991, %v4525
        %v5016 = vmul.f32 %v3992, %v4527
        %v5017 = vmul.f32 %v3993, %v4529
        %v5018 = vmul.f32 %v3994, %v4531
        %v5019 = vmul.f32 %v3995, %v4533
        %v5020 = vmul.f32 %v3996, %v4535
        %v5021 = vmul.f32 %v3997, %v4537
        %v5022 = vmul.f32 %v3998, %v4539
        %v5023 = vmul.f32 %v3999, %v4541
        %v5024 = vmul.f32 %v4000, %v4543
        %v5025 = vmul.f32 %v4001, %v4545
        %v5026 = vmul.f32 %v4002, %v4547
        %v5027 = vmul.f32 %v4003, %v4549
        %v5028 = vmul.f32 %v4004, %v4551
        %v5029 = vmul.f32 %v4005, %v4553
        %v5030 = vmul.f32 %v4006, %v4555
        %v5031 = vmul.f32 %v4007, %v4557
        %v5032 = vmul.f32 %v4008, %v4559
        %v5033 = vmul.f32 %v4009, %v4561
        %v5034 = vmul.f32 %v4010, %v4563
        %v5035 = vmul.f32 %v4011, %v4565
        %v5036 = vmul.f32 %v4012, %v4567
        %v5037 = vmul.f32 %v4013, %v4569
        %v5038 = vmul.f32 %v4014, %v4571
        %v5039 = vmul.f32 %v4015, %v4573
        %v5040 = vmul.f32 %v4016, %v4575
        %v5041 = vmul.f32 %v4017, %v4577
        %v5042 = vmul.f32 %v4018, %v4579
        %v5043 = vmul.f32 %v4019, %v4581
        %v5044 = vmul.f32 %v4020, %v4583
        %v5045 = vmul.f32 %v4021, %v4585
        %v5046 = vmul.f32 %v4022, %v4587
        %v5047 = vmul.f32 %v4023, %v4589
        %v5048 = vmul.f32 %v4024, %v4591
        %v5049 = vmul.f32 %v4025, %v4593
        %v5050 = vmul.f32 %v4026, %v4595
        %v5051 = vmul.f32 %v4027, %v4597
        %v5052 = vmul.f32 %v4028, %v4599
        %v5053 = vmul.f32 %v4029, %v4601
        %v5054 = vmul.f32 %v4030, %v4603
        %v5055 = vmul.f32 %v4031, %v4605
        %v5056 = vmul.f32 %v4032, %v4607
        %v5057 = vmul.f32 %v4033, %v4609
        %v5058 = vmul.f32 %v4034, %v4611
        %v5059 = vmul.f32 %v4035, %v4613
        %v5060 = vmul.f32 %v4036, %v4615
        %v5061 = vmul.f32 %v4037, %v4617
        %v5062 = vmul.f32 %v4038, %v4619
        %v5063 = vmul.f32 %v4039, %v4621
        %v5064 = vmul.f32 %v4040, %v4623
        %v5065 = vmul.f32 %v4041, %v4625
        %v5066 = vmul.f32 %v4042, %v4627
        %v5067 = vmul.f32 %v4043, %v4629
        %v5068 = vmul.f32 %v4044, %v4631
        %v5069 = vmul.f32 %v4045, %v4633
        %v5070 = vmul.f32 %v4046, %v4635
        %v5071 = vmul.f32 %v4047, %v4637
        %v5072 = vmul.f32 %v4048, %v4639
        %v5073 = vmul.f32 %v4049, %v4641
        %v5074 = vmul.f32 %v4050, %v4643
        %v5075 = vmul.f32 %v4051, %v4645
        %v5076 = vmul.f32 %v4052, %v4647
        %v5077 = vmul.f32 %v4053, %v4649
        %v5078 = vmul.f32 %v4054, %v4651
        %v5079 = vmul.f32 %v4055, %v4653
        %v5080 = vmul.f32 %v4056, %v4655
        %v5081 = vmul.f32 %v4057, %v4657
        %v5082 = vmul.f32 %v4058, %v4659
        %v5083 = vmul.f32 %v4059, %v4661
        %v5084 = vmul.f32 %v4060, %v4663
        %v5085 = vmul.f32 %v4061, %v4665
        %v5086 = vmul.f32 %v4062, %v4667
        %v5087 = vmul.f32 %v4063, %v4669
        %v5088 = vmul.f32 %v4064, %v4671
        %v5089 = vmul.f32 %v4065, %v4673
        %v5090 = vmul.f32 %v4066, %v4675
        %v5091 = vmul.f32 %v4067, %v4677
        %v5092 = vmul.f32 %v4068, %v4679
        %v5093 = vmul.f32 %v4069, %v4681
        %v5094 = vmul.f32 %v4070, %v4683
        %v5095 = vmul.f32 %v4071, %v4685
        %v5096 = vmul.f32 %v4072, %v4687
        %v5097 = vmul.f32 %v4073, %v4689
        %v5098 = vmul.f32 %v4074, %v4691
        %v5099 = vmul.f32 %v4075, %v4693
        %v5100 = vmul.f32 %v4076, %v4695
        %v5101 = vmul.f32 %v4077, %v4697
        %v5102 = vmul.f32 %v4078, %v4699
        %v5103 = vmul.f32 %v4079, %v4701
        %v5104 = vmul.f32 %v4080, %v4703
        %v5105 = vmul.f32 %v4081, %v4705
        %v5106 = vmul.f32 %v4082, %v4707
        %v5107 = vmul.f32 %v4083, %v4709
        %v5108 = vmul.f32 %v4084, %v4711
        %v5109 = vmul.f32 %v4085, %v4713
        %v5110 = vmul.f32 %v4086, %v4715
        %v5111 = vmul.f32 %v4087, %v4717
        %v5112 = vmul.f32 %v4088, %v4719
        %v5113 = vmul.f32 %v4089, %v4721
        %v5114 = vmul.f32 %v4090, %v4723
        %v5115 = vmul.f32 %v4091, %v4725
        %v5116 = vmul.f32 %v4092, %v4727
        %v5117 = vmul.f32 %v4093, %v4729
        %v5118 = vmul.f32 %v4094, %v4731
        %v5119 = vmul.f32 %v4095, %v4733
        %v5120 = vmul.f32 %v4096, %v4735
        %v5121 = vmul.f32 %v4097, %v4737
        %v5122 = vmul.f32 %v4098, %v4739
        %v5123 = vmul.f32 %v4099, %v4741
        %v5124 = vmul.f32 %v4100, %v4743
        %v5125 = vmul.f32 %v4101, %v4745
        %v5126 = vmul.f32 %v4102, %v4747
        %v5127 = vmul.f32 %v4103, %v4749
        %v5128 = vmul.f32 %v4104, %v4751
        %v5129 = vmul.f32 %v4105, %v4753
        %v5130 = vmul.f32 %v4106, %v4755
        %v5131 = vmul.f32 %v4107, %v4757
        %v5132 = vmul.f32 %v4108, %v4759
        %v5133 = vmul.f32 %v4109, %v4761
        %v5134 = vmul.f32 %v4110, %v4763
        %v5135 = vmul.f32 %v4111, %v4765
        %v5136 = vmul.f32 %v4112, %v4767
        %v5137 = vmul.f32 %v4113, %v4769
        %v5138 = vmul.f32 %v4114, %v4771
        %v5139 = vmul.f32 %v4115, %v4773
        %v5140 = vmul.f32 %v4116, %v4775
        %v5141 = vmul.f32 %v4117, %v4777
        %v5142 = vmul.f32 %v4118, %v4779
        %v5143 = vmul.f32 %v4119, %v4781
        %v5144 = vmul.f32 %v4120, %v4783
        %v5145 = vmul.f32 %v4121, %v4785
        %v5146 = vmul.f32 %v4122, %v4787
        %v5147 = vmul.f32 %v4123, %v4789
        %v5148 = vmul.f32 %v4124, %v4791
        %v5149 = vmul.f32 %v4125, %v4793
        %v5150 = vmul.f32 %v4126, %v4795
        %v5151 = vmul.f32 %v4127, %v4797
        %v5152 = vmul.f32 %v4128, %v4799
        %v5153 = vmul.f32 %v4129, %v4801
        %v5154 = vmul.f32 %v4130, %v4803
        %v5155 = vmul.f32 %v4131, %v4805
        %v5156 = vmul.f32 %v4132, %v4807
        %v5157 = vmul.f32 %v4133, %v4809
        %v5158 = vmul.f32 %v4134, %v4811
        %v5159 = vmul.f32 %v4135, %v4813
        %v5160 = vmul.f32 %v4136, %v4815
        %v5161 = vmul.f32 %v4137, %v4817
        %v5162 = vmul.f32 %v4138, %v4819
        %v5163 = vmul.f32 %v4139, %v4821
        %v5164 = vmul.f32 %v4140, %v4823
        %v5165 = vmul.f32 %v4141, %v4825
        %v5166 = vmul.f32 %v4142, %v4827
        %v5167 = vmul.f32 %v4143, %v4829
        %v5168 = vmul.f32 %v4144, %v4831
        %v5169 = vmul.f32 %v4145, %v4833
        %v5170 = vmul.f32 %v4146, %v4835
        %v5171 = vmul.f32 %v4147, %v4837
        %v5172 = vmul.f32 %v4148, %v4839
        %v5173 = vmul.f32 %v4149, %v4841
        %v5174 = vmul.f32 %v4150, %v4843
        %v5175 = vmul.f32 %v4151, %v4845
        %v5176 = vmul.f32 %v4152, %v4847
        %v5177 = vmul.f32 %v4153, %v4849
        %v5178 = vmul.f32 %v4154, %v4851
        %v5179 = vmul.f32 %v4155, %v4853
        %v5180 = vmul.f32 %v4156, %v4855
        %v5181 = vmul.f32 %v4157, %v4857
        %v5182 = vmul.f32 %v4158, %v4859
        %v5183 = vmul.f32 %v4159, %v4861
        %v5184 = vmul.f32 %v4160, %v4863
        %v5185 = vmul.f32 %v4161, %v4865
        %v5186 = vmul.f32 %v4162, %v4867
        %v5187 = vmul.f32 %v4163, %v4869
        %v5188 = vmul.f32 %v4164, %v4871
        %v5189 = vmul.f32 %v4165, %v4873
        %v5190 = vmul.f32 %v4166, %v4875
        %v5191 = vmul.f32 %v4167, %v4877
        %v5192 = vmul.f32 %v4168, %v4879
        %v5193 = vmul.f32 %v4169, %v4881
        %v5194 = vmul.f32 %v4170, %v4883
        %v5195 = vmul.f32 %v4171, %v4885
        %v5196 = vmul.f32 %v4172, %v4887
        %v5197 = vmul.f32 %v4173, %v4889
        %v5198 = vmul.f32 %v4174, %v4891
        %v5199 = vmul.f32 %v4175, %v4893
        %v5200 = vmul.f32 %v4176, %v4895
        %v5201 = vmul.f32 %v4177, %v4897
        %v5202 = vmul.f32 %v4178, %v4899
        %v5203 = vmul.f32 %v4179, %v4901
        %v5204 = vmul.f32 %v4180, %v4903
        %v5205 = vmul.f32 %v4181, %v4905
        %v5206 = vmul.f32 %v4182, %v4907
        %v5207 = vmul.f32 %v4183, %v4909
        %v5208 = vmul.f32 %v4184, %v4911
        %v5209 = vmul.f32 %v4185, %v4913
        %v5210 = vmul.f32 %v4186, %v4915
        %v5211 = vmul.f32 %v4187, %v4917
        %v5212 = vmul.f32 %v4188, %v4919
        %v5213 = vmul.f32 %v4189, %v4921
        %v5214 = vmul.f32 %v4190, %v4923
        %v5215 = vmul.f32 %v4191, %v4925
        %v5216 = vmul.f32 %v4192, %v4927
        %v5217 = vmul.f32 %v4193, %v4929
        %v5218 = vmul.f32 %v4194, %v4931
        %v5219 = vmul.f32 %v4195, %v4933
        %v5220 = vmul.f32 %v4196, %v4935
        %v5221 = vmul.f32 %v4197, %v4937
        %v5222 = vmul.f32 %v4198, %v4939
        %v5223 = vmul.f32 %v4199, %v4941
        %v5224 = vmul.f32 %v4200, %v4943
        %v5225 = vmul.f32 %v4201, %v4945
        %v5226 = vmul.f32 %v4202, %v4947
        %v5227 = vmul.f32 %v4203, %v4949
        %v5228 = vmul.f32 %v4204, %v4951
        %v5229 = vmul.f32 %v4205, %v4953
        %v5230 = vmul.f32 %v4206, %v4955
        %v5231 = vmul.f32 %v4207, %v4957
        %v5232 = vmul.f32 %v4208, %v4959
        %v5233 = vmul.f32 %v4209, %v4961
        %v5234 = vmul.f32 %v4210, %v4963
        %v5235 = vmul.f32 %v4211, %v4965
        %v5236 = vmul.f32 %v4212, %v4967
        %v5237 = vmul.f32 %v4213, %v4969
        %v5238 = vmul.f32 %v4214, %v4971
        %v5239 = vmul.f32 %v4215, %v4973
        %v5240 = vmul.f32 %v4216, %v4975
        %v5241 = vmul.f32 %v4217, %v4977
        %v5242 = vmul.f32 %v4218, %v4979
        %v5243 = vmul.f32 %v4219, %v4981
        %v5244 = vmul.f32 %v4220, %v4983
        %v5245 = vmul.f32 %v4221, %v4985
        %v5246 = vmul.f32 %v4222, %v4987
        %v5247 = vmul.f32 %v4223, %v4989
        %v5248 = vmul.f32 %v4224, %v4991
        %v5249 = vmul.f32 %v4225, %v4993
        %v5250 = vadd.f32 %v3458, %v4994
        %v5251 = vadd.f32 %v3459, %v4995
        %v5252 = vadd.f32 %v3460, %v4996
        %v5253 = vadd.f32 %v3461, %v4997
        %v5254 = vadd.f32 %v3462, %v4998
        %v5255 = vadd.f32 %v3463, %v4999
        %v5256 = vadd.f32 %v3464, %v5000
        %v5257 = vadd.f32 %v3465, %v5001
        %v5258 = vadd.f32 %v3466, %v5002
        %v5259 = vadd.f32 %v3467, %v5003
        %v5260 = vadd.f32 %v3468, %v5004
        %v5261 = vadd.f32 %v3469, %v5005
        %v5262 = vadd.f32 %v3470, %v5006
        %v5263 = vadd.f32 %v3471, %v5007
        %v5264 = vadd.f32 %v3472, %v5008
        %v5265 = vadd.f32 %v3473, %v5009
        %v5266 = vadd.f32 %v3474, %v5010
        %v5267 = vadd.f32 %v3475, %v5011
        %v5268 = vadd.f32 %v3476, %v5012
        %v5269 = vadd.f32 %v3477, %v5013
        %v5270 = vadd.f32 %v3478, %v5014
        %v5271 = vadd.f32 %v3479, %v5015
        %v5272 = vadd.f32 %v3480, %v5016
        %v5273 = vadd.f32 %v3481, %v5017
        %v5274 = vadd.f32 %v3482, %v5018
        %v5275 = vadd.f32 %v3483, %v5019
        %v5276 = vadd.f32 %v3484, %v5020
        %v5277 = vadd.f32 %v3485, %v5021
        %v5278 = vadd.f32 %v3486, %v5022
        %v5279 = vadd.f32 %v3487, %v5023
        %v5280 = vadd.f32 %v3488, %v5024
        %v5281 = vadd.f32 %v3489, %v5025
        %v5282 = vadd.f32 %v3490, %v5026
        %v5283 = vadd.f32 %v3491, %v5027
        %v5284 = vadd.f32 %v3492, %v5028
        %v5285 = vadd.f32 %v3493, %v5029
        %v5286 = vadd.f32 %v3494, %v5030
        %v5287 = vadd.f32 %v3495, %v5031
        %v5288 = vadd.f32 %v3496, %v5032
        %v5289 = vadd.f32 %v3497, %v5033
        %v5290 = vadd.f32 %v3498, %v5034
        %v5291 = vadd.f32 %v3499, %v5035
        %v5292 = vadd.f32 %v3500, %v5036
        %v5293 = vadd.f32 %v3501, %v5037
        %v5294 = vadd.f32 %v3502, %v5038
        %v5295 = vadd.f32 %v3503, %v5039
        %v5296 = vadd.f32 %v3504, %v5040
        %v5297 = vadd.f32 %v3505, %v5041
        %v5298 = vadd.f32 %v3506, %v5042
        %v5299 = vadd.f32 %v3507, %v5043
        %v5300 = vadd.f32 %v3508, %v5044
        %v5301 = vadd.f32 %v3509, %v5045
        %v5302 = vadd.f32 %v3510, %v5046
        %v5303 = vadd.f32 %v3511, %v5047
        %v5304 = vadd.f32 %v3512, %v5048
        %v5305 = vadd.f32 %v3513, %v5049
        %v5306 = vadd.f32 %v3514, %v5050
        %v5307 = vadd.f32 %v3515, %v5051
        %v5308 = vadd.f32 %v3516, %v5052
        %v5309 = vadd.f32 %v3517, %v5053
        %v5310 = vadd.f32 %v3518, %v5054
        %v5311 = vadd.f32 %v3519, %v5055
        %v5312 = vadd.f32 %v3520, %v5056
        %v5313 = vadd.f32 %v3521, %v5057
        %v5314 = vadd.f32 %v3522, %v5058
        %v5315 = vadd.f32 %v3523, %v5059
        %v5316 = vadd.f32 %v3524, %v5060
        %v5317 = vadd.f32 %v3525, %v5061
        %v5318 = vadd.f32 %v3526, %v5062
        %v5319 = vadd.f32 %v3527, %v5063
        %v5320 = vadd.f32 %v3528, %v5064
        %v5321 = vadd.f32 %v3529, %v5065
        %v5322 = vadd.f32 %v3530, %v5066
        %v5323 = vadd.f32 %v3531, %v5067
        %v5324 = vadd.f32 %v3532, %v5068
        %v5325 = vadd.f32 %v3533, %v5069
        %v5326 = vadd.f32 %v3534, %v5070
        %v5327 = vadd.f32 %v3535, %v5071
        %v5328 = vadd.f32 %v3536, %v5072
        %v5329 = vadd.f32 %v3537, %v5073
        %v5330 = vadd.f32 %v3538, %v5074
        %v5331 = vadd.f32 %v3539, %v5075
        %v5332 = vadd.f32 %v3540, %v5076
        %v5333 = vadd.f32 %v3541, %v5077
        %v5334 = vadd.f32 %v3542, %v5078
        %v5335 = vadd.f32 %v3543, %v5079
        %v5336 = vadd.f32 %v3544, %v5080
        %v5337 = vadd.f32 %v3545, %v5081
        %v5338 = vadd.f32 %v3546, %v5082
        %v5339 = vadd.f32 %v3547, %v5083
        %v5340 = vadd.f32 %v3548, %v5084
        %v5341 = vadd.f32 %v3549, %v5085
        %v5342 = vadd.f32 %v3550, %v5086
        %v5343 = vadd.f32 %v3551, %v5087
        %v5344 = vadd.f32 %v3552, %v5088
        %v5345 = vadd.f32 %v3553, %v5089
        %v5346 = vadd.f32 %v3554, %v5090
        %v5347 = vadd.f32 %v3555, %v5091
        %v5348 = vadd.f32 %v3556, %v5092
        %v5349 = vadd.f32 %v3557, %v5093
        %v5350 = vadd.f32 %v3558, %v5094
        %v5351 = vadd.f32 %v3559, %v5095
        %v5352 = vadd.f32 %v3560, %v5096
        %v5353 = vadd.f32 %v3561, %v5097
        %v5354 = vadd.f32 %v3562, %v5098
        %v5355 = vadd.f32 %v3563, %v5099
        %v5356 = vadd.f32 %v3564, %v5100
        %v5357 = vadd.f32 %v3565, %v5101
        %v5358 = vadd.f32 %v3566, %v5102
        %v5359 = vadd.f32 %v3567, %v5103
        %v5360 = vadd.f32 %v3568, %v5104
        %v5361 = vadd.f32 %v3569, %v5105
        %v5362 = vadd.f32 %v3570, %v5106
        %v5363 = vadd.f32 %v3571, %v5107
        %v5364 = vadd.f32 %v3572, %v5108
        %v5365 = vadd.f32 %v3573, %v5109
        %v5366 = vadd.f32 %v3574, %v5110
        %v5367 = vadd.f32 %v3575, %v5111
        %v5368 = vadd.f32 %v3576, %v5112
        %v5369 = vadd.f32 %v3577, %v5113
        %v5370 = vadd.f32 %v3578, %v5114
        %v5371 = vadd.f32 %v3579, %v5115
        %v5372 = vadd.f32 %v3580, %v5116
        %v5373 = vadd.f32 %v3581, %v5117
        %v5374 = vadd.f32 %v3582, %v5118
        %v5375 = vadd.f32 %v3583, %v5119
        %v5376 = vadd.f32 %v3584, %v5120
        %v5377 = vadd.f32 %v3585, %v5121
        %v5378 = vadd.f32 %v3586, %v5122
        %v5379 = vadd.f32 %v3587, %v5123
        %v5380 = vadd.f32 %v3588, %v5124
        %v5381 = vadd.f32 %v3589, %v5125
        %v5382 = vadd.f32 %v3590, %v5126
        %v5383 = vadd.f32 %v3591, %v5127
        %v5384 = vadd.f32 %v3592, %v5128
        %v5385 = vadd.f32 %v3593, %v5129
        %v5386 = vadd.f32 %v3594, %v5130
        %v5387 = vadd.f32 %v3595, %v5131
        %v5388 = vadd.f32 %v3596, %v5132
        %v5389 = vadd.f32 %v3597, %v5133
        %v5390 = vadd.f32 %v3598, %v5134
        %v5391 = vadd.f32 %v3599, %v5135
        %v5392 = vadd.f32 %v3600, %v5136
        %v5393 = vadd.f32 %v3601, %v5137
        %v5394 = vadd.f32 %v3602, %v5138
        %v5395 = vadd.f32 %v3603, %v5139
        %v5396 = vadd.f32 %v3604, %v5140
        %v5397 = vadd.f32 %v3605, %v5141
        %v5398 = vadd.f32 %v3606, %v5142
        %v5399 = vadd.f32 %v3607, %v5143
        %v5400 = vadd.f32 %v3608, %v5144
        %v5401 = vadd.f32 %v3609, %v5145
        %v5402 = vadd.f32 %v3610, %v5146
        %v5403 = vadd.f32 %v3611, %v5147
        %v5404 = vadd.f32 %v3612, %v5148
        %v5405 = vadd.f32 %v3613, %v5149
        %v5406 = vadd.f32 %v3614, %v5150
        %v5407 = vadd.f32 %v3615, %v5151
        %v5408 = vadd.f32 %v3616, %v5152
        %v5409 = vadd.f32 %v3617, %v5153
        %v5410 = vadd.f32 %v3618, %v5154
        %v5411 = vadd.f32 %v3619, %v5155
        %v5412 = vadd.f32 %v3620, %v5156
        %v5413 = vadd.f32 %v3621, %v5157
        %v5414 = vadd.f32 %v3622, %v5158
        %v5415 = vadd.f32 %v3623, %v5159
        %v5416 = vadd.f32 %v3624, %v5160
        %v5417 = vadd.f32 %v3625, %v5161
        %v5418 = vadd.f32 %v3626, %v5162
        %v5419 = vadd.f32 %v3627, %v5163
        %v5420 = vadd.f32 %v3628, %v5164
        %v5421 = vadd.f32 %v3629, %v5165
        %v5422 = vadd.f32 %v3630, %v5166
        %v5423 = vadd.f32 %v3631, %v5167
        %v5424 = vadd.f32 %v3632, %v5168
        %v5425 = vadd.f32 %v3633, %v5169
        %v5426 = vadd.f32 %v3634, %v5170
        %v5427 = vadd.f32 %v3635, %v5171
        %v5428 = vadd.f32 %v3636, %v5172
        %v5429 = vadd.f32 %v3637, %v5173
        %v5430 = vadd.f32 %v3638, %v5174
        %v5431 = vadd.f32 %v3639, %v5175
        %v5432 = vadd.f32 %v3640, %v5176
        %v5433 = vadd.f32 %v3641, %v5177
        %v5434 = vadd.f32 %v3642, %v5178
        %v5435 = vadd.f32 %v3643, %v5179
        %v5436 = vadd.f32 %v3644, %v5180
        %v5437 = vadd.f32 %v3645, %v5181
        %v5438 = vadd.f32 %v3646, %v5182
        %v5439 = vadd.f32 %v3647, %v5183
        %v5440 = vadd.f32 %v3648, %v5184
        %v5441 = vadd.f32 %v3649, %v5185
        %v5442 = vadd.f32 %v3650, %v5186
        %v5443 = vadd.f32 %v3651, %v5187
        %v5444 = vadd.f32 %v3652, %v5188
        %v5445 = vadd.f32 %v3653, %v5189
        %v5446 = vadd.f32 %v3654, %v5190
        %v5447 = vadd.f32 %v3655, %v5191
        %v5448 = vadd.f32 %v3656, %v5192
        %v5449 = vadd.f32 %v3657, %v5193
        %v5450 = vadd.f32 %v3658, %v5194
        %v5451 = vadd.f32 %v3659, %v5195
        %v5452 = vadd.f32 %v3660, %v5196
        %v5453 = vadd.f32 %v3661, %v5197
        %v5454 = vadd.f32 %v3662, %v5198
        %v5455 = vadd.f32 %v3663, %v5199
        %v5456 = vadd.f32 %v3664, %v5200
        %v5457 = vadd.f32 %v3665, %v5201
        %v5458 = vadd.f32 %v3666, %v5202
        %v5459 = vadd.f32 %v3667, %v5203
        %v5460 = vadd.f32 %v3668, %v5204
        %v5461 = vadd.f32 %v3669, %v5205
        %v5462 = vadd.f32 %v3670, %v5206
        %v5463 = vadd.f32 %v3671, %v5207
        %v5464 = vadd.f32 %v3672, %v5208
        %v5465 = vadd.f32 %v3673, %v5209
        %v5466 = vadd.f32 %v3674, %v5210
        %v5467 = vadd.f32 %v3675, %v5211
        %v5468 = vadd.f32 %v3676, %v5212
        %v5469 = vadd.f32 %v3677, %v5213
        %v5470 = vadd.f32 %v3678, %v5214
        %v5471 = vadd.f32 %v3679, %v5215
        %v5472 = vadd.f32 %v3680, %v5216
        %v5473 = vadd.f32 %v3681, %v5217
        %v5474 = vadd.f32 %v3682, %v5218
        %v5475 = vadd.f32 %v3683, %v5219
        %v5476 = vadd.f32 %v3684, %v5220
        %v5477 = vadd.f32 %v3685, %v5221
        %v5478 = vadd.f32 %v3686, %v5222
        %v5479 = vadd.f32 %v3687, %v5223
        %v5480 = vadd.f32 %v3688, %v5224
        %v5481 = vadd.f32 %v3689, %v5225
        %v5482 = vadd.f32 %v3690, %v5226
        %v5483 = vadd.f32 %v3691, %v5227
        %v5484 = vadd.f32 %v3692, %v5228
        %v5485 = vadd.f32 %v3693, %v5229
        %v5486 = vadd.f32 %v3694, %v5230
        %v5487 = vadd.f32 %v3695, %v5231
        %v5488 = vadd.f32 %v3696, %v5232
        %v5489 = vadd.f32 %v3697, %v5233
        %v5490 = vadd.f32 %v3698, %v5234
        %v5491 = vadd.f32 %v3699, %v5235
        %v5492 = vadd.f32 %v3700, %v5236
        %v5493 = vadd.f32 %v3701, %v5237
        %v5494 = vadd.f32 %v3702, %v5238
        %v5495 = vadd.f32 %v3703, %v5239
        %v5496 = vadd.f32 %v3704, %v5240
        %v5497 = vadd.f32 %v3705, %v5241
        %v5498 = vadd.f32 %v3706, %v5242
        %v5499 = vadd.f32 %v3707, %v5243
        %v5500 = vadd.f32 %v3708, %v5244
        %v5501 = vadd.f32 %v3709, %v5245
        %v5502 = vadd.f32 %v3710, %v5246
        %v5503 = vadd.f32 %v3711, %v5247
        %v5504 = vadd.f32 %v3712, %v5248
        %v5505 = vadd.f32 %v3713, %v5249
        %v5506 = vld [vmem:[%s368] sm:$0xff]
        %v5507 = vadd.f32 %v5250, %v5251
        %v5508 = vadd.f32 %v5507, %v5252
        %v5509 = vadd.f32 %v5508, %v5253
        %v5510 = vadd.f32 %v5509, %v5254
        %v5511 = vadd.f32 %v5510, %v5255
        %v5512 = vadd.f32 %v5511, %v5256
        %v5513 = vadd.f32 %v5512, %v5257
        %v5514 = vadd.f32 %v5513, %v5258
        %v5515 = vadd.f32 %v5514, %v5259
        %v5516 = vadd.f32 %v5515, %v5260
        %v5517 = vadd.f32 %v5516, %v5261
        %v5518 = vadd.f32 %v5517, %v5262
        %v5519 = vadd.f32 %v5518, %v5263
        %v5520 = vadd.f32 %v5519, %v5264
        %v5521 = vadd.f32 %v5520, %v5265
        %v5522 = vadd.f32 %v5521, %v5266
        %v5523 = vadd.f32 %v5522, %v5267
        %v5524 = vadd.f32 %v5523, %v5268
        %v5525 = vadd.f32 %v5524, %v5269
        %v5526 = vadd.f32 %v5525, %v5270
        %v5527 = vadd.f32 %v5526, %v5271
        %v5528 = vadd.f32 %v5527, %v5272
        %v5529 = vadd.f32 %v5528, %v5273
        %v5530 = vadd.f32 %v5529, %v5274
        %v5531 = vadd.f32 %v5530, %v5275
        %v5532 = vadd.f32 %v5531, %v5276
        %v5533 = vadd.f32 %v5532, %v5277
        %v5534 = vadd.f32 %v5533, %v5278
        %v5535 = vadd.f32 %v5534, %v5279
        %v5536 = vadd.f32 %v5535, %v5280
        %v5537 = vadd.f32 %v5536, %v5281
        %v5538 = vadd.f32 %v5537, %v5282
        %v5539 = vadd.f32 %v5538, %v5283
        %v5540 = vadd.f32 %v5539, %v5284
        %v5541 = vadd.f32 %v5540, %v5285
        %v5542 = vadd.f32 %v5541, %v5286
        %v5543 = vadd.f32 %v5542, %v5287
        %v5544 = vadd.f32 %v5543, %v5288
        %v5545 = vadd.f32 %v5544, %v5289
        %v5546 = vadd.f32 %v5545, %v5290
        %v5547 = vadd.f32 %v5546, %v5291
        %v5548 = vadd.f32 %v5547, %v5292
        %v5549 = vadd.f32 %v5548, %v5293
        %v5550 = vadd.f32 %v5549, %v5294
        %v5551 = vadd.f32 %v5550, %v5295
        %v5552 = vadd.f32 %v5551, %v5296
        %v5553 = vadd.f32 %v5552, %v5297
        %v5554 = vadd.f32 %v5553, %v5298
        %v5555 = vadd.f32 %v5554, %v5299
        %v5556 = vadd.f32 %v5555, %v5300
        %v5557 = vadd.f32 %v5556, %v5301
        %v5558 = vadd.f32 %v5557, %v5302
        %v5559 = vadd.f32 %v5558, %v5303
        %v5560 = vadd.f32 %v5559, %v5304
        %v5561 = vadd.f32 %v5560, %v5305
        %v5562 = vadd.f32 %v5561, %v5306
        %v5563 = vadd.f32 %v5562, %v5307
        %v5564 = vadd.f32 %v5563, %v5308
        %v5565 = vadd.f32 %v5564, %v5309
        %v5566 = vadd.f32 %v5565, %v5310
        %v5567 = vadd.f32 %v5566, %v5311
        %v5568 = vadd.f32 %v5567, %v5312
        %v5569 = vadd.f32 %v5568, %v5313
        %v5570 = vadd.f32 %v5569, %v5314
        %v5571 = vadd.f32 %v5570, %v5315
        %v5572 = vadd.f32 %v5571, %v5316
        %v5573 = vadd.f32 %v5572, %v5317
        %v5574 = vadd.f32 %v5573, %v5318
        %v5575 = vadd.f32 %v5574, %v5319
        %v5576 = vadd.f32 %v5575, %v5320
        %v5577 = vadd.f32 %v5576, %v5321
        %v5578 = vadd.f32 %v5577, %v5322
        %v5579 = vadd.f32 %v5578, %v5323
        %v5580 = vadd.f32 %v5579, %v5324
        %v5581 = vadd.f32 %v5580, %v5325
        %v5582 = vadd.f32 %v5581, %v5326
        %v5583 = vadd.f32 %v5582, %v5327
        %v5584 = vadd.f32 %v5583, %v5328
        %v5585 = vadd.f32 %v5584, %v5329
        %v5586 = vadd.f32 %v5585, %v5330
        %v5587 = vadd.f32 %v5586, %v5331
        %v5588 = vadd.f32 %v5587, %v5332
        %v5589 = vadd.f32 %v5588, %v5333
        %v5590 = vadd.f32 %v5589, %v5334
        %v5591 = vadd.f32 %v5590, %v5335
        %v5592 = vadd.f32 %v5591, %v5336
        %v5593 = vadd.f32 %v5592, %v5337
        %v5594 = vadd.f32 %v5593, %v5338
        %v5595 = vadd.f32 %v5594, %v5339
        %v5596 = vadd.f32 %v5595, %v5340
        %v5597 = vadd.f32 %v5596, %v5341
        %v5598 = vadd.f32 %v5597, %v5342
        %v5599 = vadd.f32 %v5598, %v5343
        %v5600 = vadd.f32 %v5599, %v5344
        %v5601 = vadd.f32 %v5600, %v5345
        %v5602 = vadd.f32 %v5601, %v5346
        %v5603 = vadd.f32 %v5602, %v5347
        %v5604 = vadd.f32 %v5603, %v5348
        %v5605 = vadd.f32 %v5604, %v5349
        %v5606 = vadd.f32 %v5605, %v5350
        %v5607 = vadd.f32 %v5606, %v5351
        %v5608 = vadd.f32 %v5607, %v5352
        %v5609 = vadd.f32 %v5608, %v5353
        %v5610 = vadd.f32 %v5609, %v5354
        %v5611 = vadd.f32 %v5610, %v5355
        %v5612 = vadd.f32 %v5611, %v5356
        %v5613 = vadd.f32 %v5612, %v5357
        %v5614 = vadd.f32 %v5613, %v5358
        %v5615 = vadd.f32 %v5614, %v5359
        %v5616 = vadd.f32 %v5615, %v5360
        %v5617 = vadd.f32 %v5616, %v5361
        %v5618 = vadd.f32 %v5617, %v5362
        %v5619 = vadd.f32 %v5618, %v5363
        %v5620 = vadd.f32 %v5619, %v5364
        %v5621 = vadd.f32 %v5620, %v5365
        %v5622 = vadd.f32 %v5621, %v5366
        %v5623 = vadd.f32 %v5622, %v5367
        %v5624 = vadd.f32 %v5623, %v5368
        %v5625 = vadd.f32 %v5624, %v5369
        %v5626 = vadd.f32 %v5625, %v5370
        %v5627 = vadd.f32 %v5626, %v5371
        %v5628 = vadd.f32 %v5627, %v5372
        %v5629 = vadd.f32 %v5628, %v5373
        %v5630 = vadd.f32 %v5629, %v5374
        %v5631 = vadd.f32 %v5630, %v5375
        %v5632 = vadd.f32 %v5631, %v5376
        %v5633 = vadd.f32 %v5632, %v5377
        %v5634 = vadd.f32 %v5633, %v5378
        %v5635 = vadd.f32 %v5634, %v5379
        %v5636 = vadd.f32 %v5635, %v5380
        %v5637 = vadd.f32 %v5636, %v5381
        %v5638 = vadd.f32 %v5637, %v5382
        %v5639 = vadd.f32 %v5638, %v5383
        %v5640 = vadd.f32 %v5639, %v5384
        %v5641 = vadd.f32 %v5640, %v5385
        %v5642 = vadd.f32 %v5641, %v5386
        %v5643 = vadd.f32 %v5642, %v5387
        %v5644 = vadd.f32 %v5643, %v5388
        %v5645 = vadd.f32 %v5644, %v5389
        %v5646 = vadd.f32 %v5645, %v5390
        %v5647 = vadd.f32 %v5646, %v5391
        %v5648 = vadd.f32 %v5647, %v5392
        %v5649 = vadd.f32 %v5648, %v5393
        %v5650 = vadd.f32 %v5649, %v5394
        %v5651 = vadd.f32 %v5650, %v5395
        %v5652 = vadd.f32 %v5651, %v5396
        %v5653 = vadd.f32 %v5652, %v5397
        %v5654 = vadd.f32 %v5653, %v5398
        %v5655 = vadd.f32 %v5654, %v5399
        %v5656 = vadd.f32 %v5655, %v5400
        %v5657 = vadd.f32 %v5656, %v5401
        %v5658 = vadd.f32 %v5657, %v5402
        %v5659 = vadd.f32 %v5658, %v5403
        %v5660 = vadd.f32 %v5659, %v5404
        %v5661 = vadd.f32 %v5660, %v5405
        %v5662 = vadd.f32 %v5661, %v5406
        %v5663 = vadd.f32 %v5662, %v5407
        %v5664 = vadd.f32 %v5663, %v5408
        %v5665 = vadd.f32 %v5664, %v5409
        %v5666 = vadd.f32 %v5665, %v5410
        %v5667 = vadd.f32 %v5666, %v5411
        %v5668 = vadd.f32 %v5667, %v5412
        %v5669 = vadd.f32 %v5668, %v5413
        %v5670 = vadd.f32 %v5669, %v5414
        %v5671 = vadd.f32 %v5670, %v5415
        %v5672 = vadd.f32 %v5671, %v5416
        %v5673 = vadd.f32 %v5672, %v5417
        %v5674 = vadd.f32 %v5673, %v5418
        %v5675 = vadd.f32 %v5674, %v5419
        %v5676 = vadd.f32 %v5675, %v5420
        %v5677 = vadd.f32 %v5676, %v5421
        %v5678 = vadd.f32 %v5677, %v5422
        %v5679 = vadd.f32 %v5678, %v5423
        %v5680 = vadd.f32 %v5679, %v5424
        %v5681 = vadd.f32 %v5680, %v5425
        %v5682 = vadd.f32 %v5681, %v5426
        %v5683 = vadd.f32 %v5682, %v5427
        %v5684 = vadd.f32 %v5683, %v5428
        %v5685 = vadd.f32 %v5684, %v5429
        %v5686 = vadd.f32 %v5685, %v5430
        %v5687 = vadd.f32 %v5686, %v5431
        %v5688 = vadd.f32 %v5687, %v5432
        %v5689 = vadd.f32 %v5688, %v5433
        %v5690 = vadd.f32 %v5689, %v5434
        %v5691 = vadd.f32 %v5690, %v5435
        %v5692 = vadd.f32 %v5691, %v5436
        %v5693 = vadd.f32 %v5692, %v5437
        %v5694 = vadd.f32 %v5693, %v5438
        %v5695 = vadd.f32 %v5694, %v5439
        %v5696 = vadd.f32 %v5695, %v5440
        %v5697 = vadd.f32 %v5696, %v5441
        %v5698 = vadd.f32 %v5697, %v5442
        %v5699 = vadd.f32 %v5698, %v5443
        %v5700 = vadd.f32 %v5699, %v5444
        %v5701 = vadd.f32 %v5700, %v5445
        %v5702 = vadd.f32 %v5701, %v5446
        %v5703 = vadd.f32 %v5702, %v5447
        %v5704 = vadd.f32 %v5703, %v5448
        %v5705 = vadd.f32 %v5704, %v5449
        %v5706 = vadd.f32 %v5705, %v5450
        %v5707 = vadd.f32 %v5706, %v5451
        %v5708 = vadd.f32 %v5707, %v5452
        %v5709 = vadd.f32 %v5708, %v5453
        %v5710 = vadd.f32 %v5709, %v5454
        %v5711 = vadd.f32 %v5710, %v5455
        %v5712 = vadd.f32 %v5711, %v5456
        %v5713 = vadd.f32 %v5712, %v5457
        %v5714 = vadd.f32 %v5713, %v5458
        %v5715 = vadd.f32 %v5714, %v5459
        %v5716 = vadd.f32 %v5715, %v5460
        %v5717 = vadd.f32 %v5716, %v5461
        %v5718 = vadd.f32 %v5717, %v5462
        %v5719 = vadd.f32 %v5718, %v5463
        %v5720 = vadd.f32 %v5719, %v5464
        %v5721 = vadd.f32 %v5720, %v5465
        %v5722 = vadd.f32 %v5721, %v5466
        %v5723 = vadd.f32 %v5722, %v5467
        %v5724 = vadd.f32 %v5723, %v5468
        %v5725 = vadd.f32 %v5724, %v5469
        %v5726 = vadd.f32 %v5725, %v5470
        %v5727 = vadd.f32 %v5726, %v5471
        %v5728 = vadd.f32 %v5727, %v5472
        %v5729 = vadd.f32 %v5728, %v5473
        %v5730 = vadd.f32 %v5729, %v5474
        %v5731 = vadd.f32 %v5730, %v5475
        %v5732 = vadd.f32 %v5731, %v5476
        %v5733 = vadd.f32 %v5732, %v5477
        %v5734 = vadd.f32 %v5733, %v5478
        %v5735 = vadd.f32 %v5734, %v5479
        %v5736 = vadd.f32 %v5735, %v5480
        %v5737 = vadd.f32 %v5736, %v5481
        %v5738 = vadd.f32 %v5737, %v5482
        %v5739 = vadd.f32 %v5738, %v5483
        %v5740 = vadd.f32 %v5739, %v5484
        %v5741 = vadd.f32 %v5740, %v5485
        %v5742 = vadd.f32 %v5741, %v5486
        %v5743 = vadd.f32 %v5742, %v5487
        %v5744 = vadd.f32 %v5743, %v5488
        %v5745 = vadd.f32 %v5744, %v5489
        %v5746 = vadd.f32 %v5745, %v5490
        %v5747 = vadd.f32 %v5746, %v5491
        %v5748 = vadd.f32 %v5747, %v5492
        %v5749 = vadd.f32 %v5748, %v5493
        %v5750 = vadd.f32 %v5749, %v5494
        %v5751 = vadd.f32 %v5750, %v5495
        %v5752 = vadd.f32 %v5751, %v5496
        %v5753 = vadd.f32 %v5752, %v5497
        %v5754 = vadd.f32 %v5753, %v5498
        %v5755 = vadd.f32 %v5754, %v5499
        %v5756 = vadd.f32 %v5755, %v5500
        %v5757 = vadd.f32 %v5756, %v5501
        %v5758 = vadd.f32 %v5757, %v5502
        %v5759 = vadd.f32 %v5758, %v5503
        %v5760 = vadd.f32 %v5759, %v5504
        %v5761 = vadd.f32 %v5760, %v5505
        %v5762 = vadd.f32 %v5506, %v5761
        %5763 = vst [vmem:[%s368] sm:$0xff] %v5762
        %s5764 = sand.u32 %s167, 1
        %s5765 = scalar_lea.sflag [#allocation4], %s5764
        %s5766 = sand.u32 %s167, 1
        %s5767 = smul.addr %s5766, 8
        %s5768 = scalar_lea.vmem [#allocation10], %s5767
        // Predicated region
        $region57: #{tpu_custom_call.1} parent=35 // pred_check
          %p5769 = pneg %p177
        $region58: #{tpu_custom_call.1} parent=35 // pred_check_branch
          %5771 = sbr.rel (%p5769) target = $region60
        $region59: #{tpu_custom_call.1} parent=35 // pred_region
          %s5773 = ssub.s32 128, 128
          %5774 = vsyncadd %s5765, %s5773
          %s5775 = smul.addr %s31, 128
          %s5776 = scalar_lea.hbm %s4, %s5775
          %s5778 = sshll.u32 %s5768, 4
          %s5779 = int_to_ptr.vmem [resolvable:$true] %s5778
          %5781 = dma.vmem_to_hbm [thread:$0]  %s5779, 128, %s5776, %s5765
        $region60: #{tpu_custom_call.1} parent=35 // pred_fallthru
          _
      $region36: #{tpu_custom_call.1} parent=5 // pred_fallthru
        _
      %p5782 = scmp.le.s32.totalorder 2, %s22
      // Predicated region
      $region61: #{tpu_custom_call.1} parent=5 // pred_check
        %p5783 = pneg %p5782
      $region62: #{tpu_custom_call.1} parent=5 // pred_check_branch
        %5785 = sbr.rel (%p5783) target = $region64
      $region63: #{tpu_custom_call.1} parent=5 // pred_region
        %s5786 = ssub.s32 %s22, 2
        // Predicated region
        $region65: #{tpu_custom_call.1} parent=63 // pred_check
          %p5787 = pneg %p183
        $region66: #{tpu_custom_call.1} parent=63 // pred_check_branch
          %5789 = sbr.rel (%p5787) target = $region68
        $region67: #{tpu_custom_call.1} parent=63 // pred_region
          %s5790 = sand.u32 %s168, 1
          %s5791 = scalar_lea.sflag [#allocation4], %s5790
          %s5792 = sand.u32 %s168, 1
          %s5793 = smul.addr %s5792, 8
          %s5794 = scalar_lea.vmem [#allocation10], %s5793
          %5795 = dma.done %s5791, 128
        $region68: #{tpu_custom_call.1} parent=63 // pred_fallthru
          _
      $region64: #{tpu_custom_call.1} parent=5 // pred_fallthru
        _
    $region6: #{tpu_custom_call.1} parent=1 // loop_footer
      %s26 = sadd.s32 1, %s22
    $region7: #{tpu_custom_call.1} parent=1 // loop_footer_branch
      %21 = sbr.rel target = $region3
    $region8: #{tpu_custom_call.1} parent=1 // loop_exit
      _
    %5796 = vsyncpa [#allocation3], 1
    %s5797 = scalar_lea.sflag [#allocation3], 1
    %5798 = vsyncpa %s5797, 1
    %5799 = vsyncpa [#allocation6], 1
    %s5800 = scalar_lea.sflag [#allocation6], 1
    %5801 = vsyncpa %s5800, 1
    %5802 = vsyncpa [#allocation9], 1
    %s5803 = scalar_lea.sflag [#allocation9], 1
    %5804 = vsyncpa %s5803, 1
    %5805 = vsyncpa [#allocation4], 1
    %s5806 = scalar_lea.sflag [#allocation4], 1
    %5807 = vsyncpa %s5806, 1

</llo_original>
